<compile_context>
chip_gen: v5e
topology: v5e:2x2
jax: 0.10.0
libtpu: 0.0.40
codegen_flags: <defaults>
</compile_context>

<pallas_src>
import math
import functools

import jax
import jax.numpy as jnp
from jax import lax
from jax.experimental import pallas as pl
from jax.experimental.pallas import tpu as pltpu


LANE = 128  # TPU lane width; classifier output padded to a multiple of this.


# ----------------------------- shared helpers -----------------------------

def _layer_norm(x, gamma, beta, eps=1e-12):
    # torch.nn.LayerNorm: biased variance over the last axis, eps=1e-12.
    mu = jnp.mean(x, axis=-1, keepdims=True)
    var = jnp.mean(jnp.square(x - mu), axis=-1, keepdims=True)
    return (x - mu) * lax.rsqrt(var + eps) * gamma + beta


def _gelu_exact(x):
    # torch.nn.GELU() default = exact erf formulation (matches the reference).
    # TODO(synk): tanh-approx GELU would move the transcendental onto the EUP
    # slot on v6e/v7x at a small numerics delta vs torch's exact GELU.
    return 0.5 * x * (1.0 + lax.erf(x * (1.0 / math.sqrt(2.0))))


# --------------------- fused encoder + classifier kernel ---------------------

def _encoder_cls_kernel(num_layers, num_heads, head_group, n_ffn_chunks,
                        emb_ref, negmask_ref,
                        wq_ref, bq_ref, wk_ref, bk_ref, wv_ref, bv_ref,
                        wo_ref, bo_ref, ln1g_ref, ln1b_ref,
                        wi_ref, bi_ref, w2_ref, b2_ref, ln2g_ref, ln2b_ref,
                        wc_ref, bc_ref,
                        out_ref,
                        h_scratch, ctx_scratch):
    S, H = h_scratch.shape
    nh, hg = num_heads, head_group
    hd = H // nh
    scale = 1.0 / math.sqrt(hd)

    # Current hidden states for this batch element live in VMEM scratch.
    h_scratch[...] = emb_ref[0]
    # Additive key mask, loaded once; loop-invariant (no per-layer re-broadcast).
    mask_b = negmask_ref[...]                          # (1, 1, S) f32

    # Shared BertLayer applied num_layers times (weights stay VMEM-resident).
    @pl.loop(0, num_layers)
    def _(_l):
        x = h_scratch[...]                             # (S, H) f32
        xb = x.astype(jnp.bfloat16)

        # --- BertSelfAttention: QKV projections, full-width K=H MXU matmuls ---
        q = (jnp.dot(xb, wq_ref[...], preferred_element_type=jnp.float32)
             + bq_ref[...]).astype(jnp.bfloat16)
        k = (jnp.dot(xb, wk_ref[...], preferred_element_type=jnp.float32)
             + bk_ref[...]).astype(jnp.bfloat16)
        v = (jnp.dot(xb, wv_ref[...], preferred_element_type=jnp.float32)
             + bv_ref[...]).astype(jnp.bfloat16)

        # Attention in head groups of `hg` heads: caps the (hg, S, S) f32
        # score/prob temporaries (v7x 64-MiB VMEM) with identical math.
        for g0 in range(0, nh, hg):
            def heads(t, g0=g0):                       # (S,H) -> (hg,S,hd)
                return jnp.stack(
                    [t[:, (g0 + h) * hd:(g0 + h + 1) * hd] for h in range(hg)],
                    axis=0)
            qg, kg, vg = heads(q), heads(k), heads(v)

            s = jnp.einsum('hqd,hkd->hqk', qg, kg,
                           preferred_element_type=jnp.float32) * scale + mask_b
            s = s - jnp.max(s, axis=-1, keepdims=True)
            p = jnp.exp(s)                             # unnormalized probs
            l = jnp.sum(p, axis=-1, keepdims=True)     # (hg, S, 1)
            ctx = jnp.einsum('hqk,hkd->hqd', p.astype(jnp.bfloat16), vg,
                             preferred_element_type=jnp.float32)
            # Deferred softmax normalization on the small (hg,S,hd) context.
            ctx = ctx * pl.reciprocal(l, approx=True)
            # Lane-block reassembly of head outputs into a (S, H) tile.
            for h in range(hg):
                ctx_scratch[:, (g0 + h) * hd:(g0 + h + 1) * hd] = ctx[h]

        # --- BertSelfOutput: ONE full-K (K=H) output projection ---
        ctx_flat = ctx_scratch[...].astype(jnp.bfloat16)
        attn = (jnp.dot(ctx_flat, wo_ref[...], preferred_element_type=jnp.float32)
                + bo_ref[...])
        attn = _layer_norm(attn + x, ln1g_ref[...], ln1b_ref[...])

        # --- BertIntermediate + BertOutput: fori_loop over 4H chunks ---
        attn_b = attn.astype(jnp.bfloat16)

        def ffn_body(c, acc):
            hi = jnp.dot(attn_b, wi_ref[c], preferred_element_type=jnp.float32)
            hi = _gelu_exact(hi + bi_ref[c]).astype(jnp.bfloat16)
            return acc + jnp.dot(hi, w2_ref[c], preferred_element_type=jnp.float32)

        ffn = lax.fori_loop(0, n_ffn_chunks, ffn_body,
                            jnp.zeros((S, H), jnp.float32))
        ffn = ffn + b2_ref[...]
        h_scratch[...] = _layer_norm(ffn + attn, ln2g_ref[...], ln2b_ref[...])

    # --- fused classifier head, lane-dense padded output ---
    seq = h_scratch[...].astype(jnp.bfloat16)
    out_ref[0] = (jnp.dot(seq, wc_ref[...], preferred_element_type=jnp.float32)
                  + bc_ref[...])


# ------------------------------ config helpers ------------------------------

def _vmem_limit_bytes():
    # Per-generation scoped-VMEM limit: ~112 MiB on 128-MiB parts (v5e/v6e),
    # capped at ~56 MiB on v7x (64 MiB physical).  Defaults (16/32 MiB) are too
    # small at BERT-base shapes (resident weights + score temporaries).
    try:
        cap = int(pltpu.get_tpu_info().vmem_capacity_bytes)
        return int(max(32 << 20, min(cap - (8 << 20), 112 << 20)))
    except Exception:
        return 56 << 20   # safe on every generation


def _pick_ffn_chunk(inter_size, vmem_limit):
    if inter_size <= 512:
        return inter_size
    cands = (1024, 512, 256, 128) if vmem_limit >= (96 << 20) else (512, 256, 128)
    for c in cands:
        if inter_size % c == 0:
            return c
    return inter_size


def _pick_head_group(num_heads, seq_len):
    budget = 4 << 20                       # ~4 MiB f32 score tensor per group
    hg = max(1, min(num_heads, budget // (seq_len * seq_len * 4)))
    while num_heads % hg:
        hg -= 1
    return hg


# ------------------------------ kernel wrapper ------------------------------

def bert_encoder_classifier(emb, neg_mask, params, num_layers, num_heads):
    B, S, H = emb.shape
    assert H % num_heads == 0
    I = params['wi'].shape[1]
    LPAD = params['wc'].shape[1]

    vmem_limit = _vmem_limit_bytes()
    ffn_chunk = _pick_ffn_chunk(I, vmem_limit)
    n_chunks = I // ffn_chunk
    head_group = _pick_head_group(num_heads, S)

    # FFN weights pre-split into leading-axis chunks so the in-kernel
    # fori_loop indexes them with a dynamic leading index (no lane slicing).
    wi_c = params['wi'].reshape(H, n_chunks, ffn_chunk).transpose(1, 0, 2)
    bi_c = params['bi'].reshape(n_chunks, 1, ffn_chunk)
    w2_c = params['w2'].reshape(n_chunks, ffn_chunk, H)

    weights = (params['wq'], params['bq'], params['wk'], params['bk'],
               params['wv'], params['bv'], params['wo'], params['bo'],
               params['ln1_g'], params['ln1_b'],
               wi_c, bi_c, w2_c, params['b2'],
               params['ln2_g'], params['ln2_b'],
               params['wc'], params['bc'])

    kernel = functools.partial(_encoder_cls_kernel, num_layers, num_heads,
                               head_group, n_chunks)

    def build_and_run(single_buffer_weights):
        def const_spec(a):
            zeros = (0,) * a.ndim
            if single_buffer_weights:
                # Constant index_map -> fetched once; single-buffer to avoid
                # the default 2x VMEM for the resident weight set.
                return pl.BlockSpec(a.shape, lambda b, z=zeros: z,
                                    pipeline_mode=pl.Buffered(1))
            return pl.BlockSpec(a.shape, lambda b, z=zeros: z)

        in_specs = ([pl.BlockSpec((1, S, H), lambda b: (b, 0, 0)),     # embeddings
                     pl.BlockSpec((1, 1, S), lambda b: (b, 0, 0))]     # additive mask
                    + [const_spec(w) for w in weights])

        return pl.pallas_call(
            kernel,
            grid=(B,),
            in_specs=in_specs,
            out_specs=pl.BlockSpec((1, S, LPAD), lambda b: (b, 0, 0)),
            out_shape=jax.ShapeDtypeStruct((B, S, LPAD), jnp.float32),
            scratch_shapes=[pltpu.VMEM((S, H), jnp.float32),   # hidden states
                            pltpu.VMEM((S, H), jnp.float32)],  # ctx reassembly
            compiler_params=pltpu.CompilerParams(
                # Batch axis is "parallel" so v7x shards it across its two
                # TensorCores (B >= 2 needed to feed both; v5e/v6e: serial loop).
                dimension_semantics=("parallel",),
                vmem_limit_bytes=vmem_limit),
        )(emb, neg_mask, *weights)

    try:
        return build_and_run(True)
    except Exception:
        # Fallback for environments without single-buffer pipeline_mode support.
        return build_and_run(False)


# --------------------------------- full model ---------------------------------

def init_params(key, vocab_size, max_pos, hidden, num_labels):
    ks = jax.random.split(key, 12)
    std = 0.02
    H, I = hidden, hidden * 4
    lpad = ((num_labels + LANE - 1) // LANE) * LANE

    def w(k, shape):   # matmul weights stored bf16 (MXU inputs, half HBM/VMEM)
        return (jax.random.normal(k, shape, jnp.float32) * std).astype(jnp.bfloat16)

    wc = jnp.zeros((H, lpad), jnp.float32)
    wc = wc.at[:, :num_labels].set(
        jax.random.normal(ks[9], (H, num_labels), jnp.float32) * std)

    # TODO(synk): reference loads frozen pretrained BertEmbeddings from
    # './bert_model'; replaced with deterministic synthetic embeddings.
    p = {
        'word_emb': jax.random.normal(ks[0], (vocab_size, H), jnp.float32) * std,
        'pos_emb':  jax.random.normal(ks[1], (max_pos, H), jnp.float32) * std,
        'type_emb': jax.random.normal(ks[2], (2, H), jnp.float32) * std,
        'emb_ln_g': jnp.ones((H,), jnp.float32),
        'emb_ln_b': jnp.zeros((H,), jnp.float32),
        # shared encoder layer (same instance reused across layers in reference)
        'wq': w(ks[3], (H, H)), 'bq': jnp.zeros((1, H), jnp.float32),
        'wk': w(ks[4], (H, H)), 'bk': jnp.zeros((1, H), jnp.float32),
        'wv': w(ks[5], (H, H)), 'bv': jnp.zeros((1, H), jnp.float32),
        'wo': w(ks[6], (H, H)), 'bo': jnp.zeros((1, H), jnp.float32),
        'ln1_g': jnp.ones((1, H), jnp.float32),
        'ln1_b': jnp.zeros((1, H), jnp.float32),
        'wi': w(ks[7], (H, I)), 'bi': jnp.zeros((1, I), jnp.float32),
        'w2': w(ks[8], (I, H)), 'b2': jnp.zeros((1, H), jnp.float32),
        'ln2_g': jnp.ones((1, H), jnp.float32),
        'ln2_b': jnp.zeros((1, H), jnp.float32),
        # classifier, padded to a lane-dense width
        'wc': wc.astype(jnp.bfloat16),
        'bc': jnp.zeros((1, lpad), jnp.float32),
    }
    return p


def bert_for_classification(params, input_ids, attention_mask,
                            num_hidden_layers, num_heads, num_labels):
    B, S = input_ids.shape
    # --- embeddings (gathers + LayerNorm are glue; plain JAX) ---
    word = params['word_emb'][input_ids]                    # (B, S, H)
    pos = params['pos_emb'][jnp.arange(S)][None, :, :]      # (1, S, H)
    typ = params['type_emb'][0][None, None, :]              # token_type_ids = 0
    emb = _layer_norm(word + pos + typ, params['emb_ln_g'], params['emb_ln_b'])
    # dropout -> identity (eval)

    # Additive key mask computed ONCE for all layers: (B, 1, S).
    neg_mask = ((1.0 - attention_mask.astype(jnp.float32)) * (-10000.0))[:, None, :]

    logits_padded = bert_encoder_classifier(emb, neg_mask, params,
                                            num_hidden_layers, num_heads)
    # TODO(synk): training-time cross-entropy loss branch (labels != None) not
    # implemented; forward with labels=None returns logits only, as here.
    return logits_padded[:, :, :num_labels]


# ------------------------------------ main ------------------------------------

if __name__ == "__main__":
    VOCAB = 64
    MAX_POS = 16
    NUM_LAYERS = 2
    HIDDEN = 32
    NUM_HEADS = 4
    NUM_LABELS = 5
    B, S = 2, 8

    key = jax.random.PRNGKey(0)
    k_par, k_ids = jax.random.split(key)
    params = init_params(k_par, VOCAB, MAX_POS, HIDDEN, NUM_LABELS)

    input_ids = jax.random.randint(k_ids, (B, S), 0, VOCAB, dtype=jnp.int32)
    attention_mask = jnp.ones((B, S), jnp.float32).at[1, 6:].set(0.0)

    logits = bert_for_classification(params, input_ids, attention_mask,
                                     NUM_LAYERS, NUM_HEADS, NUM_LABELS)
    logits = jax.block_until_ready(logits)
    assert logits.shape == (B, S, NUM_LABELS)
    assert bool(jnp.all(jnp.isfinite(logits)))
    print("KERNEL_OK")
</pallas_src>

<mosaic_0001>
module attributes {stable_mosaic.version = 11 : i64} {
  func.func @_encoder_cls_kernel(%arg0: i32, %arg1: memref<1x8x32xf32, #tpu.memory_space<vmem>>, %arg2: memref<1x1x8xf32, #tpu.memory_space<vmem>>, %arg3: memref<32x32xbf16, #tpu.memory_space<vmem>>, %arg4: memref<1x32xf32, #tpu.memory_space<vmem>>, %arg5: memref<32x32xbf16, #tpu.memory_space<vmem>>, %arg6: memref<1x32xf32, #tpu.memory_space<vmem>>, %arg7: memref<32x32xbf16, #tpu.memory_space<vmem>>, %arg8: memref<1x32xf32, #tpu.memory_space<vmem>>, %arg9: memref<32x32xbf16, #tpu.memory_space<vmem>>, %arg10: memref<1x32xf32, #tpu.memory_space<vmem>>, %arg11: memref<1x32xf32, #tpu.memory_space<vmem>>, %arg12: memref<1x32xf32, #tpu.memory_space<vmem>>, %arg13: memref<1x32x128xbf16, #tpu.memory_space<vmem>>, %arg14: memref<1x1x128xf32, #tpu.memory_space<vmem>>, %arg15: memref<1x128x32xbf16, #tpu.memory_space<vmem>>, %arg16: memref<1x32xf32, #tpu.memory_space<vmem>>, %arg17: memref<1x32xf32, #tpu.memory_space<vmem>>, %arg18: memref<1x32xf32, #tpu.memory_space<vmem>>, %arg19: memref<32x128xbf16, #tpu.memory_space<vmem>>, %arg20: memref<1x128xf32, #tpu.memory_space<vmem>>, %arg21: memref<1x8x128xf32, #tpu.memory_space<vmem>>, %arg22: memref<8x32xf32, #tpu.memory_space<vmem>>, %arg23: memref<8x32xf32, #tpu.memory_space<vmem>>) attributes {dimension_semantics = [#tpu.dimension_semantics<parallel>], iteration_bounds = array<i64: 2>, scalar_prefetch = 0 : i64, scratch_operands = 2 : i64, tpu.core_type = #tpu.core_type<tc>, window_params = [{transform_indices = @transform_0, window_bounds = array<i64: 1, 8, 32>}, {transform_indices = @transform_1, window_bounds = array<i64: 1, 1, 8>}, {pipeline_mode = #tpu.pipeline_mode<synchronous>, transform_indices = @transform_2, window_bounds = array<i64: 32, 32>}, {pipeline_mode = #tpu.pipeline_mode<synchronous>, transform_indices = @transform_3, window_bounds = array<i64: 1, 32>}, {pipeline_mode = #tpu.pipeline_mode<synchronous>, transform_indices = @transform_4, window_bounds = array<i64: 32, 32>}, {pipeline_mode = #tpu.pipeline_mode<synchronous>, transform_indices = @transform_5, window_bounds = array<i64: 1, 32>}, {pipeline_mode = #tpu.pipeline_mode<synchronous>, transform_indices = @transform_6, window_bounds = array<i64: 32, 32>}, {pipeline_mode = #tpu.pipeline_mode<synchronous>, transform_indices = @transform_7, window_bounds = array<i64: 1, 32>}, {pipeline_mode = #tpu.pipeline_mode<synchronous>, transform_indices = @transform_8, window_bounds = array<i64: 32, 32>}, {pipeline_mode = #tpu.pipeline_mode<synchronous>, transform_indices = @transform_9, window_bounds = array<i64: 1, 32>}, {pipeline_mode = #tpu.pipeline_mode<synchronous>, transform_indices = @transform_10, window_bounds = array<i64: 1, 32>}, {pipeline_mode = #tpu.pipeline_mode<synchronous>, transform_indices = @transform_11, window_bounds = array<i64: 1, 32>}, {pipeline_mode = #tpu.pipeline_mode<synchronous>, transform_indices = @transform_12, window_bounds = array<i64: 1, 32, 128>}, {pipeline_mode = #tpu.pipeline_mode<synchronous>, transform_indices = @transform_13, window_bounds = array<i64: 1, 1, 128>}, {pipeline_mode = #tpu.pipeline_mode<synchronous>, transform_indices = @transform_14, window_bounds = array<i64: 1, 128, 32>}, {pipeline_mode = #tpu.pipeline_mode<synchronous>, transform_indices = @transform_15, window_bounds = array<i64: 1, 32>}, {pipeline_mode = #tpu.pipeline_mode<synchronous>, transform_indices = @transform_16, window_bounds = array<i64: 1, 32>}, {pipeline_mode = #tpu.pipeline_mode<synchronous>, transform_indices = @transform_17, window_bounds = array<i64: 1, 32>}, {pipeline_mode = #tpu.pipeline_mode<synchronous>, transform_indices = @transform_18, window_bounds = array<i64: 32, 128>}, {pipeline_mode = #tpu.pipeline_mode<synchronous>, transform_indices = @transform_19, window_bounds = array<i64: 1, 128>}, {transform_indices = @transform_20, window_bounds = array<i64: 1, 8, 128>}]} {
    %c0 = arith.constant 0 : index
    %c0_0 = arith.constant 0 : index
    %c0_1 = arith.constant 0 : index
    %0 = vector.load %arg1[%c0, %c0_0, %c0_1] : memref<1x8x32xf32, #tpu.memory_space<vmem>>, vector<1x8x32xf32>
    %1 = vector.shape_cast %0 : vector<1x8x32xf32> to vector<8x32xf32>
    %c0_2 = arith.constant 0 : index
    %c0_3 = arith.constant 0 : index
    %2 = vector.load %arg22[%c0_2, %c0_3] : memref<8x32xf32, #tpu.memory_space<vmem>>, vector<8x32xf32>
    tpu.vector_store %arg22[%c0_2, %c0_3], %1 {strides = array<i32>} : memref<8x32xf32, #tpu.memory_space<vmem>>, vector<8x32xf32>,
    %c0_4 = arith.constant 0 : index
    %c0_5 = arith.constant 0 : index
    %c0_6 = arith.constant 0 : index
    %3 = vector.load %arg2[%c0_4, %c0_5, %c0_6] : memref<1x1x8xf32, #tpu.memory_space<vmem>>, vector<1x1x8xf32>
    %c0_i32 = arith.constant 0 : i32
    %c2_i32 = arith.constant 2 : i32
    %4 = arith.addi %c0_i32, %c2_i32 : i32
    %c1_i32 = arith.constant 1 : i32
    scf.for %arg24 = %c0_i32 to %4 step %c1_i32  : i32 {
      %c0_16 = arith.constant 0 : index
      %c0_17 = arith.constant 0 : index
      %15 = vector.load %arg22[%c0_16, %c0_17] : memref<8x32xf32, #tpu.memory_space<vmem>>, vector<8x32xf32>
      %16 = arith.truncf %15 : vector<8x32xf32> to vector<8x32xbf16>
      %c0_18 = arith.constant 0 : index
      %c0_19 = arith.constant 0 : index
      %17 = vector.load %arg3[%c0_18, %c0_19] : memref<32x32xbf16, #tpu.memory_space<vmem>>, vector<32x32xbf16>
      %cst_20 = arith.constant dense<0.000000e+00> : vector<8x32xf32>
      %18 = tpu.matmul %16, %17, %cst_20 {dimension_numbers = #tpu.dot_dimension_numbers<[1], [0], [0], [1], [0, 0, 1, 1], [], []>} : vector<8x32xbf16>, vector<32x32xbf16>, vector<8x32xf32> -> vector<8x32xf32>
      %c0_21 = arith.constant 0 : index
      %c0_22 = arith.constant 0 : index
      %19 = vector.load %arg4[%c0_21, %c0_22] : memref<1x32xf32, #tpu.memory_space<vmem>>, vector<1x32xf32>
      %20 = vector.broadcast %19 : vector<1x32xf32> to vector<8x32xf32>
      %21 = arith.addf %18, %20 : vector<8x32xf32>
      %22 = arith.truncf %21 : vector<8x32xf32> to vector<8x32xbf16>
      %c0_23 = arith.constant 0 : index
      %c0_24 = arith.constant 0 : index
      %23 = vector.load %arg5[%c0_23, %c0_24] : memref<32x32xbf16, #tpu.memory_space<vmem>>, vector<32x32xbf16>
      %cst_25 = arith.constant dense<0.000000e+00> : vector<8x32xf32>
      %24 = tpu.matmul %16, %23, %cst_25 {dimension_numbers = #tpu.dot_dimension_numbers<[1], [0], [0], [1], [0, 0, 1, 1], [], []>} : vector<8x32xbf16>, vector<32x32xbf16>, vector<8x32xf32> -> vector<8x32xf32>
      %c0_26 = arith.constant 0 : index
      %c0_27 = arith.constant 0 : index
      %25 = vector.load %arg6[%c0_26, %c0_27] : memref<1x32xf32, #tpu.memory_space<vmem>>, vector<1x32xf32>
      %26 = vector.broadcast %25 : vector<1x32xf32> to vector<8x32xf32>
      %27 = arith.addf %24, %26 : vector<8x32xf32>
      %28 = arith.truncf %27 : vector<8x32xf32> to vector<8x32xbf16>
      %c0_28 = arith.constant 0 : index
      %c0_29 = arith.constant 0 : index
      %29 = vector.load %arg7[%c0_28, %c0_29] : memref<32x32xbf16, #tpu.memory_space<vmem>>, vector<32x32xbf16>
      %cst_30 = arith.constant dense<0.000000e+00> : vector<8x32xf32>
      %30 = tpu.matmul %16, %29, %cst_30 {dimension_numbers = #tpu.dot_dimension_numbers<[1], [0], [0], [1], [0, 0, 1, 1], [], []>} : vector<8x32xbf16>, vector<32x32xbf16>, vector<8x32xf32> -> vector<8x32xf32>
      %c0_31 = arith.constant 0 : index
      %c0_32 = arith.constant 0 : index
      %31 = vector.load %arg8[%c0_31, %c0_32] : memref<1x32xf32, #tpu.memory_space<vmem>>, vector<1x32xf32>
      %32 = vector.broadcast %31 : vector<1x32xf32> to vector<8x32xf32>
      %33 = arith.addf %30, %32 : vector<8x32xf32>
      %34 = arith.truncf %33 : vector<8x32xf32> to vector<8x32xbf16>
      %35 = vector.extract_strided_slice %22 {offsets = [0, 0], sizes = [8, 8], strides = [1, 1]} : vector<8x32xbf16> to vector<8x8xbf16>
      %36 = vector.extract_strided_slice %22 {offsets = [0, 8], sizes = [8, 8], strides = [1, 1]} : vector<8x32xbf16> to vector<8x8xbf16>
      %37 = vector.extract_strided_slice %22 {offsets = [0, 16], sizes = [8, 8], strides = [1, 1]} : vector<8x32xbf16> to vector<8x8xbf16>
      %38 = vector.extract_strided_slice %22 {offsets = [0, 24], sizes = [8, 8], strides = [1, 1]} : vector<8x32xbf16> to vector<8x8xbf16>
      %39 = vector.shape_cast %35 : vector<8x8xbf16> to vector<1x8x8xbf16>
      %40 = vector.shape_cast %36 : vector<8x8xbf16> to vector<1x8x8xbf16>
      %41 = vector.shape_cast %37 : vector<8x8xbf16> to vector<1x8x8xbf16>
      %42 = vector.shape_cast %38 : vector<8x8xbf16> to vector<1x8x8xbf16>
      %43 = tpu.concatenate %39, %40, %41, %42 in 0 : vector<1x8x8xbf16>, vector<1x8x8xbf16>, vector<1x8x8xbf16>, vector<1x8x8xbf16> -> vector<4x8x8xbf16>
      %44 = vector.extract_strided_slice %28 {offsets = [0, 0], sizes = [8, 8], strides = [1, 1]} : vector<8x32xbf16> to vector<8x8xbf16>
      %45 = vector.extract_strided_slice %28 {offsets = [0, 8], sizes = [8, 8], strides = [1, 1]} : vector<8x32xbf16> to vector<8x8xbf16>
      %46 = vector.extract_strided_slice %28 {offsets = [0, 16], sizes = [8, 8], strides = [1, 1]} : vector<8x32xbf16> to vector<8x8xbf16>
      %47 = vector.extract_strided_slice %28 {offsets = [0, 24], sizes = [8, 8], strides = [1, 1]} : vector<8x32xbf16> to vector<8x8xbf16>
      %48 = vector.shape_cast %44 : vector<8x8xbf16> to vector<1x8x8xbf16>
      %49 = vector.shape_cast %45 : vector<8x8xbf16> to vector<1x8x8xbf16>
      %50 = vector.shape_cast %46 : vector<8x8xbf16> to vector<1x8x8xbf16>
      %51 = vector.shape_cast %47 : vector<8x8xbf16> to vector<1x8x8xbf16>
      %52 = tpu.concatenate %48, %49, %50, %51 in 0 : vector<1x8x8xbf16>, vector<1x8x8xbf16>, vector<1x8x8xbf16>, vector<1x8x8xbf16> -> vector<4x8x8xbf16>
      %53 = vector.extract_strided_slice %34 {offsets = [0, 0], sizes = [8, 8], strides = [1, 1]} : vector<8x32xbf16> to vector<8x8xbf16>
      %54 = vector.extract_strided_slice %34 {offsets = [0, 8], sizes = [8, 8], strides = [1, 1]} : vector<8x32xbf16> to vector<8x8xbf16>
      %55 = vector.extract_strided_slice %34 {offsets = [0, 16], sizes = [8, 8], strides = [1, 1]} : vector<8x32xbf16> to vector<8x8xbf16>
      %56 = vector.extract_strided_slice %34 {offsets = [0, 24], sizes = [8, 8], strides = [1, 1]} : vector<8x32xbf16> to vector<8x8xbf16>
      %57 = vector.shape_cast %53 : vector<8x8xbf16> to vector<1x8x8xbf16>
      %58 = vector.shape_cast %54 : vector<8x8xbf16> to vector<1x8x8xbf16>
      %59 = vector.shape_cast %55 : vector<8x8xbf16> to vector<1x8x8xbf16>
      %60 = vector.shape_cast %56 : vector<8x8xbf16> to vector<1x8x8xbf16>
      %61 = tpu.concatenate %57, %58, %59, %60 in 0 : vector<1x8x8xbf16>, vector<1x8x8xbf16>, vector<1x8x8xbf16>, vector<1x8x8xbf16> -> vector<4x8x8xbf16>
      "tpu.trace_start"() <{level = 10 : i32, message = "hqd,hkd->hqk"}> : () -> ()
      %cst_33 = arith.constant dense<0.000000e+00> : vector<4x8x8xf32>
      %62 = tpu.matmul %43, %52, %cst_33 {dimension_numbers = #tpu.dot_dimension_numbers<[2], [2], [1], [1], [0, 0, 0, 1, 1, 1], [0], [0]>} : vector<4x8x8xbf16>, vector<4x8x8xbf16>, vector<4x8x8xf32> -> vector<4x8x8xf32>
      "tpu.trace_stop"() : () -> ()
      %cst_34 = arith.constant 0.353553385 : f32
      %63 = vector.broadcast %cst_34 : f32 to vector<4x8x8xf32>
      %64 = arith.mulf %62, %63 : vector<4x8x8xf32>
      %65 = vector.broadcast %3 : vector<1x1x8xf32> to vector<4x8x8xf32>
      %66 = arith.addf %64, %65 : vector<4x8x8xf32>
      %cst_35 = arith.constant dense<0xFF800000> : vector<4x8xf32>
      %67 = vector.multi_reduction <maximumf>, %66, %cst_35 [2] : vector<4x8x8xf32> to vector<4x8xf32>
      %68 = vector.shape_cast %67 : vector<4x8xf32> to vector<4x8x1xf32>
      %69 = vector.broadcast %68 : vector<4x8x1xf32> to vector<4x8x8xf32>
      %70 = arith.subf %66, %69 : vector<4x8x8xf32>
      %71 = math.exp %70 : vector<4x8x8xf32>
      %cst_36 = arith.constant dense<0.000000e+00> : vector<4x8xf32>
      %72 = vector.multi_reduction <add>, %71, %cst_36 [2] : vector<4x8x8xf32> to vector<4x8xf32>
      %73 = vector.shape_cast %72 : vector<4x8xf32> to vector<4x8x1xf32>
      %74 = arith.truncf %71 : vector<4x8x8xf32> to vector<4x8x8xbf16>
      "tpu.trace_start"() <{level = 10 : i32, message = "hqk,hkd->hqd"}> : () -> ()
      %cst_37 = arith.constant dense<0.000000e+00> : vector<4x8x8xf32>
      %75 = tpu.matmul %74, %61, %cst_37 {dimension_numbers = #tpu.dot_dimension_numbers<[2], [1], [1], [2], [0, 0, 0, 1, 1, 2], [0], [0]>} : vector<4x8x8xbf16>, vector<4x8x8xbf16>, vector<4x8x8xf32> -> vector<4x8x8xf32>
      "tpu.trace_stop"() : () -> ()
      %76 = tpu.reciprocal %73 {approx = true} : vector<4x8x1xf32> -> vector<4x8x1xf32>
      %77 = vector.broadcast %76 : vector<4x8x1xf32> to vector<4x8x8xf32>
      %78 = arith.mulf %75, %77 : vector<4x8x8xf32>
      %79 = vector.extract_strided_slice %78 {offsets = [0, 0, 0], sizes = [1, 8, 8], strides = [1, 1, 1]} : vector<4x8x8xf32> to vector<1x8x8xf32>
      %80 = vector.shape_cast %79 : vector<1x8x8xf32> to vector<8x8xf32>
      %c0_38 = arith.constant 0 : index
      %c0_39 = arith.constant 0 : index
      %81 = vector.load %arg23[%c0_38, %c0_39] : memref<8x32xf32, #tpu.memory_space<vmem>>, vector<8x8xf32>
      tpu.vector_store %arg23[%c0_38, %c0_39], %80 {strides = array<i32>} : memref<8x32xf32, #tpu.memory_space<vmem>>, vector<8x8xf32>,
      %82 = vector.extract_strided_slice %78 {offsets = [1, 0, 0], sizes = [1, 8, 8], strides = [1, 1, 1]} : vector<4x8x8xf32> to vector<1x8x8xf32>
      %83 = vector.shape_cast %82 : vector<1x8x8xf32> to vector<8x8xf32>
      %c0_40 = arith.constant 0 : index
      %c8 = arith.constant 8 : index
      %84 = vector.load %arg23[%c0_40, %c8] : memref<8x32xf32, #tpu.memory_space<vmem>>, vector<8x8xf32>
      tpu.vector_store %arg23[%c0_40, %c8], %83 {strides = array<i32>} : memref<8x32xf32, #tpu.memory_space<vmem>>, vector<8x8xf32>,
      %85 = vector.extract_strided_slice %78 {offsets = [2, 0, 0], sizes = [1, 8, 8], strides = [1, 1, 1]} : vector<4x8x8xf32> to vector<1x8x8xf32>
      %86 = vector.shape_cast %85 : vector<1x8x8xf32> to vector<8x8xf32>
      %c0_41 = arith.constant 0 : index
      %c16 = arith.constant 16 : index
      %87 = vector.load %arg23[%c0_41, %c16] : memref<8x32xf32, #tpu.memory_space<vmem>>, vector<8x8xf32>
      tpu.vector_store %arg23[%c0_41, %c16], %86 {strides = array<i32>} : memref<8x32xf32, #tpu.memory_space<vmem>>, vector<8x8xf32>,
      %88 = vector.extract_strided_slice %78 {offsets = [3, 0, 0], sizes = [1, 8, 8], strides = [1, 1, 1]} : vector<4x8x8xf32> to vector<1x8x8xf32>
      %89 = vector.shape_cast %88 : vector<1x8x8xf32> to vector<8x8xf32>
      %c0_42 = arith.constant 0 : index
      %c24 = arith.constant 24 : index
      %90 = vector.load %arg23[%c0_42, %c24] : memref<8x32xf32, #tpu.memory_space<vmem>>, vector<8x8xf32>
      tpu.vector_store %arg23[%c0_42, %c24], %89 {strides = array<i32>} : memref<8x32xf32, #tpu.memory_space<vmem>>, vector<8x8xf32>,
      %c0_43 = arith.constant 0 : index
      %c0_44 = arith.constant 0 : index
      %91 = vector.load %arg23[%c0_43, %c0_44] : memref<8x32xf32, #tpu.memory_space<vmem>>, vector<8x32xf32>
      %92 = arith.truncf %91 : vector<8x32xf32> to vector<8x32xbf16>
      %c0_45 = arith.constant 0 : index
      %c0_46 = arith.constant 0 : index
      %93 = vector.load %arg9[%c0_45, %c0_46] : memref<32x32xbf16, #tpu.memory_space<vmem>>, vector<32x32xbf16>
      %cst_47 = arith.constant dense<0.000000e+00> : vector<8x32xf32>
      %94 = tpu.matmul %92, %93, %cst_47 {dimension_numbers = #tpu.dot_dimension_numbers<[1], [0], [0], [1], [0, 0, 1, 1], [], []>} : vector<8x32xbf16>, vector<32x32xbf16>, vector<8x32xf32> -> vector<8x32xf32>
      %c0_48 = arith.constant 0 : index
      %c0_49 = arith.constant 0 : index
      %95 = vector.load %arg10[%c0_48, %c0_49] : memref<1x32xf32, #tpu.memory_space<vmem>>, vector<1x32xf32>
      %96 = vector.broadcast %95 : vector<1x32xf32> to vector<8x32xf32>
      %97 = arith.addf %94, %96 : vector<8x32xf32>
      %98 = arith.addf %97, %15 : vector<8x32xf32>
      %c0_50 = arith.constant 0 : index
      %c0_51 = arith.constant 0 : index
      %99 = vector.load %arg11[%c0_50, %c0_51] : memref<1x32xf32, #tpu.memory_space<vmem>>, vector<1x32xf32>
      %c0_52 = arith.constant 0 : index
      %c0_53 = arith.constant 0 : index
      %100 = vector.load %arg12[%c0_52, %c0_53] : memref<1x32xf32, #tpu.memory_space<vmem>>, vector<1x32xf32>
      %cst_54 = arith.constant dense<0.000000e+00> : vector<8xf32>
      %101 = vector.multi_reduction <add>, %98, %cst_54 [1] : vector<8x32xf32> to vector<8xf32>
      %102 = vector.shape_cast %101 : vector<8xf32> to vector<8x1xf32>
      %cst_55 = arith.constant 3.200000e+01 : f32
      %103 = vector.broadcast %cst_55 : f32 to vector<8x1xf32>
      %104 = arith.divf %102, %103 : vector<8x1xf32>
      %105 = vector.broadcast %104 : vector<8x1xf32> to vector<8x32xf32>
      %106 = arith.subf %98, %105 : vector<8x32xf32>
      %107 = arith.mulf %106, %106 : vector<8x32xf32>
      %cst_56 = arith.constant dense<0.000000e+00> : vector<8xf32>
      %108 = vector.multi_reduction <add>, %107, %cst_56 [1] : vector<8x32xf32> to vector<8xf32>
      %109 = vector.shape_cast %108 : vector<8xf32> to vector<8x1xf32>
      %cst_57 = arith.constant 3.200000e+01 : f32
      %110 = vector.broadcast %cst_57 : f32 to vector<8x1xf32>
      %111 = arith.divf %109, %110 : vector<8x1xf32>
      %112 = vector.broadcast %104 : vector<8x1xf32> to vector<8x32xf32>
      %113 = arith.subf %98, %112 : vector<8x32xf32>
      %cst_58 = arith.constant 9.99999996E-13 : f32
      %114 = vector.broadcast %cst_58 : f32 to vector<8x1xf32>
      %115 = arith.addf %111, %114 : vector<8x1xf32>
      %116 = math.rsqrt %115 : vector<8x1xf32>
      %117 = vector.broadcast %116 : vector<8x1xf32> to vector<8x32xf32>
      %118 = arith.mulf %113, %117 : vector<8x32xf32>
      %119 = vector.broadcast %99 : vector<1x32xf32> to vector<8x32xf32>
      %120 = arith.mulf %118, %119 : vector<8x32xf32>
      %121 = vector.broadcast %100 : vector<1x32xf32> to vector<8x32xf32>
      %122 = arith.addf %120, %121 : vector<8x32xf32>
      %123 = arith.truncf %122 : vector<8x32xf32> to vector<8x32xbf16>
      %cst_59 = arith.constant 0.000000e+00 : f32
      %124 = vector.broadcast %cst_59 : f32 to vector<8x32xf32>
      %c0_i32_60 = arith.constant 0 : i32
      %125 = arith.index_cast %c0_i32_60 : i32 to index
      %c0_61 = arith.constant 0 : index
      %c0_62 = arith.constant 0 : index
      %126 = vector.load %arg13[%125, %c0_61, %c0_62] : memref<1x32x128xbf16, #tpu.memory_space<vmem>>, vector<1x32x128xbf16>
      %127 = vector.shape_cast %126 : vector<1x32x128xbf16> to vector<32x128xbf16>
      %cst_63 = arith.constant dense<0.000000e+00> : vector<8x128xf32>
      %128 = tpu.matmul %123, %127, %cst_63 {dimension_numbers = #tpu.dot_dimension_numbers<[1], [0], [0], [1], [0, 0, 1, 1], [], []>} : vector<8x32xbf16>, vector<32x128xbf16>, vector<8x128xf32> -> vector<8x128xf32>
      %129 = arith.index_cast %c0_i32_60 : i32 to index
      %c0_64 = arith.constant 0 : index
      %c0_65 = arith.constant 0 : index
      %130 = vector.load %arg14[%129, %c0_64, %c0_65] : memref<1x1x128xf32, #tpu.memory_space<vmem>>, vector<1x1x128xf32>
      %131 = vector.shape_cast %130 : vector<1x1x128xf32> to vector<1x128xf32>
      %132 = vector.broadcast %131 : vector<1x128xf32> to vector<8x128xf32>
      %133 = arith.addf %128, %132 : vector<8x128xf32>
      %cst_66 = arith.constant 5.000000e-01 : f32
      %134 = vector.broadcast %cst_66 : f32 to vector<8x128xf32>
      %135 = arith.mulf %134, %133 : vector<8x128xf32>
      %cst_67 = arith.constant 0.707106769 : f32
      %136 = vector.broadcast %cst_67 : f32 to vector<8x128xf32>
      %137 = arith.mulf %133, %136 : vector<8x128xf32>
      %138 = math.erf %137 : vector<8x128xf32>
      %cst_68 = arith.constant 1.000000e+00 : f32
      %139 = vector.broadcast %cst_68 : f32 to vector<8x128xf32>
      %140 = arith.addf %139, %138 : vector<8x128xf32>
      %141 = arith.mulf %135, %140 : vector<8x128xf32>
      %142 = arith.truncf %141 : vector<8x128xf32> to vector<8x128xbf16>
      %143 = arith.index_cast %c0_i32_60 : i32 to index
      %c0_69 = arith.constant 0 : index
      %c0_70 = arith.constant 0 : index
      %144 = vector.load %arg15[%143, %c0_69, %c0_70] : memref<1x128x32xbf16, #tpu.memory_space<vmem>>, vector<1x128x32xbf16>
      %145 = vector.shape_cast %144 : vector<1x128x32xbf16> to vector<128x32xbf16>
      %cst_71 = arith.constant dense<0.000000e+00> : vector<8x32xf32>
      %146 = tpu.matmul %142, %145, %cst_71 {dimension_numbers = #tpu.dot_dimension_numbers<[1], [0], [0], [1], [0, 0, 1, 1], [], []>} : vector<8x128xbf16>, vector<128x32xbf16>, vector<8x32xf32> -> vector<8x32xf32>
      %147 = arith.addf %124, %146 : vector<8x32xf32>
      %c1_i32_72 = arith.constant 1 : i32
      %c0_73 = arith.constant 0 : index
      %c0_74 = arith.constant 0 : index
      %148 = vector.load %arg16[%c0_73, %c0_74] : memref<1x32xf32, #tpu.memory_space<vmem>>, vector<1x32xf32>
      %149 = vector.broadcast %148 : vector<1x32xf32> to vector<8x32xf32>
      %150 = arith.addf %147, %149 : vector<8x32xf32>
      %151 = arith.addf %150, %122 : vector<8x32xf32>
      %c0_75 = arith.constant 0 : index
      %c0_76 = arith.constant 0 : index
      %152 = vector.load %arg17[%c0_75, %c0_76] : memref<1x32xf32, #tpu.memory_space<vmem>>, vector<1x32xf32>
      %c0_77 = arith.constant 0 : index
      %c0_78 = arith.constant 0 : index
      %153 = vector.load %arg18[%c0_77, %c0_78] : memref<1x32xf32, #tpu.memory_space<vmem>>, vector<1x32xf32>
      %cst_79 = arith.constant dense<0.000000e+00> : vector<8xf32>
      %154 = vector.multi_reduction <add>, %151, %cst_79 [1] : vector<8x32xf32> to vector<8xf32>
      %155 = vector.shape_cast %154 : vector<8xf32> to vector<8x1xf32>
      %cst_80 = arith.constant 3.200000e+01 : f32
      %156 = vector.broadcast %cst_80 : f32 to vector<8x1xf32>
      %157 = arith.divf %155, %156 : vector<8x1xf32>
      %158 = vector.broadcast %157 : vector<8x1xf32> to vector<8x32xf32>
      %159 = arith.subf %151, %158 : vector<8x32xf32>
      %160 = arith.mulf %159, %159 : vector<8x32xf32>
      %cst_81 = arith.constant dense<0.000000e+00> : vector<8xf32>
      %161 = vector.multi_reduction <add>, %160, %cst_81 [1] : vector<8x32xf32> to vector<8xf32>
      %162 = vector.shape_cast %161 : vector<8xf32> to vector<8x1xf32>
      %cst_82 = arith.constant 3.200000e+01 : f32
      %163 = vector.broadcast %cst_82 : f32 to vector<8x1xf32>
      %164 = arith.divf %162, %163 : vector<8x1xf32>
      %165 = vector.broadcast %157 : vector<8x1xf32> to vector<8x32xf32>
      %166 = arith.subf %151, %165 : vector<8x32xf32>
      %cst_83 = arith.constant 9.99999996E-13 : f32
      %167 = vector.broadcast %cst_83 : f32 to vector<8x1xf32>
      %168 = arith.addf %164, %167 : vector<8x1xf32>
      %169 = math.rsqrt %168 : vector<8x1xf32>
      %170 = vector.broadcast %169 : vector<8x1xf32> to vector<8x32xf32>
      %171 = arith.mulf %166, %170 : vector<8x32xf32>
      %172 = vector.broadcast %152 : vector<1x32xf32> to vector<8x32xf32>
      %173 = arith.mulf %171, %172 : vector<8x32xf32>
      %174 = vector.broadcast %153 : vector<1x32xf32> to vector<8x32xf32>
      %175 = arith.addf %173, %174 : vector<8x32xf32>
      %c0_84 = arith.constant 0 : index
      %c0_85 = arith.constant 0 : index
      %176 = vector.load %arg22[%c0_84, %c0_85] : memref<8x32xf32, #tpu.memory_space<vmem>>, vector<8x32xf32>
      tpu.vector_store %arg22[%c0_84, %c0_85], %175 {strides = array<i32>} : memref<8x32xf32, #tpu.memory_space<vmem>>, vector<8x32xf32>,
    }
    %c0_7 = arith.constant 0 : index
    %c0_8 = arith.constant 0 : index
    %5 = vector.load %arg22[%c0_7, %c0_8] : memref<8x32xf32, #tpu.memory_space<vmem>>, vector<8x32xf32>
    %6 = arith.truncf %5 : vector<8x32xf32> to vector<8x32xbf16>
    %c0_9 = arith.constant 0 : index
    %c0_10 = arith.constant 0 : index
    %7 = vector.load %arg19[%c0_9, %c0_10] : memref<32x128xbf16, #tpu.memory_space<vmem>>, vector<32x128xbf16>
    %cst = arith.constant dense<0.000000e+00> : vector<8x128xf32>
    %8 = tpu.matmul %6, %7, %cst {dimension_numbers = #tpu.dot_dimension_numbers<[1], [0], [0], [1], [0, 0, 1, 1], [], []>} : vector<8x32xbf16>, vector<32x128xbf16>, vector<8x128xf32> -> vector<8x128xf32>
    %c0_11 = arith.constant 0 : index
    %c0_12 = arith.constant 0 : index
    %9 = vector.load %arg20[%c0_11, %c0_12] : memref<1x128xf32, #tpu.memory_space<vmem>>, vector<1x128xf32>
    %10 = vector.broadcast %9 : vector<1x128xf32> to vector<8x128xf32>
    %11 = arith.addf %8, %10 : vector<8x128xf32>
    %c0_13 = arith.constant 0 : index
    %c0_14 = arith.constant 0 : index
    %c0_15 = arith.constant 0 : index
    %12 = vector.load %arg21[%c0_13, %c0_14, %c0_15] : memref<1x8x128xf32, #tpu.memory_space<vmem>>, vector<1x8x128xf32>
    %13 = vector.shape_cast %12 : vector<1x8x128xf32> to vector<8x128xf32>
    %14 = vector.shape_cast %11 : vector<8x128xf32> to vector<1x8x128xf32>
    tpu.vector_store %arg21[%c0_13, %c0_14, %c0_15], %14 {strides = array<i32>} : memref<1x8x128xf32, #tpu.memory_space<vmem>>, vector<1x8x128xf32>,
    return
  }
  func.func @transform_0(%arg0: i32) -> (i32, i32, i32) {
    %c0_i32 = arith.constant 0 : i32
    %c0_i32_0 = arith.constant 0 : i32
    %c0_i32_1 = arith.constant 0 : i32
    return %arg0, %c0_i32, %c0_i32_0 : i32, i32, i32
  }
  func.func @transform_1(%arg0: i32) -> (i32, i32, i32) {
    %c0_i32 = arith.constant 0 : i32
    %c0_i32_0 = arith.constant 0 : i32
    %c0_i32_1 = arith.constant 0 : i32
    return %arg0, %c0_i32, %c0_i32_0 : i32, i32, i32
  }
  func.func @transform_2(%arg0: i32) -> (i32, i32) {
    %c0_i32 = arith.constant 0 : i32
    %c0_i32_0 = arith.constant 0 : i32
    %c0_i32_1 = arith.constant 0 : i32
    return %c0_i32, %c0_i32_0 : i32, i32
  }
  func.func @transform_3(%arg0: i32) -> (i32, i32) {
    %c0_i32 = arith.constant 0 : i32
    %c0_i32_0 = arith.constant 0 : i32
    %c0_i32_1 = arith.constant 0 : i32
    return %c0_i32, %c0_i32_0 : i32, i32
  }
  func.func @transform_4(%arg0: i32) -> (i32, i32) {
    %c0_i32 = arith.constant 0 : i32
    %c0_i32_0 = arith.constant 0 : i32
    %c0_i32_1 = arith.constant 0 : i32
    return %c0_i32, %c0_i32_0 : i32, i32
  }
  func.func @transform_5(%arg0: i32) -> (i32, i32) {
    %c0_i32 = arith.constant 0 : i32
    %c0_i32_0 = arith.constant 0 : i32
    %c0_i32_1 = arith.constant 0 : i32
    return %c0_i32, %c0_i32_0 : i32, i32
  }
  func.func @transform_6(%arg0: i32) -> (i32, i32) {
    %c0_i32 = arith.constant 0 : i32
    %c0_i32_0 = arith.constant 0 : i32
    %c0_i32_1 = arith.constant 0 : i32
    return %c0_i32, %c0_i32_0 : i32, i32
  }
  func.func @transform_7(%arg0: i32) -> (i32, i32) {
    %c0_i32 = arith.constant 0 : i32
    %c0_i32_0 = arith.constant 0 : i32
    %c0_i32_1 = arith.constant 0 : i32
    return %c0_i32, %c0_i32_0 : i32, i32
  }
  func.func @transform_8(%arg0: i32) -> (i32, i32) {
    %c0_i32 = arith.constant 0 : i32
    %c0_i32_0 = arith.constant 0 : i32
    %c0_i32_1 = arith.constant 0 : i32
    return %c0_i32, %c0_i32_0 : i32, i32
  }
  func.func @transform_9(%arg0: i32) -> (i32, i32) {
    %c0_i32 = arith.constant 0 : i32
    %c0_i32_0 = arith.constant 0 : i32
    %c0_i32_1 = arith.constant 0 : i32
    return %c0_i32, %c0_i32_0 : i32, i32
  }
  func.func @transform_10(%arg0: i32) -> (i32, i32) {
    %c0_i32 = arith.constant 0 : i32
    %c0_i32_0 = arith.constant 0 : i32
    %c0_i32_1 = arith.constant 0 : i32
    return %c0_i32, %c0_i32_0 : i32, i32
  }
  func.func @transform_11(%arg0: i32) -> (i32, i32) {
    %c0_i32 = arith.constant 0 : i32
    %c0_i32_0 = arith.constant 0 : i32
    %c0_i32_1 = arith.constant 0 : i32
    return %c0_i32, %c0_i32_0 : i32, i32
  }
  func.func @transform_12(%arg0: i32) -> (i32, i32, i32) {
    %c0_i32 = arith.constant 0 : i32
    %c0_i32_0 = arith.constant 0 : i32
    %c0_i32_1 = arith.constant 0 : i32
    %c0_i32_2 = arith.constant 0 : i32
    return %c0_i32, %c0_i32_0, %c0_i32_1 : i32, i32, i32
  }
  func.func @transform_13(%arg0: i32) -> (i32, i32, i32) {
    %c0_i32 = arith.constant 0 : i32
    %c0_i32_0 = arith.constant 0 : i32
    %c0_i32_1 = arith.constant 0 : i32
    %c0_i32_2 = arith.constant 0 : i32
    return %c0_i32, %c0_i32_0, %c0_i32_1 : i32, i32, i32
  }
  func.func @transform_14(%arg0: i32) -> (i32, i32, i32) {
    %c0_i32 = arith.constant 0 : i32
    %c0_i32_0 = arith.constant 0 : i32
    %c0_i32_1 = arith.constant 0 : i32
    %c0_i32_2 = arith.constant 0 : i32
    return %c0_i32, %c0_i32_0, %c0_i32_1 : i32, i32, i32
  }
  func.func @transform_15(%arg0: i32) -> (i32, i32) {
    %c0_i32 = arith.constant 0 : i32
    %c0_i32_0 = arith.constant 0 : i32
    %c0_i32_1 = arith.constant 0 : i32
    return %c0_i32, %c0_i32_0 : i32, i32
  }
  func.func @transform_16(%arg0: i32) -> (i32, i32) {
    %c0_i32 = arith.constant 0 : i32
    %c0_i32_0 = arith.constant 0 : i32
    %c0_i32_1 = arith.constant 0 : i32
    return %c0_i32, %c0_i32_0 : i32, i32
  }
  func.func @transform_17(%arg0: i32) -> (i32, i32) {
    %c0_i32 = arith.constant 0 : i32
    %c0_i32_0 = arith.constant 0 : i32
    %c0_i32_1 = arith.constant 0 : i32
    return %c0_i32, %c0_i32_0 : i32, i32
  }
  func.func @transform_18(%arg0: i32) -> (i32, i32) {
    %c0_i32 = arith.constant 0 : i32
    %c0_i32_0 = arith.constant 0 : i32
    %c0_i32_1 = arith.constant 0 : i32
    return %c0_i32, %c0_i32_0 : i32, i32
  }
  func.func @transform_19(%arg0: i32) -> (i32, i32) {
    %c0_i32 = arith.constant 0 : i32
    %c0_i32_0 = arith.constant 0 : i32
    %c0_i32_1 = arith.constant 0 : i32
    return %c0_i32, %c0_i32_0 : i32, i32
  }
  func.func @transform_20(%arg0: i32) -> (i32, i32, i32) {
    %c0_i32 = arith.constant 0 : i32
    %c0_i32_0 = arith.constant 0 : i32
    %c0_i32_1 = arith.constant 0 : i32
    return %arg0, %c0_i32, %c0_i32_0 : i32, i32, i32
  }
}

module attributes {stable_mosaic.version = 11 : i64} {
  func.func @_encoder_cls_kernel(%arg0: i32, %arg1: memref<1x8x32xf32, #tpu.memory_space<vmem>>, %arg2: memref<1x1x8xf32, #tpu.memory_space<vmem>>, %arg3: memref<32x32xbf16, #tpu.memory_space<vmem>>, %arg4: memref<1x32xf32, #tpu.memory_space<vmem>>, %arg5: memref<32x32xbf16, #tpu.memory_space<vmem>>, %arg6: memref<1x32xf32, #tpu.memory_space<vmem>>, %arg7: memref<32x32xbf16, #tpu.memory_space<vmem>>, %arg8: memref<1x32xf32, #tpu.memory_space<vmem>>, %arg9: memref<32x32xbf16, #tpu.memory_space<vmem>>, %arg10: memref<1x32xf32, #tpu.memory_space<vmem>>, %arg11: memref<1x32xf32, #tpu.memory_space<vmem>>, %arg12: memref<1x32xf32, #tpu.memory_space<vmem>>, %arg13: memref<1x32x128xbf16, #tpu.memory_space<vmem>>, %arg14: memref<1x1x128xf32, #tpu.memory_space<vmem>>, %arg15: memref<1x128x32xbf16, #tpu.memory_space<vmem>>, %arg16: memref<1x32xf32, #tpu.memory_space<vmem>>, %arg17: memref<1x32xf32, #tpu.memory_space<vmem>>, %arg18: memref<1x32xf32, #tpu.memory_space<vmem>>, %arg19: memref<32x128xbf16, #tpu.memory_space<vmem>>, %arg20: memref<1x128xf32, #tpu.memory_space<vmem>>, %arg21: memref<1x8x128xf32, #tpu.memory_space<vmem>>, %arg22: memref<8x32xf32, #tpu.memory_space<vmem>>, %arg23: memref<8x32xf32, #tpu.memory_space<vmem>>) attributes {dimension_semantics = [#tpu.dimension_semantics<parallel>], iteration_bounds = array<i64: 2>, scalar_prefetch = 0 : i64, scratch_operands = 2 : i64, tpu.core_type = #tpu.core_type<tc>, window_params = [{transform_indices = @transform_0, window_bounds = array<i64: 1, 8, 32>}, {transform_indices = @transform_1, window_bounds = array<i64: 1, 1, 8>}, {pipeline_mode = #tpu.pipeline_mode<synchronous>, transform_indices = @transform_2, window_bounds = array<i64: 32, 32>}, {pipeline_mode = #tpu.pipeline_mode<synchronous>, transform_indices = @transform_3, window_bounds = array<i64: 1, 32>}, {pipeline_mode = #tpu.pipeline_mode<synchronous>, transform_indices = @transform_4, window_bounds = array<i64: 32, 32>}, {pipeline_mode = #tpu.pipeline_mode<synchronous>, transform_indices = @transform_5, window_bounds = array<i64: 1, 32>}, {pipeline_mode = #tpu.pipeline_mode<synchronous>, transform_indices = @transform_6, window_bounds = array<i64: 32, 32>}, {pipeline_mode = #tpu.pipeline_mode<synchronous>, transform_indices = @transform_7, window_bounds = array<i64: 1, 32>}, {pipeline_mode = #tpu.pipeline_mode<synchronous>, transform_indices = @transform_8, window_bounds = array<i64: 32, 32>}, {pipeline_mode = #tpu.pipeline_mode<synchronous>, transform_indices = @transform_9, window_bounds = array<i64: 1, 32>}, {pipeline_mode = #tpu.pipeline_mode<synchronous>, transform_indices = @transform_10, window_bounds = array<i64: 1, 32>}, {pipeline_mode = #tpu.pipeline_mode<synchronous>, transform_indices = @transform_11, window_bounds = array<i64: 1, 32>}, {pipeline_mode = #tpu.pipeline_mode<synchronous>, transform_indices = @transform_12, window_bounds = array<i64: 1, 32, 128>}, {pipeline_mode = #tpu.pipeline_mode<synchronous>, transform_indices = @transform_13, window_bounds = array<i64: 1, 1, 128>}, {pipeline_mode = #tpu.pipeline_mode<synchronous>, transform_indices = @transform_14, window_bounds = array<i64: 1, 128, 32>}, {pipeline_mode = #tpu.pipeline_mode<synchronous>, transform_indices = @transform_15, window_bounds = array<i64: 1, 32>}, {pipeline_mode = #tpu.pipeline_mode<synchronous>, transform_indices = @transform_16, window_bounds = array<i64: 1, 32>}, {pipeline_mode = #tpu.pipeline_mode<synchronous>, transform_indices = @transform_17, window_bounds = array<i64: 1, 32>}, {pipeline_mode = #tpu.pipeline_mode<synchronous>, transform_indices = @transform_18, window_bounds = array<i64: 32, 128>}, {pipeline_mode = #tpu.pipeline_mode<synchronous>, transform_indices = @transform_19, window_bounds = array<i64: 1, 128>}, {transform_indices = @transform_20, window_bounds = array<i64: 1, 8, 128>}]} {
    %c0 = arith.constant 0 : index
    %c0_0 = arith.constant 0 : index
    %c0_1 = arith.constant 0 : index
    %0 = vector.load %arg1[%c0, %c0_0, %c0_1] : memref<1x8x32xf32, #tpu.memory_space<vmem>>, vector<1x8x32xf32>
    %1 = vector.shape_cast %0 : vector<1x8x32xf32> to vector<8x32xf32>
    %c0_2 = arith.constant 0 : index
    %c0_3 = arith.constant 0 : index
    %2 = vector.load %arg22[%c0_2, %c0_3] : memref<8x32xf32, #tpu.memory_space<vmem>>, vector<8x32xf32>
    tpu.vector_store %arg22[%c0_2, %c0_3], %1 {strides = array<i32>} : memref<8x32xf32, #tpu.memory_space<vmem>>, vector<8x32xf32>,
    %c0_4 = arith.constant 0 : index
    %c0_5 = arith.constant 0 : index
    %c0_6 = arith.constant 0 : index
    %3 = vector.load %arg2[%c0_4, %c0_5, %c0_6] : memref<1x1x8xf32, #tpu.memory_space<vmem>>, vector<1x1x8xf32>
    %c0_i32 = arith.constant 0 : i32
    %c2_i32 = arith.constant 2 : i32
    %4 = arith.addi %c0_i32, %c2_i32 : i32
    %c1_i32 = arith.constant 1 : i32
    scf.for %arg24 = %c0_i32 to %4 step %c1_i32  : i32 {
      %c0_16 = arith.constant 0 : index
      %c0_17 = arith.constant 0 : index
      %15 = vector.load %arg22[%c0_16, %c0_17] : memref<8x32xf32, #tpu.memory_space<vmem>>, vector<8x32xf32>
      %16 = arith.truncf %15 : vector<8x32xf32> to vector<8x32xbf16>
      %c0_18 = arith.constant 0 : index
      %c0_19 = arith.constant 0 : index
      %17 = vector.load %arg3[%c0_18, %c0_19] : memref<32x32xbf16, #tpu.memory_space<vmem>>, vector<32x32xbf16>
      %cst_20 = arith.constant dense<0.000000e+00> : vector<8x32xf32>
      %18 = tpu.matmul %16, %17, %cst_20 {dimension_numbers = #tpu.dot_dimension_numbers<[1], [0], [0], [1], [0, 0, 1, 1], [], []>} : vector<8x32xbf16>, vector<32x32xbf16>, vector<8x32xf32> -> vector<8x32xf32>
      %c0_21 = arith.constant 0 : index
      %c0_22 = arith.constant 0 : index
      %19 = vector.load %arg4[%c0_21, %c0_22] : memref<1x32xf32, #tpu.memory_space<vmem>>, vector<1x32xf32>
      %20 = vector.broadcast %19 : vector<1x32xf32> to vector<8x32xf32>
      %21 = arith.addf %18, %20 : vector<8x32xf32>
      %22 = arith.truncf %21 : vector<8x32xf32> to vector<8x32xbf16>
      %c0_23 = arith.constant 0 : index
      %c0_24 = arith.constant 0 : index
      %23 = vector.load %arg5[%c0_23, %c0_24] : memref<32x32xbf16, #tpu.memory_space<vmem>>, vector<32x32xbf16>
      %cst_25 = arith.constant dense<0.000000e+00> : vector<8x32xf32>
      %24 = tpu.matmul %16, %23, %cst_25 {dimension_numbers = #tpu.dot_dimension_numbers<[1], [0], [0], [1], [0, 0, 1, 1], [], []>} : vector<8x32xbf16>, vector<32x32xbf16>, vector<8x32xf32> -> vector<8x32xf32>
      %c0_26 = arith.constant 0 : index
      %c0_27 = arith.constant 0 : index
      %25 = vector.load %arg6[%c0_26, %c0_27] : memref<1x32xf32, #tpu.memory_space<vmem>>, vector<1x32xf32>
      %26 = vector.broadcast %25 : vector<1x32xf32> to vector<8x32xf32>
      %27 = arith.addf %24, %26 : vector<8x32xf32>
      %28 = arith.truncf %27 : vector<8x32xf32> to vector<8x32xbf16>
      %c0_28 = arith.constant 0 : index
      %c0_29 = arith.constant 0 : index
      %29 = vector.load %arg7[%c0_28, %c0_29] : memref<32x32xbf16, #tpu.memory_space<vmem>>, vector<32x32xbf16>
      %cst_30 = arith.constant dense<0.000000e+00> : vector<8x32xf32>
      %30 = tpu.matmul %16, %29, %cst_30 {dimension_numbers = #tpu.dot_dimension_numbers<[1], [0], [0], [1], [0, 0, 1, 1], [], []>} : vector<8x32xbf16>, vector<32x32xbf16>, vector<8x32xf32> -> vector<8x32xf32>
      %c0_31 = arith.constant 0 : index
      %c0_32 = arith.constant 0 : index
      %31 = vector.load %arg8[%c0_31, %c0_32] : memref<1x32xf32, #tpu.memory_space<vmem>>, vector<1x32xf32>
      %32 = vector.broadcast %31 : vector<1x32xf32> to vector<8x32xf32>
      %33 = arith.addf %30, %32 : vector<8x32xf32>
      %34 = arith.truncf %33 : vector<8x32xf32> to vector<8x32xbf16>
      %35 = vector.extract_strided_slice %22 {offsets = [0, 0], sizes = [8, 8], strides = [1, 1]} : vector<8x32xbf16> to vector<8x8xbf16>
      %36 = vector.extract_strided_slice %22 {offsets = [0, 8], sizes = [8, 8], strides = [1, 1]} : vector<8x32xbf16> to vector<8x8xbf16>
      %37 = vector.extract_strided_slice %22 {offsets = [0, 16], sizes = [8, 8], strides = [1, 1]} : vector<8x32xbf16> to vector<8x8xbf16>
      %38 = vector.extract_strided_slice %22 {offsets = [0, 24], sizes = [8, 8], strides = [1, 1]} : vector<8x32xbf16> to vector<8x8xbf16>
      %39 = vector.shape_cast %35 : vector<8x8xbf16> to vector<1x8x8xbf16>
      %40 = vector.shape_cast %36 : vector<8x8xbf16> to vector<1x8x8xbf16>
      %41 = vector.shape_cast %37 : vector<8x8xbf16> to vector<1x8x8xbf16>
      %42 = vector.shape_cast %38 : vector<8x8xbf16> to vector<1x8x8xbf16>
      %43 = tpu.concatenate %39, %40, %41, %42 in 0 : vector<1x8x8xbf16>, vector<1x8x8xbf16>, vector<1x8x8xbf16>, vector<1x8x8xbf16> -> vector<4x8x8xbf16>
      %44 = vector.extract_strided_slice %28 {offsets = [0, 0], sizes = [8, 8], strides = [1, 1]} : vector<8x32xbf16> to vector<8x8xbf16>
      %45 = vector.extract_strided_slice %28 {offsets = [0, 8], sizes = [8, 8], strides = [1, 1]} : vector<8x32xbf16> to vector<8x8xbf16>
      %46 = vector.extract_strided_slice %28 {offsets = [0, 16], sizes = [8, 8], strides = [1, 1]} : vector<8x32xbf16> to vector<8x8xbf16>
      %47 = vector.extract_strided_slice %28 {offsets = [0, 24], sizes = [8, 8], strides = [1, 1]} : vector<8x32xbf16> to vector<8x8xbf16>
      %48 = vector.shape_cast %44 : vector<8x8xbf16> to vector<1x8x8xbf16>
      %49 = vector.shape_cast %45 : vector<8x8xbf16> to vector<1x8x8xbf16>
      %50 = vector.shape_cast %46 : vector<8x8xbf16> to vector<1x8x8xbf16>
      %51 = vector.shape_cast %47 : vector<8x8xbf16> to vector<1x8x8xbf16>
      %52 = tpu.concatenate %48, %49, %50, %51 in 0 : vector<1x8x8xbf16>, vector<1x8x8xbf16>, vector<1x8x8xbf16>, vector<1x8x8xbf16> -> vector<4x8x8xbf16>
      %53 = vector.extract_strided_slice %34 {offsets = [0, 0], sizes = [8, 8], strides = [1, 1]} : vector<8x32xbf16> to vector<8x8xbf16>
      %54 = vector.extract_strided_slice %34 {offsets = [0, 8], sizes = [8, 8], strides = [1, 1]} : vector<8x32xbf16> to vector<8x8xbf16>
      %55 = vector.extract_strided_slice %34 {offsets = [0, 16], sizes = [8, 8], strides = [1, 1]} : vector<8x32xbf16> to vector<8x8xbf16>
      %56 = vector.extract_strided_slice %34 {offsets = [0, 24], sizes = [8, 8], strides = [1, 1]} : vector<8x32xbf16> to vector<8x8xbf16>
      %57 = vector.shape_cast %53 : vector<8x8xbf16> to vector<1x8x8xbf16>
      %58 = vector.shape_cast %54 : vector<8x8xbf16> to vector<1x8x8xbf16>
      %59 = vector.shape_cast %55 : vector<8x8xbf16> to vector<1x8x8xbf16>
      %60 = vector.shape_cast %56 : vector<8x8xbf16> to vector<1x8x8xbf16>
      %61 = tpu.concatenate %57, %58, %59, %60 in 0 : vector<1x8x8xbf16>, vector<1x8x8xbf16>, vector<1x8x8xbf16>, vector<1x8x8xbf16> -> vector<4x8x8xbf16>
      "tpu.trace_start"() <{level = 10 : i32, message = "hqd,hkd->hqk"}> : () -> ()
      %cst_33 = arith.constant dense<0.000000e+00> : vector<4x8x8xf32>
      %62 = tpu.matmul %43, %52, %cst_33 {dimension_numbers = #tpu.dot_dimension_numbers<[2], [2], [1], [1], [0, 0, 0, 1, 1, 1], [0], [0]>} : vector<4x8x8xbf16>, vector<4x8x8xbf16>, vector<4x8x8xf32> -> vector<4x8x8xf32>
      "tpu.trace_stop"() : () -> ()
      %cst_34 = arith.constant 0.353553385 : f32
      %63 = vector.broadcast %cst_34 : f32 to vector<4x8x8xf32>
      %64 = arith.mulf %62, %63 : vector<4x8x8xf32>
      %65 = vector.broadcast %3 : vector<1x1x8xf32> to vector<4x8x8xf32>
      %66 = arith.addf %64, %65 : vector<4x8x8xf32>
      %cst_35 = arith.constant dense<0xFF800000> : vector<4x8xf32>
      %67 = vector.multi_reduction <maximumf>, %66, %cst_35 [2] : vector<4x8x8xf32> to vector<4x8xf32>
      %68 = vector.shape_cast %67 : vector<4x8xf32> to vector<4x8x1xf32>
      %69 = vector.broadcast %68 : vector<4x8x1xf32> to vector<4x8x8xf32>
      %70 = arith.subf %66, %69 : vector<4x8x8xf32>
      %71 = math.exp %70 : vector<4x8x8xf32>
      %cst_36 = arith.constant dense<0.000000e+00> : vector<4x8xf32>
      %72 = vector.multi_reduction <add>, %71, %cst_36 [2] : vector<4x8x8xf32> to vector<4x8xf32>
      %73 = vector.shape_cast %72 : vector<4x8xf32> to vector<4x8x1xf32>
      %74 = arith.truncf %71 : vector<4x8x8xf32> to vector<4x8x8xbf16>
      "tpu.trace_start"() <{level = 10 : i32, message = "hqk,hkd->hqd"}> : () -> ()
      %cst_37 = arith.constant dense<0.000000e+00> : vector<4x8x8xf32>
      %75 = tpu.matmul %74, %61, %cst_37 {dimension_numbers = #tpu.dot_dimension_numbers<[2], [1], [1], [2], [0, 0, 0, 1, 1, 2], [0], [0]>} : vector<4x8x8xbf16>, vector<4x8x8xbf16>, vector<4x8x8xf32> -> vector<4x8x8xf32>
      "tpu.trace_stop"() : () -> ()
      %76 = tpu.reciprocal %73 {approx = true} : vector<4x8x1xf32> -> vector<4x8x1xf32>
      %77 = vector.broadcast %76 : vector<4x8x1xf32> to vector<4x8x8xf32>
      %78 = arith.mulf %75, %77 : vector<4x8x8xf32>
      %79 = vector.extract_strided_slice %78 {offsets = [0, 0, 0], sizes = [1, 8, 8], strides = [1, 1, 1]} : vector<4x8x8xf32> to vector<1x8x8xf32>
      %80 = vector.shape_cast %79 : vector<1x8x8xf32> to vector<8x8xf32>
      %c0_38 = arith.constant 0 : index
      %c0_39 = arith.constant 0 : index
      %81 = vector.load %arg23[%c0_38, %c0_39] : memref<8x32xf32, #tpu.memory_space<vmem>>, vector<8x8xf32>
      tpu.vector_store %arg23[%c0_38, %c0_39], %80 {strides = array<i32>} : memref<8x32xf32, #tpu.memory_space<vmem>>, vector<8x8xf32>,
      %82 = vector.extract_strided_slice %78 {offsets = [1, 0, 0], sizes = [1, 8, 8], strides = [1, 1, 1]} : vector<4x8x8xf32> to vector<1x8x8xf32>
      %83 = vector.shape_cast %82 : vector<1x8x8xf32> to vector<8x8xf32>
      %c0_40 = arith.constant 0 : index
      %c8 = arith.constant 8 : index
      %84 = vector.load %arg23[%c0_40, %c8] : memref<8x32xf32, #tpu.memory_space<vmem>>, vector<8x8xf32>
      tpu.vector_store %arg23[%c0_40, %c8], %83 {strides = array<i32>} : memref<8x32xf32, #tpu.memory_space<vmem>>, vector<8x8xf32>,
      %85 = vector.extract_strided_slice %78 {offsets = [2, 0, 0], sizes = [1, 8, 8], strides = [1, 1, 1]} : vector<4x8x8xf32> to vector<1x8x8xf32>
      %86 = vector.shape_cast %85 : vector<1x8x8xf32> to vector<8x8xf32>
      %c0_41 = arith.constant 0 : index
      %c16 = arith.constant 16 : index
      %87 = vector.load %arg23[%c0_41, %c16] : memref<8x32xf32, #tpu.memory_space<vmem>>, vector<8x8xf32>
      tpu.vector_store %arg23[%c0_41, %c16], %86 {strides = array<i32>} : memref<8x32xf32, #tpu.memory_space<vmem>>, vector<8x8xf32>,
      %88 = vector.extract_strided_slice %78 {offsets = [3, 0, 0], sizes = [1, 8, 8], strides = [1, 1, 1]} : vector<4x8x8xf32> to vector<1x8x8xf32>
      %89 = vector.shape_cast %88 : vector<1x8x8xf32> to vector<8x8xf32>
      %c0_42 = arith.constant 0 : index
      %c24 = arith.constant 24 : index
      %90 = vector.load %arg23[%c0_42, %c24] : memref<8x32xf32, #tpu.memory_space<vmem>>, vector<8x8xf32>
      tpu.vector_store %arg23[%c0_42, %c24], %89 {strides = array<i32>} : memref<8x32xf32, #tpu.memory_space<vmem>>, vector<8x8xf32>,
      %c0_43 = arith.constant 0 : index
      %c0_44 = arith.constant 0 : index
      %91 = vector.load %arg23[%c0_43, %c0_44] : memref<8x32xf32, #tpu.memory_space<vmem>>, vector<8x32xf32>
      %92 = arith.truncf %91 : vector<8x32xf32> to vector<8x32xbf16>
      %c0_45 = arith.constant 0 : index
      %c0_46 = arith.constant 0 : index
      %93 = vector.load %arg9[%c0_45, %c0_46] : memref<32x32xbf16, #tpu.memory_space<vmem>>, vector<32x32xbf16>
      %cst_47 = arith.constant dense<0.000000e+00> : vector<8x32xf32>
      %94 = tpu.matmul %92, %93, %cst_47 {dimension_numbers = #tpu.dot_dimension_numbers<[1], [0], [0], [1], [0, 0, 1, 1], [], []>} : vector<8x32xbf16>, vector<32x32xbf16>, vector<8x32xf32> -> vector<8x32xf32>
      %c0_48 = arith.constant 0 : index
      %c0_49 = arith.constant 0 : index
      %95 = vector.load %arg10[%c0_48, %c0_49] : memref<1x32xf32, #tpu.memory_space<vmem>>, vector<1x32xf32>
      %96 = vector.broadcast %95 : vector<1x32xf32> to vector<8x32xf32>
      %97 = arith.addf %94, %96 : vector<8x32xf32>
      %98 = arith.addf %97, %15 : vector<8x32xf32>
      %c0_50 = arith.constant 0 : index
      %c0_51 = arith.constant 0 : index
      %99 = vector.load %arg11[%c0_50, %c0_51] : memref<1x32xf32, #tpu.memory_space<vmem>>, vector<1x32xf32>
      %c0_52 = arith.constant 0 : index
      %c0_53 = arith.constant 0 : index
      %100 = vector.load %arg12[%c0_52, %c0_53] : memref<1x32xf32, #tpu.memory_space<vmem>>, vector<1x32xf32>
      %cst_54 = arith.constant dense<0.000000e+00> : vector<8xf32>
      %101 = vector.multi_reduction <add>, %98, %cst_54 [1] : vector<8x32xf32> to vector<8xf32>
      %102 = vector.shape_cast %101 : vector<8xf32> to vector<8x1xf32>
      %cst_55 = arith.constant 3.200000e+01 : f32
      %103 = vector.broadcast %cst_55 : f32 to vector<8x1xf32>
      %104 = arith.divf %102, %103 : vector<8x1xf32>
      %105 = vector.broadcast %104 : vector<8x1xf32> to vector<8x32xf32>
      %106 = arith.subf %98, %105 : vector<8x32xf32>
      %107 = arith.mulf %106, %106 : vector<8x32xf32>
      %cst_56 = arith.constant dense<0.000000e+00> : vector<8xf32>
      %108 = vector.multi_reduction <add>, %107, %cst_56 [1] : vector<8x32xf32> to vector<8xf32>
      %109 = vector.shape_cast %108 : vector<8xf32> to vector<8x1xf32>
      %cst_57 = arith.constant 3.200000e+01 : f32
      %110 = vector.broadcast %cst_57 : f32 to vector<8x1xf32>
      %111 = arith.divf %109, %110 : vector<8x1xf32>
      %112 = vector.broadcast %104 : vector<8x1xf32> to vector<8x32xf32>
      %113 = arith.subf %98, %112 : vector<8x32xf32>
      %cst_58 = arith.constant 9.99999996E-13 : f32
      %114 = vector.broadcast %cst_58 : f32 to vector<8x1xf32>
      %115 = arith.addf %111, %114 : vector<8x1xf32>
      %116 = math.rsqrt %115 : vector<8x1xf32>
      %117 = vector.broadcast %116 : vector<8x1xf32> to vector<8x32xf32>
      %118 = arith.mulf %113, %117 : vector<8x32xf32>
      %119 = vector.broadcast %99 : vector<1x32xf32> to vector<8x32xf32>
      %120 = arith.mulf %118, %119 : vector<8x32xf32>
      %121 = vector.broadcast %100 : vector<1x32xf32> to vector<8x32xf32>
      %122 = arith.addf %120, %121 : vector<8x32xf32>
      %123 = arith.truncf %122 : vector<8x32xf32> to vector<8x32xbf16>
      %cst_59 = arith.constant 0.000000e+00 : f32
      %124 = vector.broadcast %cst_59 : f32 to vector<8x32xf32>
      %c0_i32_60 = arith.constant 0 : i32
      %125 = arith.index_cast %c0_i32_60 : i32 to index
      %c0_61 = arith.constant 0 : index
      %c0_62 = arith.constant 0 : index
      %126 = vector.load %arg13[%125, %c0_61, %c0_62] : memref<1x32x128xbf16, #tpu.memory_space<vmem>>, vector<1x32x128xbf16>
      %127 = vector.shape_cast %126 : vector<1x32x128xbf16> to vector<32x128xbf16>
      %cst_63 = arith.constant dense<0.000000e+00> : vector<8x128xf32>
      %128 = tpu.matmul %123, %127, %cst_63 {dimension_numbers = #tpu.dot_dimension_numbers<[1], [0], [0], [1], [0, 0, 1, 1], [], []>} : vector<8x32xbf16>, vector<32x128xbf16>, vector<8x128xf32> -> vector<8x128xf32>
      %129 = arith.index_cast %c0_i32_60 : i32 to index
      %c0_64 = arith.constant 0 : index
      %c0_65 = arith.constant 0 : index
      %130 = vector.load %arg14[%129, %c0_64, %c0_65] : memref<1x1x128xf32, #tpu.memory_space<vmem>>, vector<1x1x128xf32>
      %131 = vector.shape_cast %130 : vector<1x1x128xf32> to vector<1x128xf32>
      %132 = vector.broadcast %131 : vector<1x128xf32> to vector<8x128xf32>
      %133 = arith.addf %128, %132 : vector<8x128xf32>
      %cst_66 = arith.constant 5.000000e-01 : f32
      %134 = vector.broadcast %cst_66 : f32 to vector<8x128xf32>
      %135 = arith.mulf %134, %133 : vector<8x128xf32>
      %cst_67 = arith.constant 0.707106769 : f32
      %136 = vector.broadcast %cst_67 : f32 to vector<8x128xf32>
      %137 = arith.mulf %133, %136 : vector<8x128xf32>
      %138 = math.erf %137 : vector<8x128xf32>
      %cst_68 = arith.constant 1.000000e+00 : f32
      %139 = vector.broadcast %cst_68 : f32 to vector<8x128xf32>
      %140 = arith.addf %139, %138 : vector<8x128xf32>
      %141 = arith.mulf %135, %140 : vector<8x128xf32>
      %142 = arith.truncf %141 : vector<8x128xf32> to vector<8x128xbf16>
      %143 = arith.index_cast %c0_i32_60 : i32 to index
      %c0_69 = arith.constant 0 : index
      %c0_70 = arith.constant 0 : index
      %144 = vector.load %arg15[%143, %c0_69, %c0_70] : memref<1x128x32xbf16, #tpu.memory_space<vmem>>, vector<1x128x32xbf16>
      %145 = vector.shape_cast %144 : vector<1x128x32xbf16> to vector<128x32xbf16>
      %cst_71 = arith.constant dense<0.000000e+00> : vector<8x32xf32>
      %146 = tpu.matmul %142, %145, %cst_71 {dimension_numbers = #tpu.dot_dimension_numbers<[1], [0], [0], [1], [0, 0, 1, 1], [], []>} : vector<8x128xbf16>, vector<128x32xbf16>, vector<8x32xf32> -> vector<8x32xf32>
      %147 = arith.addf %124, %146 : vector<8x32xf32>
      %c1_i32_72 = arith.constant 1 : i32
      %c0_73 = arith.constant 0 : index
      %c0_74 = arith.constant 0 : index
      %148 = vector.load %arg16[%c0_73, %c0_74] : memref<1x32xf32, #tpu.memory_space<vmem>>, vector<1x32xf32>
      %149 = vector.broadcast %148 : vector<1x32xf32> to vector<8x32xf32>
      %150 = arith.addf %147, %149 : vector<8x32xf32>
      %151 = arith.addf %150, %122 : vector<8x32xf32>
      %c0_75 = arith.constant 0 : index
      %c0_76 = arith.constant 0 : index
      %152 = vector.load %arg17[%c0_75, %c0_76] : memref<1x32xf32, #tpu.memory_space<vmem>>, vector<1x32xf32>
      %c0_77 = arith.constant 0 : index
      %c0_78 = arith.constant 0 : index
      %153 = vector.load %arg18[%c0_77, %c0_78] : memref<1x32xf32, #tpu.memory_space<vmem>>, vector<1x32xf32>
      %cst_79 = arith.constant dense<0.000000e+00> : vector<8xf32>
      %154 = vector.multi_reduction <add>, %151, %cst_79 [1] : vector<8x32xf32> to vector<8xf32>
      %155 = vector.shape_cast %154 : vector<8xf32> to vector<8x1xf32>
      %cst_80 = arith.constant 3.200000e+01 : f32
      %156 = vector.broadcast %cst_80 : f32 to vector<8x1xf32>
      %157 = arith.divf %155, %156 : vector<8x1xf32>
      %158 = vector.broadcast %157 : vector<8x1xf32> to vector<8x32xf32>
      %159 = arith.subf %151, %158 : vector<8x32xf32>
      %160 = arith.mulf %159, %159 : vector<8x32xf32>
      %cst_81 = arith.constant dense<0.000000e+00> : vector<8xf32>
      %161 = vector.multi_reduction <add>, %160, %cst_81 [1] : vector<8x32xf32> to vector<8xf32>
      %162 = vector.shape_cast %161 : vector<8xf32> to vector<8x1xf32>
      %cst_82 = arith.constant 3.200000e+01 : f32
      %163 = vector.broadcast %cst_82 : f32 to vector<8x1xf32>
      %164 = arith.divf %162, %163 : vector<8x1xf32>
      %165 = vector.broadcast %157 : vector<8x1xf32> to vector<8x32xf32>
      %166 = arith.subf %151, %165 : vector<8x32xf32>
      %cst_83 = arith.constant 9.99999996E-13 : f32
      %167 = vector.broadcast %cst_83 : f32 to vector<8x1xf32>
      %168 = arith.addf %164, %167 : vector<8x1xf32>
      %169 = math.rsqrt %168 : vector<8x1xf32>
      %170 = vector.broadcast %169 : vector<8x1xf32> to vector<8x32xf32>
      %171 = arith.mulf %166, %170 : vector<8x32xf32>
      %172 = vector.broadcast %152 : vector<1x32xf32> to vector<8x32xf32>
      %173 = arith.mulf %171, %172 : vector<8x32xf32>
      %174 = vector.broadcast %153 : vector<1x32xf32> to vector<8x32xf32>
      %175 = arith.addf %173, %174 : vector<8x32xf32>
      %c0_84 = arith.constant 0 : index
      %c0_85 = arith.constant 0 : index
      %176 = vector.load %arg22[%c0_84, %c0_85] : memref<8x32xf32, #tpu.memory_space<vmem>>, vector<8x32xf32>
      tpu.vector_store %arg22[%c0_84, %c0_85], %175 {strides = array<i32>} : memref<8x32xf32, #tpu.memory_space<vmem>>, vector<8x32xf32>,
    }
    %c0_7 = arith.constant 0 : index
    %c0_8 = arith.constant 0 : index
    %5 = vector.load %arg22[%c0_7, %c0_8] : memref<8x32xf32, #tpu.memory_space<vmem>>, vector<8x32xf32>
    %6 = arith.truncf %5 : vector<8x32xf32> to vector<8x32xbf16>
    %c0_9 = arith.constant 0 : index
    %c0_10 = arith.constant 0 : index
    %7 = vector.load %arg19[%c0_9, %c0_10] : memref<32x128xbf16, #tpu.memory_space<vmem>>, vector<32x128xbf16>
    %cst = arith.constant dense<0.000000e+00> : vector<8x128xf32>
    %8 = tpu.matmul %6, %7, %cst {dimension_numbers = #tpu.dot_dimension_numbers<[1], [0], [0], [1], [0, 0, 1, 1], [], []>} : vector<8x32xbf16>, vector<32x128xbf16>, vector<8x128xf32> -> vector<8x128xf32>
    %c0_11 = arith.constant 0 : index
    %c0_12 = arith.constant 0 : index
    %9 = vector.load %arg20[%c0_11, %c0_12] : memref<1x128xf32, #tpu.memory_space<vmem>>, vector<1x128xf32>
    %10 = vector.broadcast %9 : vector<1x128xf32> to vector<8x128xf32>
    %11 = arith.addf %8, %10 : vector<8x128xf32>
    %c0_13 = arith.constant 0 : index
    %c0_14 = arith.constant 0 : index
    %c0_15 = arith.constant 0 : index
    %12 = vector.load %arg21[%c0_13, %c0_14, %c0_15] : memref<1x8x128xf32, #tpu.memory_space<vmem>>, vector<1x8x128xf32>
    %13 = vector.shape_cast %12 : vector<1x8x128xf32> to vector<8x128xf32>
    %14 = vector.shape_cast %11 : vector<8x128xf32> to vector<1x8x128xf32>
    tpu.vector_store %arg21[%c0_13, %c0_14, %c0_15], %14 {strides = array<i32>} : memref<1x8x128xf32, #tpu.memory_space<vmem>>, vector<1x8x128xf32>,
    return
  }
  func.func @transform_0(%arg0: i32) -> (i32, i32, i32) {
    %c0_i32 = arith.constant 0 : i32
    %c0_i32_0 = arith.constant 0 : i32
    %c0_i32_1 = arith.constant 0 : i32
    return %arg0, %c0_i32, %c0_i32_0 : i32, i32, i32
  }
  func.func @transform_1(%arg0: i32) -> (i32, i32, i32) {
    %c0_i32 = arith.constant 0 : i32
    %c0_i32_0 = arith.constant 0 : i32
    %c0_i32_1 = arith.constant 0 : i32
    return %arg0, %c0_i32, %c0_i32_0 : i32, i32, i32
  }
  func.func @transform_2(%arg0: i32) -> (i32, i32) {
    %c0_i32 = arith.constant 0 : i32
    %c0_i32_0 = arith.constant 0 : i32
    %c0_i32_1 = arith.constant 0 : i32
    return %c0_i32, %c0_i32_0 : i32, i32
  }
  func.func @transform_3(%arg0: i32) -> (i32, i32) {
    %c0_i32 = arith.constant 0 : i32
    %c0_i32_0 = arith.constant 0 : i32
    %c0_i32_1 = arith.constant 0 : i32
    return %c0_i32, %c0_i32_0 : i32, i32
  }
  func.func @transform_4(%arg0: i32) -> (i32, i32) {
    %c0_i32 = arith.constant 0 : i32
    %c0_i32_0 = arith.constant 0 : i32
    %c0_i32_1 = arith.constant 0 : i32
    return %c0_i32, %c0_i32_0 : i32, i32
  }
  func.func @transform_5(%arg0: i32) -> (i32, i32) {
    %c0_i32 = arith.constant 0 : i32
    %c0_i32_0 = arith.constant 0 : i32
    %c0_i32_1 = arith.constant 0 : i32
    return %c0_i32, %c0_i32_0 : i32, i32
  }
  func.func @transform_6(%arg0: i32) -> (i32, i32) {
    %c0_i32 = arith.constant 0 : i32
    %c0_i32_0 = arith.constant 0 : i32
    %c0_i32_1 = arith.constant 0 : i32
    return %c0_i32, %c0_i32_0 : i32, i32
  }
  func.func @transform_7(%arg0: i32) -> (i32, i32) {
    %c0_i32 = arith.constant 0 : i32
    %c0_i32_0 = arith.constant 0 : i32
    %c0_i32_1 = arith.constant 0 : i32
    return %c0_i32, %c0_i32_0 : i32, i32
  }
  func.func @transform_8(%arg0: i32) -> (i32, i32) {
    %c0_i32 = arith.constant 0 : i32
    %c0_i32_0 = arith.constant 0 : i32
    %c0_i32_1 = arith.constant 0 : i32
    return %c0_i32, %c0_i32_0 : i32, i32
  }
  func.func @transform_9(%arg0: i32) -> (i32, i32) {
    %c0_i32 = arith.constant 0 : i32
    %c0_i32_0 = arith.constant 0 : i32
    %c0_i32_1 = arith.constant 0 : i32
    return %c0_i32, %c0_i32_0 : i32, i32
  }
  func.func @transform_10(%arg0: i32) -> (i32, i32) {
    %c0_i32 = arith.constant 0 : i32
    %c0_i32_0 = arith.constant 0 : i32
    %c0_i32_1 = arith.constant 0 : i32
    return %c0_i32, %c0_i32_0 : i32, i32
  }
  func.func @transform_11(%arg0: i32) -> (i32, i32) {
    %c0_i32 = arith.constant 0 : i32
    %c0_i32_0 = arith.constant 0 : i32
    %c0_i32_1 = arith.constant 0 : i32
    return %c0_i32, %c0_i32_0 : i32, i32
  }
  func.func @transform_12(%arg0: i32) -> (i32, i32, i32) {
    %c0_i32 = arith.constant 0 : i32
    %c0_i32_0 = arith.constant 0 : i32
    %c0_i32_1 = arith.constant 0 : i32
    %c0_i32_2 = arith.constant 0 : i32
    return %c0_i32, %c0_i32_0, %c0_i32_1 : i32, i32, i32
  }
  func.func @transform_13(%arg0: i32) -> (i32, i32, i32) {
    %c0_i32 = arith.constant 0 : i32
    %c0_i32_0 = arith.constant 0 : i32
    %c0_i32_1 = arith.constant 0 : i32
    %c0_i32_2 = arith.constant 0 : i32
    return %c0_i32, %c0_i32_0, %c0_i32_1 : i32, i32, i32
  }
  func.func @transform_14(%arg0: i32) -> (i32, i32, i32) {
    %c0_i32 = arith.constant 0 : i32
    %c0_i32_0 = arith.constant 0 : i32
    %c0_i32_1 = arith.constant 0 : i32
    %c0_i32_2 = arith.constant 0 : i32
    return %c0_i32, %c0_i32_0, %c0_i32_1 : i32, i32, i32
  }
  func.func @transform_15(%arg0: i32) -> (i32, i32) {
    %c0_i32 = arith.constant 0 : i32
    %c0_i32_0 = arith.constant 0 : i32
    %c0_i32_1 = arith.constant 0 : i32
    return %c0_i32, %c0_i32_0 : i32, i32
  }
  func.func @transform_16(%arg0: i32) -> (i32, i32) {
    %c0_i32 = arith.constant 0 : i32
    %c0_i32_0 = arith.constant 0 : i32
    %c0_i32_1 = arith.constant 0 : i32
    return %c0_i32, %c0_i32_0 : i32, i32
  }
  func.func @transform_17(%arg0: i32) -> (i32, i32) {
    %c0_i32 = arith.constant 0 : i32
    %c0_i32_0 = arith.constant 0 : i32
    %c0_i32_1 = arith.constant 0 : i32
    return %c0_i32, %c0_i32_0 : i32, i32
  }
  func.func @transform_18(%arg0: i32) -> (i32, i32) {
    %c0_i32 = arith.constant 0 : i32
    %c0_i32_0 = arith.constant 0 : i32
    %c0_i32_1 = arith.constant 0 : i32
    return %c0_i32, %c0_i32_0 : i32, i32
  }
  func.func @transform_19(%arg0: i32) -> (i32, i32) {
    %c0_i32 = arith.constant 0 : i32
    %c0_i32_0 = arith.constant 0 : i32
    %c0_i32_1 = arith.constant 0 : i32
    return %c0_i32, %c0_i32_0 : i32, i32
  }
  func.func @transform_20(%arg0: i32) -> (i32, i32, i32) {
    %c0_i32 = arith.constant 0 : i32
    %c0_i32_0 = arith.constant 0 : i32
    %c0_i32_1 = arith.constant 0 : i32
    return %arg0, %c0_i32, %c0_i32_0 : i32, i32, i32
  }
}

</mosaic_0001>

<llo_original>
// kernel: tpu_custom_call.1
$region0: #{tpu_custom_call.1}
  #allocation0 [shape = 'u32[]', space=smem, size = 0x4, offset = 0x4, fixed_abs, tag = 'smem constant byte address 0x4 - core index']
  #allocation1 [shape = 'u32[72,128]{1,0:T(1,128)}', space=vmem, size = 0x9000, scoped, tag = 'internal scratch']
  #allocation2 [shape = 'f32[8,32]{1,0:T(8,128)}', space=vmem, size = 0x1000, scoped, tag = 'scratch operand']
  #allocation3 [shape = 'f32[8,32]{1,0:T(8,128)}', space=vmem, size = 0x1000, scoped, tag = 'scratch operand']
  %s0 = inlined_call_operand.vmem [shape: f32[2,8,32], index: 0, kind: input, shape index: {}]
  %s1 = inlined_call_operand.hbm [shape: f32[2,1,8], index: 1, kind: input, shape index: {}]
  %s2 = inlined_call_operand.vmem [shape: bf16[32,32], index: 2, kind: input, shape index: {}]
  %s3 = inlined_call_operand.vmem [shape: f32[1,32], index: 3, kind: input, shape index: {}]
  %s4 = inlined_call_operand.vmem [shape: bf16[32,32], index: 4, kind: input, shape index: {}]
  %s5 = inlined_call_operand.hbm [shape: f32[1,32], index: 5, kind: input, shape index: {}]
  %s6 = inlined_call_operand.vmem [shape: bf16[32,32], index: 6, kind: input, shape index: {}]
  %s7 = inlined_call_operand.hbm [shape: f32[1,32], index: 7, kind: input, shape index: {}]
  %s8 = inlined_call_operand.vmem [shape: bf16[32,32], index: 8, kind: input, shape index: {}]
  %s9 = inlined_call_operand.hbm [shape: f32[1,32], index: 9, kind: input, shape index: {}]
  %s10 = inlined_call_operand.hbm [shape: f32[1,32], index: 10, kind: input, shape index: {}]
  %s11 = inlined_call_operand.hbm [shape: f32[1,32], index: 11, kind: input, shape index: {}]
  %s12 = inlined_call_operand.hbm [shape: bf16[1,32,128], index: 12, kind: input, shape index: {}]
  %s13 = inlined_call_operand.hbm [shape: f32[1,1,128], index: 13, kind: input, shape index: {}]
  %s14 = inlined_call_operand.vmem [shape: bf16[1,128,32], index: 14, kind: input, shape index: {}]
  %s15 = inlined_call_operand.hbm [shape: f32[1,32], index: 15, kind: input, shape index: {}]
  %s16 = inlined_call_operand.hbm [shape: f32[1,32], index: 16, kind: input, shape index: {}]
  %s17 = inlined_call_operand.hbm [shape: f32[1,32], index: 17, kind: input, shape index: {}]
  %s18 = inlined_call_operand.vmem [shape: bf16[32,128], index: 18, kind: input, shape index: {}]
  %s19 = inlined_call_operand.hbm [shape: f32[1,128], index: 19, kind: input, shape index: {}]
  %s20 = inlined_call_operand.hbm [shape: f32[2,8,128], index: 20, kind: output, shape index: {}]
  %s21 = sld [smem:[#allocation0]]
  $region168: #{tpu_custom_call.1} parent=0
    _
  %s23 = ssub.s32 1, %s21
  %s24 = scalar_select 0, %s23, %s21
  $region1: #{tpu_custom_call.1} parent=0
    #allocation4 [shape = 'u8[1024]{0}', space=vmem, size = 0x400, scoped, tag = 'input window, operand 1']
    #allocation5 [shape = 's32[2]{0}', space=sflag, size = 0x8, scoped, tag = 'scoped memory for tpu_custom_call.1']
    #allocation6 [shape = 's32[2]{0}', space=sflag, size = 0x8, scoped, tag = 'scoped memory for tpu_custom_call.1']
    #allocation7 [shape = 'u8[512]{0}', space=vmem, size = 0x400, scoped, tag = 'input window, operand 5, single buffered']
    #allocation8 [shape = 's32[1]{0}', space=sflag, size = 0x4, scoped, tag = 'scoped memory for tpu_custom_call.1']
    #allocation9 [shape = 'u8[512]{0}', space=vmem, size = 0x400, scoped, tag = 'input window, operand 7, single buffered']
    #allocation10 [shape = 'u8[512]{0}', space=vmem, size = 0x400, scoped, tag = 'input window, operand 9, single buffered']
    #allocation11 [shape = 's32[1]{0}', space=sflag, size = 0x4, scoped, tag = 'scoped memory for tpu_custom_call.1']
    #allocation12 [shape = 'u8[512]{0}', space=vmem, size = 0x400, scoped, tag = 'input window, operand 10, single buffered']
    #allocation13 [shape = 'u8[512]{0}', space=vmem, size = 0x400, scoped, tag = 'input window, operand 11, single buffered']
    #allocation14 [shape = 's32[1]{0}', space=sflag, size = 0x4, scoped, tag = 'scoped memory for tpu_custom_call.1']
    #allocation15 [shape = 'u8[8192]{0}', space=vmem, size = 0x2000, scoped, tag = 'input window, operand 12, single buffered']
    #allocation16 [shape = 'u8[512]{0}', space=vmem, size = 0x400, scoped, tag = 'input window, operand 13, single buffered']
    #allocation17 [shape = 's32[1]{0}', space=sflag, size = 0x4, scoped, tag = 'scoped memory for tpu_custom_call.1']
    #allocation18 [shape = 'u8[512]{0}', space=vmem, size = 0x400, scoped, tag = 'input window, operand 15, single buffered']
    #allocation19 [shape = 'u8[512]{0}', space=vmem, size = 0x400, scoped, tag = 'input window, operand 16, single buffered']
    #allocation20 [shape = 's32[1]{0}', space=sflag, size = 0x4, scoped, tag = 'scoped memory for tpu_custom_call.1']
    #allocation21 [shape = 'u8[512]{0}', space=vmem, size = 0x400, scoped, tag = 'input window, operand 17, single buffered']
    #allocation22 [shape = 'u8[512]{0}', space=vmem, size = 0x400, scoped, tag = 'input window, operand 19, single buffered']
    #allocation23 [shape = 's32[1]{0}', space=sflag, size = 0x4, scoped, tag = 'scoped memory for tpu_custom_call.1']
    #allocation24 [shape = 'u8[8192]{0}', space=vmem, size = 0x2000, scoped, tag = 'output window, operand 0']
    %25 = vsyncpa [#allocation5], 0
    %s26 = scalar_lea.sflag [#allocation5], 1
    %27 = vsyncpa %s26, 0
    %28 = vsyncpa [#allocation8], 0
    %29 = vsyncpa [#allocation11], 0
    %30 = vsyncpa [#allocation14], 0
    %31 = vsyncpa [#allocation17], 0
    %32 = vsyncpa [#allocation20], 0
    %33 = vsyncpa [#allocation23], 0
    %34 = vsyncpa [#allocation6], 0
    %s35 = scalar_lea.sflag [#allocation6], 1
    %36 = vsyncpa %s35, 0
    loop: start=0, step=1, limit=4
    $region2: #{tpu_custom_call.1} parent=1 // loop_pre_header
      _
    $region3: #{tpu_custom_call.1} parent=1 // loop_header
      %s38 = sphi 0, %s42
      %p39 = scmp.ge.s32.totalorder %s38, 4
      %s48 = sphi 0, %s50
      %s51 = sphi 0, %s48
      %s52 = sphi 0, %s51
      %s68 = sphi 0, %s52
      %s74 = sphi 0, %s76
      %s77 = sphi 0, %s74
      %s78 = sphi 0, %s77
      %s94 = sphi 0, %s78
      %s98 = sphi 0, %s98
      %s100 = sphi 0, %s98
      %s101 = sphi 0, %s100
      %s115 = sphi 0, %s101
      %s119 = sphi 0, %s119
      %s121 = sphi 0, %s119
      %s122 = sphi 0, %s121
      %s136 = sphi 0, %s122
      %s140 = sphi 0, %s140
      %s142 = sphi 0, %s140
      %s143 = sphi 0, %s142
      %s157 = sphi 0, %s143
      %s161 = sphi 0, %s161
      %s163 = sphi 0, %s161
      %s164 = sphi 0, %s163
      %s178 = sphi 0, %s164
      %s182 = sphi 0, %s182
      %s184 = sphi 0, %s182
      %s185 = sphi 0, %s184
      %s199 = sphi 0, %s185
      %s203 = sphi 0, %s203
      %s205 = sphi 0, %s203
      %s206 = sphi 0, %s205
      %s220 = sphi 0, %s206
      %s224 = sphi 0, %s224
      %s226 = sphi 0, %s224
      %s227 = sphi 0, %s226
      %s241 = sphi 0, %s227
      %s245 = sphi 0, %s245
      %s247 = sphi 0, %s245
      %s248 = sphi 0, %s247
      %s262 = sphi 0, %s248
      %s266 = sphi 0, %s266
      %s268 = sphi 0, %s266
      %s269 = sphi 0, %s268
      %s283 = sphi 0, %s269
      %s287 = sphi 0, %s287
      %s289 = sphi 0, %s287
      %s290 = sphi 0, %s289
      %s304 = sphi 0, %s290
      %s308 = sphi 0, %s308
      %s310 = sphi 0, %s308
      %s311 = sphi 0, %s310
      %s325 = sphi 0, %s311
      %s329 = sphi 0, %s329
      %s331 = sphi 0, %s329
      %s332 = sphi 0, %s331
      %s346 = sphi 0, %s332
      %s350 = sphi 0, %s350
      %s352 = sphi 0, %s350
      %s353 = sphi 0, %s352
      %s367 = sphi 0, %s353
      %s371 = sphi 0, %s371
      %s373 = sphi 0, %s371
      %s374 = sphi 0, %s373
      %s388 = sphi 0, %s374
      %s392 = sphi 0, %s392
      %s394 = sphi 0, %s392
      %s395 = sphi 0, %s394
      %s409 = sphi 0, %s395
      %s413 = sphi 0, %s413
      %s415 = sphi 0, %s413
      %s416 = sphi 0, %s415
      %s430 = sphi 0, %s416
      %s434 = sphi 0, %s434
      %s436 = sphi 0, %s434
      %s437 = sphi 0, %s436
      %s451 = sphi 0, %s437
      %s455 = sphi 0, %s455
      %s457 = sphi 0, %s455
      %s458 = sphi 0, %s457
      %s472 = sphi 0, %s458
      %s478 = sphi 0, %s480
      %s481 = sphi 0, %s478
      %s482 = sphi 0, %s481
      %s498 = sphi 0, %s482
    $region4: #{tpu_custom_call.1} parent=1 // loop_header_branch
      %41 = sbr.rel (%p39) target = $region8
    $region5: #{tpu_custom_call.1} parent=1 // loop_body
      %s43 = ssub.s32 %s38, 1
      %s44 = ssub.s32 %s38, 2
      %s45 = sadd.s32 %s38, 1
      %s46 = ssub.s32 %s38, %s45
      %p47 = scmp.eq.s32.totalorder %s46, 0
      %s49 = sadd.s32 %s48, 1
      %s50 = scalar_select %p47, %s48, %s49
      %p53 = pneg %p47
      %p54 = scmp.eq.s32.totalorder %s38, 1
      %p55 = por %p53, %p54
      %p56 = scmp.ne.s32.totalorder %s48, %s51
      %p57 = scmp.eq.s32.totalorder %s38, 0
      %p58 = por %p56, %p57
      %p59 = scmp.ne.s32.totalorder %s48, %s51
      %p60 = scmp.eq.s32.totalorder %s43, 1
      %p61 = por %p59, %p60
      %p62 = scmp.ne.s32.totalorder %s51, %s52
      %p63 = scmp.eq.s32.totalorder %s43, 0
      %p64 = por %p62, %p63
      %p65 = scmp.ne.s32.totalorder %s51, %s52
      %p66 = scmp.eq.s32.totalorder %s44, 1
      %p67 = por %p65, %p66
      %p69 = scmp.ne.s32.totalorder %s52, %s68
      %p70 = scmp.eq.s32.totalorder %s44, 0
      %p71 = por %p69, %p70
      %s72 = ssub.s32 %s38, %s45
      %p73 = scmp.eq.s32.totalorder %s72, 0
      %s75 = sadd.s32 %s74, 1
      %s76 = scalar_select %p73, %s74, %s75
      %p79 = pneg %p73
      %p80 = scmp.eq.s32.totalorder %s38, 1
      %p81 = por %p79, %p80
      %p82 = scmp.ne.s32.totalorder %s74, %s77
      %p83 = scmp.eq.s32.totalorder %s38, 0
      %p84 = por %p82, %p83
      %p85 = scmp.ne.s32.totalorder %s74, %s77
      %p86 = scmp.eq.s32.totalorder %s43, 1
      %p87 = por %p85, %p86
      %p88 = scmp.ne.s32.totalorder %s77, %s78
      %p89 = scmp.eq.s32.totalorder %s43, 0
      %p90 = por %p88, %p89
      %p91 = scmp.ne.s32.totalorder %s77, %s78
      %p92 = scmp.eq.s32.totalorder %s44, 1
      %p93 = por %p91, %p92
      %p95 = scmp.ne.s32.totalorder %s78, %s94
      %p96 = scmp.eq.s32.totalorder %s44, 0
      %p97 = por %p95, %p96
      %s99 = sadd.s32 %s98, 1
      %p102 = scmp.eq.s32.totalorder %s38, 1
      %p103 = scmp.ne.s32.totalorder %s98, %s100
      %p104 = scmp.eq.s32.totalorder %s38, 0
      %p105 = por %p103, %p104
      %p106 = scmp.ne.s32.totalorder %s98, %s100
      %p107 = scmp.eq.s32.totalorder %s43, 1
      %p108 = por %p106, %p107
      %p109 = scmp.ne.s32.totalorder %s100, %s101
      %p110 = scmp.eq.s32.totalorder %s43, 0
      %p111 = por %p109, %p110
      %p112 = scmp.ne.s32.totalorder %s100, %s101
      %p113 = scmp.eq.s32.totalorder %s44, 1
      %p114 = por %p112, %p113
      %p116 = scmp.ne.s32.totalorder %s101, %s115
      %p117 = scmp.eq.s32.totalorder %s44, 0
      %p118 = por %p116, %p117
      %s120 = sadd.s32 %s119, 1
      %p123 = scmp.eq.s32.totalorder %s38, 1
      %p124 = scmp.ne.s32.totalorder %s119, %s121
      %p125 = scmp.eq.s32.totalorder %s38, 0
      %p126 = por %p124, %p125
      %p127 = scmp.ne.s32.totalorder %s119, %s121
      %p128 = scmp.eq.s32.totalorder %s43, 1
      %p129 = por %p127, %p128
      %p130 = scmp.ne.s32.totalorder %s121, %s122
      %p131 = scmp.eq.s32.totalorder %s43, 0
      %p132 = por %p130, %p131
      %p133 = scmp.ne.s32.totalorder %s121, %s122
      %p134 = scmp.eq.s32.totalorder %s44, 1
      %p135 = por %p133, %p134
      %p137 = scmp.ne.s32.totalorder %s122, %s136
      %p138 = scmp.eq.s32.totalorder %s44, 0
      %p139 = por %p137, %p138
      %s141 = sadd.s32 %s140, 1
      %p144 = scmp.eq.s32.totalorder %s38, 1
      %p145 = scmp.ne.s32.totalorder %s140, %s142
      %p146 = scmp.eq.s32.totalorder %s38, 0
      %p147 = por %p145, %p146
      %p148 = scmp.ne.s32.totalorder %s140, %s142
      %p149 = scmp.eq.s32.totalorder %s43, 1
      %p150 = por %p148, %p149
      %p151 = scmp.ne.s32.totalorder %s142, %s143
      %p152 = scmp.eq.s32.totalorder %s43, 0
      %p153 = por %p151, %p152
      %p154 = scmp.ne.s32.totalorder %s142, %s143
      %p155 = scmp.eq.s32.totalorder %s44, 1
      %p156 = por %p154, %p155
      %p158 = scmp.ne.s32.totalorder %s143, %s157
      %p159 = scmp.eq.s32.totalorder %s44, 0
      %p160 = por %p158, %p159
      %s162 = sadd.s32 %s161, 1
      %p165 = scmp.eq.s32.totalorder %s38, 1
      %p166 = scmp.ne.s32.totalorder %s161, %s163
      %p167 = scmp.eq.s32.totalorder %s38, 0
      %p168 = por %p166, %p167
      %p169 = scmp.ne.s32.totalorder %s161, %s163
      %p170 = scmp.eq.s32.totalorder %s43, 1
      %p171 = por %p169, %p170
      %p172 = scmp.ne.s32.totalorder %s163, %s164
      %p173 = scmp.eq.s32.totalorder %s43, 0
      %p174 = por %p172, %p173
      %p175 = scmp.ne.s32.totalorder %s163, %s164
      %p176 = scmp.eq.s32.totalorder %s44, 1
      %p177 = por %p175, %p176
      %p179 = scmp.ne.s32.totalorder %s164, %s178
      %p180 = scmp.eq.s32.totalorder %s44, 0
      %p181 = por %p179, %p180
      %s183 = sadd.s32 %s182, 1
      %p186 = scmp.eq.s32.totalorder %s38, 1
      %p187 = scmp.ne.s32.totalorder %s182, %s184
      %p188 = scmp.eq.s32.totalorder %s38, 0
      %p189 = por %p187, %p188
      %p190 = scmp.ne.s32.totalorder %s182, %s184
      %p191 = scmp.eq.s32.totalorder %s43, 1
      %p192 = por %p190, %p191
      %p193 = scmp.ne.s32.totalorder %s184, %s185
      %p194 = scmp.eq.s32.totalorder %s43, 0
      %p195 = por %p193, %p194
      %p196 = scmp.ne.s32.totalorder %s184, %s185
      %p197 = scmp.eq.s32.totalorder %s44, 1
      %p198 = por %p196, %p197
      %p200 = scmp.ne.s32.totalorder %s185, %s199
      %p201 = scmp.eq.s32.totalorder %s44, 0
      %p202 = por %p200, %p201
      %s204 = sadd.s32 %s203, 1
      %p207 = scmp.eq.s32.totalorder %s38, 1
      %p208 = scmp.ne.s32.totalorder %s203, %s205
      %p209 = scmp.eq.s32.totalorder %s38, 0
      %p210 = por %p208, %p209
      %p211 = scmp.ne.s32.totalorder %s203, %s205
      %p212 = scmp.eq.s32.totalorder %s43, 1
      %p213 = por %p211, %p212
      %p214 = scmp.ne.s32.totalorder %s205, %s206
      %p215 = scmp.eq.s32.totalorder %s43, 0
      %p216 = por %p214, %p215
      %p217 = scmp.ne.s32.totalorder %s205, %s206
      %p218 = scmp.eq.s32.totalorder %s44, 1
      %p219 = por %p217, %p218
      %p221 = scmp.ne.s32.totalorder %s206, %s220
      %p222 = scmp.eq.s32.totalorder %s44, 0
      %p223 = por %p221, %p222
      %s225 = sadd.s32 %s224, 1
      %p228 = scmp.eq.s32.totalorder %s38, 1
      %p229 = scmp.ne.s32.totalorder %s224, %s226
      %p230 = scmp.eq.s32.totalorder %s38, 0
      %p231 = por %p229, %p230
      %p232 = scmp.ne.s32.totalorder %s224, %s226
      %p233 = scmp.eq.s32.totalorder %s43, 1
      %p234 = por %p232, %p233
      %p235 = scmp.ne.s32.totalorder %s226, %s227
      %p236 = scmp.eq.s32.totalorder %s43, 0
      %p237 = por %p235, %p236
      %p238 = scmp.ne.s32.totalorder %s226, %s227
      %p239 = scmp.eq.s32.totalorder %s44, 1
      %p240 = por %p238, %p239
      %p242 = scmp.ne.s32.totalorder %s227, %s241
      %p243 = scmp.eq.s32.totalorder %s44, 0
      %p244 = por %p242, %p243
      %s246 = sadd.s32 %s245, 1
      %p249 = scmp.eq.s32.totalorder %s38, 1
      %p250 = scmp.ne.s32.totalorder %s245, %s247
      %p251 = scmp.eq.s32.totalorder %s38, 0
      %p252 = por %p250, %p251
      %p253 = scmp.ne.s32.totalorder %s245, %s247
      %p254 = scmp.eq.s32.totalorder %s43, 1
      %p255 = por %p253, %p254
      %p256 = scmp.ne.s32.totalorder %s247, %s248
      %p257 = scmp.eq.s32.totalorder %s43, 0
      %p258 = por %p256, %p257
      %p259 = scmp.ne.s32.totalorder %s247, %s248
      %p260 = scmp.eq.s32.totalorder %s44, 1
      %p261 = por %p259, %p260
      %p263 = scmp.ne.s32.totalorder %s248, %s262
      %p264 = scmp.eq.s32.totalorder %s44, 0
      %p265 = por %p263, %p264
      %s267 = sadd.s32 %s266, 1
      %p270 = scmp.eq.s32.totalorder %s38, 1
      %p271 = scmp.ne.s32.totalorder %s266, %s268
      %p272 = scmp.eq.s32.totalorder %s38, 0
      %p273 = por %p271, %p272
      %p274 = scmp.ne.s32.totalorder %s266, %s268
      %p275 = scmp.eq.s32.totalorder %s43, 1
      %p276 = por %p274, %p275
      %p277 = scmp.ne.s32.totalorder %s268, %s269
      %p278 = scmp.eq.s32.totalorder %s43, 0
      %p279 = por %p277, %p278
      %p280 = scmp.ne.s32.totalorder %s268, %s269
      %p281 = scmp.eq.s32.totalorder %s44, 1
      %p282 = por %p280, %p281
      %p284 = scmp.ne.s32.totalorder %s269, %s283
      %p285 = scmp.eq.s32.totalorder %s44, 0
      %p286 = por %p284, %p285
      %s288 = sadd.s32 %s287, 1
      %p291 = scmp.eq.s32.totalorder %s38, 1
      %p292 = scmp.ne.s32.totalorder %s287, %s289
      %p293 = scmp.eq.s32.totalorder %s38, 0
      %p294 = por %p292, %p293
      %p295 = scmp.ne.s32.totalorder %s287, %s289
      %p296 = scmp.eq.s32.totalorder %s43, 1
      %p297 = por %p295, %p296
      %p298 = scmp.ne.s32.totalorder %s289, %s290
      %p299 = scmp.eq.s32.totalorder %s43, 0
      %p300 = por %p298, %p299
      %p301 = scmp.ne.s32.totalorder %s289, %s290
      %p302 = scmp.eq.s32.totalorder %s44, 1
      %p303 = por %p301, %p302
      %p305 = scmp.ne.s32.totalorder %s290, %s304
      %p306 = scmp.eq.s32.totalorder %s44, 0
      %p307 = por %p305, %p306
      %s309 = sadd.s32 %s308, 1
      %p312 = scmp.eq.s32.totalorder %s38, 1
      %p313 = scmp.ne.s32.totalorder %s308, %s310
      %p314 = scmp.eq.s32.totalorder %s38, 0
      %p315 = por %p313, %p314
      %p316 = scmp.ne.s32.totalorder %s308, %s310
      %p317 = scmp.eq.s32.totalorder %s43, 1
      %p318 = por %p316, %p317
      %p319 = scmp.ne.s32.totalorder %s310, %s311
      %p320 = scmp.eq.s32.totalorder %s43, 0
      %p321 = por %p319, %p320
      %p322 = scmp.ne.s32.totalorder %s310, %s311
      %p323 = scmp.eq.s32.totalorder %s44, 1
      %p324 = por %p322, %p323
      %p326 = scmp.ne.s32.totalorder %s311, %s325
      %p327 = scmp.eq.s32.totalorder %s44, 0
      %p328 = por %p326, %p327
      %s330 = sadd.s32 %s329, 1
      %p333 = scmp.eq.s32.totalorder %s38, 1
      %p334 = scmp.ne.s32.totalorder %s329, %s331
      %p335 = scmp.eq.s32.totalorder %s38, 0
      %p336 = por %p334, %p335
      %p337 = scmp.ne.s32.totalorder %s329, %s331
      %p338 = scmp.eq.s32.totalorder %s43, 1
      %p339 = por %p337, %p338
      %p340 = scmp.ne.s32.totalorder %s331, %s332
      %p341 = scmp.eq.s32.totalorder %s43, 0
      %p342 = por %p340, %p341
      %p343 = scmp.ne.s32.totalorder %s331, %s332
      %p344 = scmp.eq.s32.totalorder %s44, 1
      %p345 = por %p343, %p344
      %p347 = scmp.ne.s32.totalorder %s332, %s346
      %p348 = scmp.eq.s32.totalorder %s44, 0
      %p349 = por %p347, %p348
      %s351 = sadd.s32 %s350, 1
      %p354 = scmp.eq.s32.totalorder %s38, 1
      %p355 = scmp.ne.s32.totalorder %s350, %s352
      %p356 = scmp.eq.s32.totalorder %s38, 0
      %p357 = por %p355, %p356
      %p358 = scmp.ne.s32.totalorder %s350, %s352
      %p359 = scmp.eq.s32.totalorder %s43, 1
      %p360 = por %p358, %p359
      %p361 = scmp.ne.s32.totalorder %s352, %s353
      %p362 = scmp.eq.s32.totalorder %s43, 0
      %p363 = por %p361, %p362
      %p364 = scmp.ne.s32.totalorder %s352, %s353
      %p365 = scmp.eq.s32.totalorder %s44, 1
      %p366 = por %p364, %p365
      %p368 = scmp.ne.s32.totalorder %s353, %s367
      %p369 = scmp.eq.s32.totalorder %s44, 0
      %p370 = por %p368, %p369
      %s372 = sadd.s32 %s371, 1
      %p375 = scmp.eq.s32.totalorder %s38, 1
      %p376 = scmp.ne.s32.totalorder %s371, %s373
      %p377 = scmp.eq.s32.totalorder %s38, 0
      %p378 = por %p376, %p377
      %p379 = scmp.ne.s32.totalorder %s371, %s373
      %p380 = scmp.eq.s32.totalorder %s43, 1
      %p381 = por %p379, %p380
      %p382 = scmp.ne.s32.totalorder %s373, %s374
      %p383 = scmp.eq.s32.totalorder %s43, 0
      %p384 = por %p382, %p383
      %p385 = scmp.ne.s32.totalorder %s373, %s374
      %p386 = scmp.eq.s32.totalorder %s44, 1
      %p387 = por %p385, %p386
      %p389 = scmp.ne.s32.totalorder %s374, %s388
      %p390 = scmp.eq.s32.totalorder %s44, 0
      %p391 = por %p389, %p390
      %s393 = sadd.s32 %s392, 1
      %p396 = scmp.eq.s32.totalorder %s38, 1
      %p397 = scmp.ne.s32.totalorder %s392, %s394
      %p398 = scmp.eq.s32.totalorder %s38, 0
      %p399 = por %p397, %p398
      %p400 = scmp.ne.s32.totalorder %s392, %s394
      %p401 = scmp.eq.s32.totalorder %s43, 1
      %p402 = por %p400, %p401
      %p403 = scmp.ne.s32.totalorder %s394, %s395
      %p404 = scmp.eq.s32.totalorder %s43, 0
      %p405 = por %p403, %p404
      %p406 = scmp.ne.s32.totalorder %s394, %s395
      %p407 = scmp.eq.s32.totalorder %s44, 1
      %p408 = por %p406, %p407
      %p410 = scmp.ne.s32.totalorder %s395, %s409
      %p411 = scmp.eq.s32.totalorder %s44, 0
      %p412 = por %p410, %p411
      %s414 = sadd.s32 %s413, 1
      %p417 = scmp.eq.s32.totalorder %s38, 1
      %p418 = scmp.ne.s32.totalorder %s413, %s415
      %p419 = scmp.eq.s32.totalorder %s38, 0
      %p420 = por %p418, %p419
      %p421 = scmp.ne.s32.totalorder %s413, %s415
      %p422 = scmp.eq.s32.totalorder %s43, 1
      %p423 = por %p421, %p422
      %p424 = scmp.ne.s32.totalorder %s415, %s416
      %p425 = scmp.eq.s32.totalorder %s43, 0
      %p426 = por %p424, %p425
      %p427 = scmp.ne.s32.totalorder %s415, %s416
      %p428 = scmp.eq.s32.totalorder %s44, 1
      %p429 = por %p427, %p428
      %p431 = scmp.ne.s32.totalorder %s416, %s430
      %p432 = scmp.eq.s32.totalorder %s44, 0
      %p433 = por %p431, %p432
      %s435 = sadd.s32 %s434, 1
      %p438 = scmp.eq.s32.totalorder %s38, 1
      %p439 = scmp.ne.s32.totalorder %s434, %s436
      %p440 = scmp.eq.s32.totalorder %s38, 0
      %p441 = por %p439, %p440
      %p442 = scmp.ne.s32.totalorder %s434, %s436
      %p443 = scmp.eq.s32.totalorder %s43, 1
      %p444 = por %p442, %p443
      %p445 = scmp.ne.s32.totalorder %s436, %s437
      %p446 = scmp.eq.s32.totalorder %s43, 0
      %p447 = por %p445, %p446
      %p448 = scmp.ne.s32.totalorder %s436, %s437
      %p449 = scmp.eq.s32.totalorder %s44, 1
      %p450 = por %p448, %p449
      %p452 = scmp.ne.s32.totalorder %s437, %s451
      %p453 = scmp.eq.s32.totalorder %s44, 0
      %p454 = por %p452, %p453
      %s456 = sadd.s32 %s455, 1
      %p459 = scmp.eq.s32.totalorder %s38, 1
      %p460 = scmp.ne.s32.totalorder %s455, %s457
      %p461 = scmp.eq.s32.totalorder %s38, 0
      %p462 = por %p460, %p461
      %p463 = scmp.ne.s32.totalorder %s455, %s457
      %p464 = scmp.eq.s32.totalorder %s43, 1
      %p465 = por %p463, %p464
      %p466 = scmp.ne.s32.totalorder %s457, %s458
      %p467 = scmp.eq.s32.totalorder %s43, 0
      %p468 = por %p466, %p467
      %p469 = scmp.ne.s32.totalorder %s457, %s458
      %p470 = scmp.eq.s32.totalorder %s44, 1
      %p471 = por %p469, %p470
      %p473 = scmp.ne.s32.totalorder %s458, %s472
      %p474 = scmp.eq.s32.totalorder %s44, 0
      %p475 = por %p473, %p474
      %s476 = ssub.s32 %s38, %s45
      %p477 = scmp.eq.s32.totalorder %s476, 0
      %s479 = sadd.s32 %s478, 1
      %s480 = scalar_select %p477, %s478, %s479
      %p483 = pneg %p477
      %p484 = scmp.eq.s32.totalorder %s38, 1
      %p485 = por %p483, %p484
      %p486 = scmp.ne.s32.totalorder %s478, %s481
      %p487 = scmp.eq.s32.totalorder %s38, 0
      %p488 = por %p486, %p487
      %p489 = scmp.ne.s32.totalorder %s478, %s481
      %p490 = scmp.eq.s32.totalorder %s43, 1
      %p491 = por %p489, %p490
      %p492 = scmp.ne.s32.totalorder %s481, %s482
      %p493 = scmp.eq.s32.totalorder %s43, 0
      %p494 = por %p492, %p493
      %p495 = scmp.ne.s32.totalorder %s481, %s482
      %p496 = scmp.eq.s32.totalorder %s44, 1
      %p497 = por %p495, %p496
      %p499 = scmp.ne.s32.totalorder %s482, %s498
      %p500 = scmp.eq.s32.totalorder %s44, 0
      %p501 = por %p499, %p500
      %p502 = scmp.le.s32.totalorder 1, %s38
      %p503 = scmp.lt.s32.totalorder %s38, 3
      %p504 = pnand %p502, %p503
      %p505 = pneg %p504
      // Predicated region
      $region9: #{tpu_custom_call.1} parent=5 // pred_check
        _
      $region10: #{tpu_custom_call.1} parent=5 // pred_check_branch
        %507 = sbr.rel (%p504) target = $region12
      $region11: #{tpu_custom_call.1} parent=5 // pred_region
        %s508 = ssub.s32 %s38, 1
        // Predicated region
        $region13: #{tpu_custom_call.1} parent=11 // pred_check
          %p509 = pneg %p111
        $region14: #{tpu_custom_call.1} parent=11 // pred_check_branch
          %511 = sbr.rel (%p509) target = $region16
        $region15: #{tpu_custom_call.1} parent=11 // pred_region
          _
        $region16: #{tpu_custom_call.1} parent=11 // pred_fallthru
          _
        // Predicated region
        $region17: #{tpu_custom_call.1} parent=11 // pred_check
          %p512 = pneg %p132
        $region18: #{tpu_custom_call.1} parent=11 // pred_check_branch
          %514 = sbr.rel (%p512) target = $region20
        $region19: #{tpu_custom_call.1} parent=11 // pred_region
          _
        $region20: #{tpu_custom_call.1} parent=11 // pred_fallthru
          _
        // Predicated region
        $region21: #{tpu_custom_call.1} parent=11 // pred_check
          %p515 = pneg %p153
        $region22: #{tpu_custom_call.1} parent=11 // pred_check_branch
          %517 = sbr.rel (%p515) target = $region24
        $region23: #{tpu_custom_call.1} parent=11 // pred_region
          _
        $region24: #{tpu_custom_call.1} parent=11 // pred_fallthru
          _
        // Predicated region
        $region25: #{tpu_custom_call.1} parent=11 // pred_check
          %p518 = pneg %p174
        $region26: #{tpu_custom_call.1} parent=11 // pred_check_branch
          %520 = sbr.rel (%p518) target = $region28
        $region27: #{tpu_custom_call.1} parent=11 // pred_region
          %522 = vsyncadd [#allocation8], 0
          %s524 = sshll.u32 %s5, 4
          %s525 = int_to_ptr.hbm [resolvable:$true] %s524
          %s526 = sshll.u32 [#allocation7], 4
          %s527 = int_to_ptr.vmem [resolvable:$true] %s526
          %529 = dma.hbm_to_vmem [thread:$0]  %s525, 16, %s527, [#allocation8]
        $region28: #{tpu_custom_call.1} parent=11 // pred_fallthru
          _
        // Predicated region
        $region29: #{tpu_custom_call.1} parent=11 // pred_check
          %p530 = pneg %p195
        $region30: #{tpu_custom_call.1} parent=11 // pred_check_branch
          %532 = sbr.rel (%p530) target = $region32
        $region31: #{tpu_custom_call.1} parent=11 // pred_region
          _
        $region32: #{tpu_custom_call.1} parent=11 // pred_fallthru
          _
        // Predicated region
        $region33: #{tpu_custom_call.1} parent=11 // pred_check
          %p533 = pneg %p216
        $region34: #{tpu_custom_call.1} parent=11 // pred_check_branch
          %535 = sbr.rel (%p533) target = $region36
        $region35: #{tpu_custom_call.1} parent=11 // pred_region
          %537 = vsyncadd [#allocation8], 0
          %s539 = sshll.u32 %s7, 4
          %s540 = int_to_ptr.hbm [resolvable:$true] %s539
          %s541 = sshll.u32 [#allocation9], 4
          %s542 = int_to_ptr.vmem [resolvable:$true] %s541
          %544 = dma.hbm_to_vmem [thread:$0]  %s540, 16, %s542, [#allocation8]
        $region36: #{tpu_custom_call.1} parent=11 // pred_fallthru
          _
        // Predicated region
        $region37: #{tpu_custom_call.1} parent=11 // pred_check
          %p545 = pneg %p237
        $region38: #{tpu_custom_call.1} parent=11 // pred_check_branch
          %547 = sbr.rel (%p545) target = $region40
        $region39: #{tpu_custom_call.1} parent=11 // pred_region
          _
        $region40: #{tpu_custom_call.1} parent=11 // pred_fallthru
          _
        // Predicated region
        $region41: #{tpu_custom_call.1} parent=11 // pred_check
          %p548 = pneg %p258
        $region42: #{tpu_custom_call.1} parent=11 // pred_check_branch
          %550 = sbr.rel (%p548) target = $region44
        $region43: #{tpu_custom_call.1} parent=11 // pred_region
          %552 = vsyncadd [#allocation11], 0
          %s554 = sshll.u32 %s9, 4
          %s555 = int_to_ptr.hbm [resolvable:$true] %s554
          %s556 = sshll.u32 [#allocation10], 4
          %s557 = int_to_ptr.vmem [resolvable:$true] %s556
          %559 = dma.hbm_to_vmem [thread:$0]  %s555, 16, %s557, [#allocation11]
        $region44: #{tpu_custom_call.1} parent=11 // pred_fallthru
          _
        // Predicated region
        $region45: #{tpu_custom_call.1} parent=11 // pred_check
          %p560 = pneg %p279
        $region46: #{tpu_custom_call.1} parent=11 // pred_check_branch
          %562 = sbr.rel (%p560) target = $region48
        $region47: #{tpu_custom_call.1} parent=11 // pred_region
          %564 = vsyncadd [#allocation11], 0
          %s566 = sshll.u32 %s10, 4
          %s567 = int_to_ptr.hbm [resolvable:$true] %s566
          %s568 = sshll.u32 [#allocation12], 4
          %s569 = int_to_ptr.vmem [resolvable:$true] %s568
          %571 = dma.hbm_to_vmem [thread:$0]  %s567, 16, %s569, [#allocation11]
        $region48: #{tpu_custom_call.1} parent=11 // pred_fallthru
          _
        // Predicated region
        $region49: #{tpu_custom_call.1} parent=11 // pred_check
          %p572 = pneg %p300
        $region50: #{tpu_custom_call.1} parent=11 // pred_check_branch
          %574 = sbr.rel (%p572) target = $region52
        $region51: #{tpu_custom_call.1} parent=11 // pred_region
          %576 = vsyncadd [#allocation14], 0
          %s578 = sshll.u32 %s11, 4
          %s579 = int_to_ptr.hbm [resolvable:$true] %s578
          %s580 = sshll.u32 [#allocation13], 4
          %s581 = int_to_ptr.vmem [resolvable:$true] %s580
          %583 = dma.hbm_to_vmem [thread:$0]  %s579, 16, %s581, [#allocation14]
        $region52: #{tpu_custom_call.1} parent=11 // pred_fallthru
          _
        // Predicated region
        $region53: #{tpu_custom_call.1} parent=11 // pred_check
          %p584 = pneg %p321
        $region54: #{tpu_custom_call.1} parent=11 // pred_check_branch
          %586 = sbr.rel (%p584) target = $region56
        $region55: #{tpu_custom_call.1} parent=11 // pred_region
          %588 = vsyncadd [#allocation14], 0
          %s589 = sshll.u32 %s12, 4
          %s590 = int_to_ptr.hbm [resolvable:$true] %s589
          %s591 = sshll.u32 [#allocation15], 4
          %s592 = int_to_ptr.vmem [resolvable:$true] %s591
          %597 = dma.hbm_to_vmem [thread:$0]  %s590, 256, %s592, [#allocation14], 64, 64, 4
        $region56: #{tpu_custom_call.1} parent=11 // pred_fallthru
          _
        // Predicated region
        $region57: #{tpu_custom_call.1} parent=11 // pred_check
          %p598 = pneg %p342
        $region58: #{tpu_custom_call.1} parent=11 // pred_check_branch
          %600 = sbr.rel (%p598) target = $region60
        $region59: #{tpu_custom_call.1} parent=11 // pred_region
          %602 = vsyncadd [#allocation17], 0
          %s604 = sshll.u32 %s13, 4
          %s605 = int_to_ptr.hbm [resolvable:$true] %s604
          %s606 = sshll.u32 [#allocation16], 4
          %s607 = int_to_ptr.vmem [resolvable:$true] %s606
          %609 = dma.hbm_to_vmem [thread:$0]  %s605, 16, %s607, [#allocation17]
        $region60: #{tpu_custom_call.1} parent=11 // pred_fallthru
          _
        // Predicated region
        $region61: #{tpu_custom_call.1} parent=11 // pred_check
          %p610 = pneg %p363
        $region62: #{tpu_custom_call.1} parent=11 // pred_check_branch
          %612 = sbr.rel (%p610) target = $region64
        $region63: #{tpu_custom_call.1} parent=11 // pred_region
          _
        $region64: #{tpu_custom_call.1} parent=11 // pred_fallthru
          _
        // Predicated region
        $region65: #{tpu_custom_call.1} parent=11 // pred_check
          %p613 = pneg %p384
        $region66: #{tpu_custom_call.1} parent=11 // pred_check_branch
          %615 = sbr.rel (%p613) target = $region68
        $region67: #{tpu_custom_call.1} parent=11 // pred_region
          %617 = vsyncadd [#allocation17], 0
          %s619 = sshll.u32 %s15, 4
          %s620 = int_to_ptr.hbm [resolvable:$true] %s619
          %s621 = sshll.u32 [#allocation18], 4
          %s622 = int_to_ptr.vmem [resolvable:$true] %s621
          %624 = dma.hbm_to_vmem [thread:$0]  %s620, 16, %s622, [#allocation17]
        $region68: #{tpu_custom_call.1} parent=11 // pred_fallthru
          _
        // Predicated region
        $region69: #{tpu_custom_call.1} parent=11 // pred_check
          %p625 = pneg %p405
        $region70: #{tpu_custom_call.1} parent=11 // pred_check_branch
          %627 = sbr.rel (%p625) target = $region72
        $region71: #{tpu_custom_call.1} parent=11 // pred_region
          %629 = vsyncadd [#allocation20], 0
          %s631 = sshll.u32 %s16, 4
          %s632 = int_to_ptr.hbm [resolvable:$true] %s631
          %s633 = sshll.u32 [#allocation19], 4
          %s634 = int_to_ptr.vmem [resolvable:$true] %s633
          %636 = dma.hbm_to_vmem [thread:$0]  %s632, 16, %s634, [#allocation20]
        $region72: #{tpu_custom_call.1} parent=11 // pred_fallthru
          _
        // Predicated region
        $region73: #{tpu_custom_call.1} parent=11 // pred_check
          %p637 = pneg %p426
        $region74: #{tpu_custom_call.1} parent=11 // pred_check_branch
          %639 = sbr.rel (%p637) target = $region76
        $region75: #{tpu_custom_call.1} parent=11 // pred_region
          %641 = vsyncadd [#allocation20], 0
          %s643 = sshll.u32 %s17, 4
          %s644 = int_to_ptr.hbm [resolvable:$true] %s643
          %s645 = sshll.u32 [#allocation21], 4
          %s646 = int_to_ptr.vmem [resolvable:$true] %s645
          %648 = dma.hbm_to_vmem [thread:$0]  %s644, 16, %s646, [#allocation20]
        $region76: #{tpu_custom_call.1} parent=11 // pred_fallthru
          _
        // Predicated region
        $region77: #{tpu_custom_call.1} parent=11 // pred_check
          %p649 = pneg %p447
        $region78: #{tpu_custom_call.1} parent=11 // pred_check_branch
          %651 = sbr.rel (%p649) target = $region80
        $region79: #{tpu_custom_call.1} parent=11 // pred_region
          _
        $region80: #{tpu_custom_call.1} parent=11 // pred_fallthru
          _
        // Predicated region
        $region81: #{tpu_custom_call.1} parent=11 // pred_check
          %p652 = pneg %p468
        $region82: #{tpu_custom_call.1} parent=11 // pred_check_branch
          %654 = sbr.rel (%p652) target = $region84
        $region83: #{tpu_custom_call.1} parent=11 // pred_region
          %656 = vsyncadd [#allocation23], 0
          %s658 = sshll.u32 %s19, 4
          %s659 = int_to_ptr.hbm [resolvable:$true] %s658
          %s660 = sshll.u32 [#allocation22], 4
          %s661 = int_to_ptr.vmem [resolvable:$true] %s660
          %663 = dma.hbm_to_vmem [thread:$0]  %s659, 16, %s661, [#allocation23]
        $region84: #{tpu_custom_call.1} parent=11 // pred_fallthru
          _
      $region12: #{tpu_custom_call.1} parent=5 // pred_fallthru
        _
      %p664 = scmp.lt.s32.totalorder %s38, 2
      // Predicated region
      $region85: #{tpu_custom_call.1} parent=5 // pred_check
        %p665 = pneg %p664
      $region86: #{tpu_custom_call.1} parent=5 // pred_check_branch
        %667 = sbr.rel (%p665) target = $region88
      $region87: #{tpu_custom_call.1} parent=5 // pred_region
        // Predicated region
        $region89: #{tpu_custom_call.1} parent=87 // pred_check
          %p668 = pneg %p58
        $region90: #{tpu_custom_call.1} parent=87 // pred_check_branch
          %670 = sbr.rel (%p668) target = $region92
        $region91: #{tpu_custom_call.1} parent=87 // pred_region
          %p671 = scmp.lt.s32.totalorder %s38, 1
          %s672 = scalar_select %p671, %s38, 1
          %s673 = smul.addr %s672, 8
          %s674 = scalar_lea.vmem %s0, %s673
        $region92: #{tpu_custom_call.1} parent=87 // pred_fallthru
          _
        // Predicated region
        $region93: #{tpu_custom_call.1} parent=87 // pred_check
          %p675 = pneg %p84
        $region94: #{tpu_custom_call.1} parent=87 // pred_check_branch
          %677 = sbr.rel (%p675) target = $region96
        $region95: #{tpu_custom_call.1} parent=87 // pred_region
          %s678 = sand.u32 %s74, 1
          %s679 = scalar_lea.sflag [#allocation5], %s678
          %s680 = sand.u32 %s74, 1
          %s681 = scalar_lea.vmem [#allocation4], %s680
          %683 = vsyncadd %s679, 0
          %s684 = scalar_lea.hbm %s1, %s38
          %s686 = sshll.u32 %s684, 4
          %s687 = int_to_ptr.hbm [resolvable:$true] %s686
          %s688 = sshll.u32 %s681, 4
          %s689 = int_to_ptr.vmem [resolvable:$true] %s688
          %691 = dma.hbm_to_vmem [thread:$0]  %s687, 16, %s689, %s679
        $region96: #{tpu_custom_call.1} parent=87 // pred_fallthru
          _
      $region88: #{tpu_custom_call.1} parent=5 // pred_fallthru
        _
      %p692 = scmp.le.s32.totalorder 1, %s38
      %p693 = scmp.lt.s32.totalorder %s38, 3
      %p694 = pnand %p692, %p693
      %p695 = pneg %p694
      // Predicated region
      $region97: #{tpu_custom_call.1} parent=5 // pred_check
        _
      $region98: #{tpu_custom_call.1} parent=5 // pred_check_branch
        %697 = sbr.rel (%p694) target = $region100
      $region99: #{tpu_custom_call.1} parent=5 // pred_region
        %s698 = ssub.s32 %s38, 1
        %s699 = sand.u32 %s77, 1
        %s700 = scalar_lea.sflag [#allocation5], %s699
        %s701 = sand.u32 %s77, 1
        %s702 = scalar_lea.vmem [#allocation4], %s701
        // Predicated region
        $region101: #{tpu_custom_call.1} parent=99 // pred_check
          %p703 = pneg %p90
        $region102: #{tpu_custom_call.1} parent=99 // pred_check_branch
          %705 = sbr.rel (%p703) target = $region104
        $region103: #{tpu_custom_call.1} parent=99 // pred_region
          %707 = dma.done %s700, 16
        $region104: #{tpu_custom_call.1} parent=99 // pred_fallthru
          _
        // Predicated region
        $region105: #{tpu_custom_call.1} parent=99 // pred_check
          %p708 = pneg %p174
        $region106: #{tpu_custom_call.1} parent=99 // pred_check_branch
          %710 = sbr.rel (%p708) target = $region108
        $region107: #{tpu_custom_call.1} parent=99 // pred_region
          %712 = dma.done [#allocation8], 16
        $region108: #{tpu_custom_call.1} parent=99 // pred_fallthru
          _
        // Predicated region
        $region109: #{tpu_custom_call.1} parent=99 // pred_check
          %p713 = pneg %p216
        $region110: #{tpu_custom_call.1} parent=99 // pred_check_branch
          %715 = sbr.rel (%p713) target = $region112
        $region111: #{tpu_custom_call.1} parent=99 // pred_region
          %717 = dma.done [#allocation8], 16
        $region112: #{tpu_custom_call.1} parent=99 // pred_fallthru
          _
        // Predicated region
        $region113: #{tpu_custom_call.1} parent=99 // pred_check
          %p718 = pneg %p258
        $region114: #{tpu_custom_call.1} parent=99 // pred_check_branch
          %720 = sbr.rel (%p718) target = $region116
        $region115: #{tpu_custom_call.1} parent=99 // pred_region
          %722 = dma.done [#allocation11], 16
        $region116: #{tpu_custom_call.1} parent=99 // pred_fallthru
          _
        // Predicated region
        $region117: #{tpu_custom_call.1} parent=99 // pred_check
          %p723 = pneg %p279
        $region118: #{tpu_custom_call.1} parent=99 // pred_check_branch
          %725 = sbr.rel (%p723) target = $region120
        $region119: #{tpu_custom_call.1} parent=99 // pred_region
          %727 = dma.done [#allocation11], 16
        $region120: #{tpu_custom_call.1} parent=99 // pred_fallthru
          _
        // Predicated region
        $region121: #{tpu_custom_call.1} parent=99 // pred_check
          %p728 = pneg %p300
        $region122: #{tpu_custom_call.1} parent=99 // pred_check_branch
          %730 = sbr.rel (%p728) target = $region124
        $region123: #{tpu_custom_call.1} parent=99 // pred_region
          %732 = dma.done [#allocation14], 16
        $region124: #{tpu_custom_call.1} parent=99 // pred_fallthru
          _
        // Predicated region
        $region125: #{tpu_custom_call.1} parent=99 // pred_check
          %p733 = pneg %p321
        $region126: #{tpu_custom_call.1} parent=99 // pred_check_branch
          %735 = sbr.rel (%p733) target = $region128
        $region127: #{tpu_custom_call.1} parent=99 // pred_region
          %737 = dma.done [#allocation14], 256
        $region128: #{tpu_custom_call.1} parent=99 // pred_fallthru
          _
        // Predicated region
        $region129: #{tpu_custom_call.1} parent=99 // pred_check
          %p738 = pneg %p342
        $region130: #{tpu_custom_call.1} parent=99 // pred_check_branch
          %740 = sbr.rel (%p738) target = $region132
        $region131: #{tpu_custom_call.1} parent=99 // pred_region
          %742 = dma.done [#allocation17], 16
        $region132: #{tpu_custom_call.1} parent=99 // pred_fallthru
          _
        // Predicated region
        $region133: #{tpu_custom_call.1} parent=99 // pred_check
          %p743 = pneg %p384
        $region134: #{tpu_custom_call.1} parent=99 // pred_check_branch
          %745 = sbr.rel (%p743) target = $region136
        $region135: #{tpu_custom_call.1} parent=99 // pred_region
          %747 = dma.done [#allocation17], 16
        $region136: #{tpu_custom_call.1} parent=99 // pred_fallthru
          _
        // Predicated region
        $region137: #{tpu_custom_call.1} parent=99 // pred_check
          %p748 = pneg %p405
        $region138: #{tpu_custom_call.1} parent=99 // pred_check_branch
          %750 = sbr.rel (%p748) target = $region140
        $region139: #{tpu_custom_call.1} parent=99 // pred_region
          %752 = dma.done [#allocation20], 16
        $region140: #{tpu_custom_call.1} parent=99 // pred_fallthru
          _
        // Predicated region
        $region141: #{tpu_custom_call.1} parent=99 // pred_check
          %p753 = pneg %p426
        $region142: #{tpu_custom_call.1} parent=99 // pred_check_branch
          %755 = sbr.rel (%p753) target = $region144
        $region143: #{tpu_custom_call.1} parent=99 // pred_region
          %757 = dma.done [#allocation20], 16
        $region144: #{tpu_custom_call.1} parent=99 // pred_fallthru
          _
        // Predicated region
        $region145: #{tpu_custom_call.1} parent=99 // pred_check
          %p758 = pneg %p468
        $region146: #{tpu_custom_call.1} parent=99 // pred_check_branch
          %760 = sbr.rel (%p758) target = $region148
        $region147: #{tpu_custom_call.1} parent=99 // pred_region
          %762 = dma.done [#allocation23], 16
        $region148: #{tpu_custom_call.1} parent=99 // pred_fallthru
          _
        %p763 = scmp.lt.s32.totalorder %s43, 1
        %s764 = scalar_select %p763, %s43, 1
        %s765 = smul.addr %s764, 8
        %s766 = scalar_lea.vmem %s0, %s765
        %p767 = pneg %p64
        %p768 = pneg %p61
        %s769 = sand.u32 %s77, 1
        %s770 = scalar_lea.sflag [#allocation5], %s769
        %s771 = sand.u32 %s77, 1
        %s772 = scalar_lea.vmem [#allocation4], %s771
        %p773 = pneg %p90
        %p774 = pneg %p87
        %p775 = pneg %p111
        %p776 = pneg %p108
        %p777 = pneg %p132
        %p778 = pneg %p129
        %p779 = pneg %p153
        %p780 = pneg %p150
        %p781 = pneg %p174
        %p782 = pneg %p171
        %p783 = pneg %p195
        %p784 = pneg %p192
        %p785 = pneg %p216
        %p786 = pneg %p213
        %p787 = pneg %p237
        %p788 = pneg %p234
        %p789 = pneg %p258
        %p790 = pneg %p255
        %p791 = pneg %p279
        %p792 = pneg %p276
        %p793 = pneg %p300
        %p794 = pneg %p297
        %p795 = pneg %p321
        %p796 = pneg %p318
        %p797 = pneg %p342
        %p798 = pneg %p339
        %p799 = pneg %p363
        %p800 = pneg %p360
        %p801 = pneg %p384
        %p802 = pneg %p381
        %p803 = pneg %p405
        %p804 = pneg %p402
        %p805 = pneg %p426
        %p806 = pneg %p423
        %p807 = pneg %p447
        %p808 = pneg %p444
        %p809 = pneg %p468
        %p810 = pneg %p465
        %p811 = pneg %p494
        %p812 = pneg %p491
        %s813 = sand.u32 %s481, 1
        %s814 = scalar_lea.sflag [#allocation6], %s813
        %s815 = sand.u32 %s481, 1
        %s816 = smul.addr %s815, 8
        %s817 = scalar_lea.vmem [#allocation24], %s816
        %p818 = scmp.lt.s32.totalorder %s43, 1
        %s819 = scalar_select %p818, %s43, 1
        %s820 = smul.addr %s819, 8
        %s821 = scalar_lea.vmem %s0, %s820
        %v823 = vld [vmem:[%s821] sm:$0xff]
        %vm824 = vcmask 261120
        %825 = vst.msk [vmem:[#allocation2] sm:$0xff] %vm824, %v823
        %v826 = vld [vmem:[%s702] sm:$0x1]
        loop: start=0, step=1, limit=2
        $region149: #{tpu_custom_call.1} parent=99 // loop_pre_header
          _
        $region150: #{tpu_custom_call.1} parent=99 // loop_header
          %s828 = sphi 0, %s832
          %p829 = scmp.ge.s32.totalorder %s828, 2
        $region151: #{tpu_custom_call.1} parent=99 // loop_header_branch
          %831 = sbr.rel (%p829) target = $region155
        $region152: #{tpu_custom_call.1} parent=99 // loop_body
          %v833 = vld [vmem:[#allocation2] sm:$0xff]
          %v834 = vpack.c.bf16 %v833, %v833
          %v835 = vld [vmem:[%s2] sm:$0xf]
          %v836 = vld [vmem:[%s2 + $0x4] sm:$0xf]
          %v837 = vld [vmem:[%s2 + $0x8] sm:$0xf]
          %v838 = vld [vmem:[%s2 + $0xc] sm:$0xf]
          %v839 = vld [vmem:[%s3] sm:$0x1]
          %v841 = vperm.slane %v839, 0
          %v847 = vunpack.c.l.b16 %v835
          %v848 = vunpack.c.l.b16 %v836
          %v849 = vunpack.c.l.b16 %v837
          %v850 = vunpack.c.l.b16 %v838
          %v851 = vpack.c.b16 %v848, %v847
          %v852 = vpack.c.b16 %v850, %v849
          %v856 = vsel %vm824, %v834, 0
          %858 = vmatpush.bf16.msra.mxu0 0
          %859 = vmatpush.bf16.msra.mxu0 0
          %860 = vmatpush.bf16.msra.mxu0 0
          %861 = vmatpush.bf16.msra.mxu0 0
          %862 = vmatpush.bf16.msra.mxu0 0
          %863 = vmatpush.bf16.msra.mxu0 0
          %864 = vmatpush.bf16.msra.mxu0 %v852
          %865 = vmatpush.bf16.msra.mxu0 %v851
          %866 = vmatmul.bf16.gmra.mxu0 %v856
          %v867 = vpop.f32.mrf.mxu0
          %v868 = vadd.f32 %v841, %v867
          %v869 = vpop.f32.mrf.mxu0
          %870 = vdwg.mxu0
          %v871 = vpack.c.bf16 %v868, %v868
          %v872 = vld [vmem:[%s4] sm:$0xf]
          %v873 = vld [vmem:[%s4 + $0x4] sm:$0xf]
          %v874 = vld [vmem:[%s4 + $0x8] sm:$0xf]
          %v875 = vld [vmem:[%s4 + $0xc] sm:$0xf]
          %v876 = vld [vmem:[#allocation7] sm:$0x1]
          %v878 = vperm.slane %v876, 0
          %v884 = vunpack.c.l.b16 %v872
          %v885 = vunpack.c.l.b16 %v873
          %v886 = vunpack.c.l.b16 %v874
          %v887 = vunpack.c.l.b16 %v875
          %v888 = vpack.c.b16 %v885, %v884
          %v889 = vpack.c.b16 %v887, %v886
          %892 = vmatpush.bf16.msra.mxu0 0
          %893 = vmatpush.bf16.msra.mxu0 0
          %894 = vmatpush.bf16.msra.mxu0 0
          %895 = vmatpush.bf16.msra.mxu0 0
          %896 = vmatpush.bf16.msra.mxu0 0
          %897 = vmatpush.bf16.msra.mxu0 0
          %898 = vmatpush.bf16.msra.mxu0 %v889
          %899 = vmatpush.bf16.msra.mxu0 %v888
          %900 = vmatmul.bf16.gmra.mxu0 %v856
          %v901 = vpop.f32.mrf.mxu0
          %v902 = vadd.f32 %v878, %v901
          %v903 = vpop.f32.mrf.mxu0
          %904 = vdwg.mxu0
          %v905 = vpack.c.bf16 %v902, %v902
          %v906 = vld [vmem:[%s6] sm:$0xf]
          %v907 = vld [vmem:[%s6 + $0x4] sm:$0xf]
          %v908 = vld [vmem:[%s6 + $0x8] sm:$0xf]
          %v909 = vld [vmem:[%s6 + $0xc] sm:$0xf]
          %v910 = vld [vmem:[#allocation9] sm:$0x1]
          %v912 = vperm.slane %v910, 0
          %v918 = vunpack.c.l.b16 %v906
          %v919 = vunpack.c.l.b16 %v907
          %v920 = vunpack.c.l.b16 %v908
          %v921 = vunpack.c.l.b16 %v909
          %v922 = vpack.c.b16 %v919, %v918
          %v923 = vpack.c.b16 %v921, %v920
          %926 = vmatpush.bf16.msra.mxu0 0
          %927 = vmatpush.bf16.msra.mxu0 0
          %928 = vmatpush.bf16.msra.mxu0 0
          %929 = vmatpush.bf16.msra.mxu0 0
          %930 = vmatpush.bf16.msra.mxu0 0
          %931 = vmatpush.bf16.msra.mxu0 0
          %932 = vmatpush.bf16.msra.mxu0 %v923
          %933 = vmatpush.bf16.msra.mxu0 %v922
          %934 = vmatmul.bf16.gmra.mxu0 %v856
          %v935 = vpop.f32.mrf.mxu0
          %v936 = vadd.f32 %v912, %v935
          %v937 = vpop.f32.mrf.mxu0
          %938 = vdwg.mxu0
          %v939 = vpack.c.bf16 %v936, %v936
          %941 = vrot.lane.b32.xlu0 %v871, 120
          %v942 = vpop.permute.xlu0 %941
          %943 = vrot.lane.b32.xlu0 %v871, 112
          %v944 = vpop.permute.xlu0 %943
          %945 = vrot.lane.b32.xlu0 %v871, 104
          %v946 = vpop.permute.xlu0 %945
          %948 = vrot.lane.b32.xlu0 %v905, 120
          %v949 = vpop.permute.xlu0 %948
          %950 = vrot.lane.b32.xlu0 %v905, 112
          %v951 = vpop.permute.xlu0 %950
          %952 = vrot.lane.b32.xlu0 %v905, 104
          %v953 = vpop.permute.xlu0 %952
          %955 = vrot.lane.b32.xlu0 %v939, 120
          %v956 = vpop.permute.xlu0 %955
          %957 = vrot.lane.b32.xlu0 %v939, 112
          %v958 = vpop.permute.xlu0 %957
          %959 = vrot.lane.b32.xlu0 %v939, 104
          %v960 = vpop.permute.xlu0 %959
          %vm961 = vcmask 64512
          %v963 = vsel %vm961, %v871, 0
          %v966 = vsel %vm961, %v905, 0
          %968 = vmatpush.bf16.xpose.msra.mxu0 0
          %969 = vmatpush.bf16.xpose.msra.mxu0 0
          %970 = vmatpush.bf16.xpose.msra.mxu0 0
          %971 = vmatpush.bf16.xpose.msra.mxu0 0
          %972 = vmatpush.bf16.xpose.msra.mxu0 0
          %973 = vmatpush.bf16.xpose.msra.mxu0 0
          %974 = vmatpush.bf16.xpose.msra.mxu0 0
          %975 = vmatpush.bf16.xpose.msra.mxu0 %v966
          %976 = vmatmul.bf16.gmra.mxu0 %v963
          %v977 = vpop.f32.mrf.mxu0
          %v978 = vadd.f32 0.0, %v977
          %v979 = vpop.f32.mrf.mxu0
          %980 = vdwg.mxu0
          %v982 = vsel %vm961, %v942, 0
          %v985 = vsel %vm961, %v949, 0
          %987 = vmatpush.bf16.xpose.msra.mxu0 0
          %988 = vmatpush.bf16.xpose.msra.mxu0 0
          %989 = vmatpush.bf16.xpose.msra.mxu0 0
          %990 = vmatpush.bf16.xpose.msra.mxu0 0
          %991 = vmatpush.bf16.xpose.msra.mxu0 0
          %992 = vmatpush.bf16.xpose.msra.mxu0 0
          %993 = vmatpush.bf16.xpose.msra.mxu0 0
          %994 = vmatpush.bf16.xpose.msra.mxu0 %v985
          %995 = vmatmul.bf16.gmra.mxu0 %v982
          %v996 = vpop.f32.mrf.mxu0
          %v997 = vadd.f32 0.0, %v996
          %v998 = vpop.f32.mrf.mxu0
          %999 = vdwg.mxu0
          %v1001 = vsel %vm961, %v944, 0
          %v1004 = vsel %vm961, %v951, 0
          %1006 = vmatpush.bf16.xpose.msra.mxu0 0
          %1007 = vmatpush.bf16.xpose.msra.mxu0 0
          %1008 = vmatpush.bf16.xpose.msra.mxu0 0
          %1009 = vmatpush.bf16.xpose.msra.mxu0 0
          %1010 = vmatpush.bf16.xpose.msra.mxu0 0
          %1011 = vmatpush.bf16.xpose.msra.mxu0 0
          %1012 = vmatpush.bf16.xpose.msra.mxu0 0
          %1013 = vmatpush.bf16.xpose.msra.mxu0 %v1004
          %1014 = vmatmul.bf16.gmra.mxu0 %v1001
          %v1015 = vpop.f32.mrf.mxu0
          %v1016 = vadd.f32 0.0, %v1015
          %v1017 = vpop.f32.mrf.mxu0
          %1018 = vdwg.mxu0
          %v1020 = vsel %vm961, %v946, 0
          %v1023 = vsel %vm961, %v953, 0
          %1025 = vmatpush.bf16.xpose.msra.mxu0 0
          %1026 = vmatpush.bf16.xpose.msra.mxu0 0
          %1027 = vmatpush.bf16.xpose.msra.mxu0 0
          %1028 = vmatpush.bf16.xpose.msra.mxu0 0
          %1029 = vmatpush.bf16.xpose.msra.mxu0 0
          %1030 = vmatpush.bf16.xpose.msra.mxu0 0
          %1031 = vmatpush.bf16.xpose.msra.mxu0 0
          %1032 = vmatpush.bf16.xpose.msra.mxu0 %v1023
          %1033 = vmatmul.bf16.gmra.mxu0 %v1020
          %v1034 = vpop.f32.mrf.mxu0
          %v1035 = vadd.f32 0.0, %v1034
          %v1036 = vpop.f32.mrf.mxu0
          %1037 = vdwg.mxu0
          %v1038 = vmul.f32 %v978, 0.35355338
          %v1039 = vmul.f32 %v997, 0.35355338
          %v1040 = vmul.f32 %v1016, 0.35355338
          %v1041 = vmul.f32 %v1035, 0.35355338
          %v1043 = vperm.slane %v826, 0
          %v1045 = vadd.f32 %v1038, %v1043
          %v1046 = vadd.f32 %v1039, %v1043
          %v1047 = vadd.f32 %v1040, %v1043
          %v1048 = vadd.f32 %v1041, %v1043
          %v1049 = vsel %vm961, %v1045, -inf
          %1050 = vmax.xlane.f32.xlu0 %v1049
          %v1051 = vpop.xlane.xlu0 %1050
          %v1052 = vsel %vm961, %v1046, -inf
          %1053 = vmax.xlane.f32.xlu0 %v1052
          %v1054 = vpop.xlane.xlu0 %1053
          %v1055 = vsel %vm961, %v1047, -inf
          %1056 = vmax.xlane.f32.xlu0 %v1055
          %v1057 = vpop.xlane.xlu0 %1056
          %v1058 = vsel %vm961, %v1048, -inf
          %1059 = vmax.xlane.f32.xlu0 %v1058
          %v1060 = vpop.xlane.xlu0 %1059
          %v1061 = vsub.f32 %v1045, %v1051
          %v1062 = vsub.f32 %v1046, %v1054
          %v1063 = vsub.f32 %v1047, %v1057
          %v1064 = vsub.f32 %v1048, %v1060
          %v1065 = vmul.f32 %v1061, 1.442695
          %v1066 = vpow.pop %v1065
          %v1067 = vmul.f32 %v1062, 1.442695
          %v1068 = vpow.pop %v1067
          %v1069 = vmul.f32 %v1063, 1.442695
          %v1070 = vpow.pop %v1069
          %v1071 = vmul.f32 %v1064, 1.442695
          %v1072 = vpow.pop %v1071
          %v1073 = vsel %vm961, %v1066, 0.0
          %1074 = vadd.xlane.f32.xlu0 %v1073
          %v1075 = vpop.xlane.xlu0 %1074
          %v1076 = vsel %vm961, %v1068, 0.0
          %1077 = vadd.xlane.f32.xlu0 %v1076
          %v1078 = vpop.xlane.xlu0 %1077
          %v1079 = vsel %vm961, %v1070, 0.0
          %1080 = vadd.xlane.f32.xlu0 %v1079
          %v1081 = vpop.xlane.xlu0 %1080
          %v1082 = vsel %vm961, %v1072, 0.0
          %1083 = vadd.xlane.f32.xlu0 %v1082
          %v1084 = vpop.xlane.xlu0 %1083
          %v1085 = vpack.c.bf16 %v1066, %v1066
          %v1086 = vpack.c.bf16 %v1068, %v1068
          %v1087 = vpack.c.bf16 %v1070, %v1070
          %v1088 = vpack.c.bf16 %v1072, %v1072
          %v1090 = vsel %vm961, %v1085, 0
          %vm1092 = vcmask 1043456
          %v1094 = vsel %vm1092, %v939, 0
          %1096 = vmatpush.bf16.msra.mxu0 0
          %1097 = vmatpush.bf16.msra.mxu0 0
          %1098 = vmatpush.bf16.msra.mxu0 0
          %1099 = vmatpush.bf16.msra.mxu0 0
          %1100 = vmatpush.bf16.msra.mxu0 0
          %1101 = vmatpush.bf16.msra.mxu0 0
          %1102 = vmatpush.bf16.msra.mxu0 0
          %1103 = vmatpush.bf16.msra.mxu0 %v1094
          %1104 = vmatmul.bf16.gmra.mxu0 %v1090
          %v1105 = vpop.f32.mrf.mxu0
          %v1106 = vadd.f32 0.0, %v1105
          %v1107 = vpop.f32.mrf.mxu0
          %1108 = vdwg.mxu0
          %v1110 = vsel %vm961, %v1086, 0
          %v1113 = vsel %vm1092, %v956, 0
          %1115 = vmatpush.bf16.msra.mxu0 0
          %1116 = vmatpush.bf16.msra.mxu0 0
          %1117 = vmatpush.bf16.msra.mxu0 0
          %1118 = vmatpush.bf16.msra.mxu0 0
          %1119 = vmatpush.bf16.msra.mxu0 0
          %1120 = vmatpush.bf16.msra.mxu0 0
          %1121 = vmatpush.bf16.msra.mxu0 0
          %1122 = vmatpush.bf16.msra.mxu0 %v1113
          %1123 = vmatmul.bf16.gmra.mxu0 %v1110
          %v1124 = vpop.f32.mrf.mxu0
          %v1125 = vadd.f32 0.0, %v1124
          %v1126 = vpop.f32.mrf.mxu0
          %1127 = vdwg.mxu0
          %v1129 = vsel %vm961, %v1087, 0
          %v1132 = vsel %vm1092, %v958, 0
          %1134 = vmatpush.bf16.msra.mxu0 0
          %1135 = vmatpush.bf16.msra.mxu0 0
          %1136 = vmatpush.bf16.msra.mxu0 0
          %1137 = vmatpush.bf16.msra.mxu0 0
          %1138 = vmatpush.bf16.msra.mxu0 0
          %1139 = vmatpush.bf16.msra.mxu0 0
          %1140 = vmatpush.bf16.msra.mxu0 0
          %1141 = vmatpush.bf16.msra.mxu0 %v1132
          %1142 = vmatmul.bf16.gmra.mxu0 %v1129
          %v1143 = vpop.f32.mrf.mxu0
          %v1144 = vadd.f32 0.0, %v1143
          %v1145 = vpop.f32.mrf.mxu0
          %1146 = vdwg.mxu0
          %v1148 = vsel %vm961, %v1088, 0
          %v1151 = vsel %vm1092, %v960, 0
          %1153 = vmatpush.bf16.msra.mxu0 0
          %1154 = vmatpush.bf16.msra.mxu0 0
          %1155 = vmatpush.bf16.msra.mxu0 0
          %1156 = vmatpush.bf16.msra.mxu0 0
          %1157 = vmatpush.bf16.msra.mxu0 0
          %1158 = vmatpush.bf16.msra.mxu0 0
          %1159 = vmatpush.bf16.msra.mxu0 0
          %1160 = vmatpush.bf16.msra.mxu0 %v1151
          %1161 = vmatmul.bf16.gmra.mxu0 %v1148
          %v1162 = vpop.f32.mrf.mxu0
          %v1163 = vadd.f32 0.0, %v1162
          %v1164 = vpop.f32.mrf.mxu0
          %1165 = vdwg.mxu0
          %v1166 = vrcp.pop %v1075
          %v1167 = vrcp.pop %v1078
          %v1168 = vrcp.pop %v1081
          %v1169 = vrcp.pop %v1084
          %v1170 = vmul.f32 %v1106, %v1166
          %v1171 = vmul.f32 %v1125, %v1167
          %v1172 = vmul.f32 %v1144, %v1168
          %v1173 = vmul.f32 %v1163, %v1169
          %1174 = vst.msk [vmem:[#allocation3] sm:$0xff] %vm961, %v1170
          %1176 = vrot.lane.b32.xlu0 %v1171, 8
          %v1177 = vpop.permute.xlu0 %1176
          %vm1179 = vcmask 130112
          %1180 = vst.msk [vmem:[#allocation3] sm:$0xff] %vm1179, %v1177
          %1182 = vrot.lane.b32.xlu0 %v1172, 16
          %v1183 = vpop.permute.xlu0 %1182
          %vm1185 = vcmask 195712
          %1186 = vst.msk [vmem:[#allocation3] sm:$0xff] %vm1185, %v1183
          %1188 = vrot.lane.b32.xlu0 %v1173, 24
          %v1189 = vpop.permute.xlu0 %1188
          %vm1191 = vcmask 261312
          %1192 = vst.msk [vmem:[#allocation3] sm:$0xff] %vm1191, %v1189
          %v1193 = vld [vmem:[#allocation3] sm:$0xff]
          %v1194 = vpack.c.bf16 %v1193, %v1193
          %v1195 = vld [vmem:[%s8] sm:$0xf]
          %v1196 = vld [vmem:[%s8 + $0x4] sm:$0xf]
          %v1197 = vld [vmem:[%s8 + $0x8] sm:$0xf]
          %v1198 = vld [vmem:[%s8 + $0xc] sm:$0xf]
          %v1199 = vld [vmem:[#allocation10] sm:$0x1]
          %v1201 = vperm.slane %v1199, 0
          %v1207 = vunpack.c.l.b16 %v1195
          %v1208 = vunpack.c.l.b16 %v1196
          %v1209 = vunpack.c.l.b16 %v1197
          %v1210 = vunpack.c.l.b16 %v1198
          %v1211 = vpack.c.b16 %v1208, %v1207
          %v1212 = vpack.c.b16 %v1210, %v1209
          %v1216 = vsel %vm824, %v1194, 0
          %1218 = vmatpush.bf16.msra.mxu0 0
          %1219 = vmatpush.bf16.msra.mxu0 0
          %1220 = vmatpush.bf16.msra.mxu0 0
          %1221 = vmatpush.bf16.msra.mxu0 0
          %1222 = vmatpush.bf16.msra.mxu0 0
          %1223 = vmatpush.bf16.msra.mxu0 0
          %1224 = vmatpush.bf16.msra.mxu0 %v1212
          %1225 = vmatpush.bf16.msra.mxu0 %v1211
          %1226 = vmatmul.bf16.gmra.mxu0 %v1216
          %v1227 = vpop.f32.mrf.mxu0
          %v1228 = vadd.f32 %v1201, %v1227
          %v1229 = vpop.f32.mrf.mxu0
          %1230 = vdwg.mxu0
          %v1231 = vadd.f32 %v1228, %v833
          %v1232 = vld [vmem:[#allocation12] sm:$0x1]
          %v1233 = vld [vmem:[#allocation13] sm:$0x1]
          %v1234 = vsel %vm824, %v1231, 0.0
          %1235 = vadd.xlane.f32.xlu0 %v1234
          %v1236 = vpop.xlane.xlu0 %1235
          %v1237 = vrcp.pop 32.0
          %v1238 = vmul.f32 32.0, %v1237
          %v1239 = vsub.f32 1.0, %v1238
          %v1240 = vmul.f32 %v1237, %v1239
          %v1241 = vadd.f32 %v1237, %v1240
          %vm1242 = vweird.f32 %v1237
          %v1243 = vsel %vm1242, %v1237, %v1241
          %v1244 = vmul.f32 %v1236, %v1243
          %v1245 = vsub.f32 %v1231, %v1244
          %v1246 = vmul.f32 %v1245, %v1245
          %v1247 = vsel %vm824, %v1246, 0.0
          %1248 = vadd.xlane.f32.xlu0 %v1247
          %v1249 = vpop.xlane.xlu0 %1248
          %v1250 = vmul.f32 %v1249, %v1243
          %v1251 = vadd.f32 %v1250, 1e-12
          %v1252 = vrsqrt.pop %v1251
          %v1253 = vmul.f32 %v1252, %v1251
          %v1254 = vmul.f32 %v1253, %v1252
          %v1255 = vmul.f32 0.5, %v1254
          %v1256 = vsub.f32 1.5, %v1255
          %v1257 = vmul.f32 %v1252, %v1256
          %vm1258 = vweird.f32 %v1251
          %vm1259 = vweird.f32 %v1252
          %vm1260 = vmor %vm1258, %vm1259
          %v1261 = vsel %vm1260, %v1252, %v1257
          %v1262 = vmul.f32 %v1245, %v1261
          %v1264 = vperm.slane %v1232, 0
          %v1266 = vmul.f32 %v1262, %v1264
          %v1268 = vperm.slane %v1233, 0
          %v1270 = vadd.f32 %v1266, %v1268
          %v1271 = vpack.c.bf16 %v1270, %v1270
          %v1272 = vld [vmem:[#allocation15] sm:$0xf]
          %v1273 = vld [vmem:[#allocation15 + $0x4] sm:$0xf]
          %v1274 = vld [vmem:[#allocation15 + $0x8] sm:$0xf]
          %v1275 = vld [vmem:[#allocation15 + $0xc] sm:$0xf]
          %v1276 = vld [vmem:[#allocation16] sm:$0x1]
          %v1278 = vperm.slane %v1276, 0
          %v1284 = vunpack.c.l.b16 %v1272
          %v1285 = vunpack.c.l.b16 %v1273
          %v1286 = vunpack.c.l.b16 %v1274
          %v1287 = vunpack.c.l.b16 %v1275
          %v1288 = vpack.c.b16 %v1285, %v1284
          %v1289 = vpack.c.b16 %v1287, %v1286
          %v1293 = vsel %vm824, %v1271, 0
          %1295 = vmatpush.bf16.msra.mxu0 0
          %1296 = vmatpush.bf16.msra.mxu0 0
          %1297 = vmatpush.bf16.msra.mxu0 0
          %1298 = vmatpush.bf16.msra.mxu0 0
          %1299 = vmatpush.bf16.msra.mxu0 0
          %1300 = vmatpush.bf16.msra.mxu0 0
          %1301 = vmatpush.bf16.msra.mxu0 %v1289
          %1302 = vmatpush.bf16.msra.mxu0 %v1288
          %1303 = vmatmul.bf16.gmra.mxu0 %v1293
          %v1304 = vpop.f32.mrf.mxu0
          %v1305 = vadd.f32 %v1278, %v1304
          %v1306 = vpop.f32.mrf.mxu0
          %1307 = vdwg.mxu0
          %v1308 = vmul.f32 %v1305, 0.5
          %v1309 = vmul.f32 %v1305, 0.70710677
          %v1310 = vmul.f32 %v1309, %v1309
          %v1311 = vmin.f32 16.0, %v1310
          %v1312 = vmul.f32 %v1311, 2.1237322e-06
          %v1313 = vadd.f32 %v1312, 0.00028619796
          %v1314 = vmul.f32 %v1311, %v1313
          %v1315 = vadd.f32 %v1314, 0.0036580483
          %v1316 = vmul.f32 %v1311, %v1315
          %v1317 = vadd.f32 %v1316, 0.05243302
          %v1318 = vmul.f32 %v1311, %v1317
          %v1319 = vadd.f32 %v1318, 0.18741608
          %v1320 = vmul.f32 %v1311, %v1319
          %v1321 = vadd.f32 %v1320, 1.1283791
          %v1322 = vmul.f32 %v1309, %v1321
          %v1323 = vmul.f32 %v1311, 3.8918573e-05
          %v1324 = vadd.f32 %v1323, 0.001143296
          %v1325 = vmul.f32 %v1311, %v1324
          %v1326 = vadd.f32 %v1325, 0.014752088
          %v1327 = vmul.f32 %v1311, %v1326
          %v1328 = vadd.f32 %v1327, 0.112945676
          %v1329 = vmul.f32 %v1311, %v1328
          %v1330 = vadd.f32 %v1329, 0.4994258
          %v1331 = vmul.f32 %v1311, %v1330
          %v1332 = vadd.f32 %v1331, 1.0
          %v1333 = vrcp.pop %v1332
          %v1334 = vmul.f32 %v1332, %v1333
          %v1335 = vsub.f32 1.0, %v1334
          %v1336 = vmul.f32 %v1333, %v1335
          %v1337 = vadd.f32 %v1333, %v1336
          %vm1338 = vweird.f32 %v1332
          %vm1339 = vweird.f32 %v1333
          %vm1340 = vmor %vm1338, %vm1339
          %v1341 = vsel %vm1340, %v1333, %v1337
          %v1342 = vand.u32 2147483647, %v1332
          %vm1343 = vcmp.eq.f32.partialorder %v1342, 8.507059e+37
          %v1344 = vand.u32 %v1332, 2147483648
          %v1345 = vor.u32 1.1754944e-38, %v1344
          %v1346 = vsel %vm1343, %v1345, %v1341
          %v1347 = vmul.f32 %v1322, %v1346
          %v1348 = vmin.f32 %v1347, 1.0
          %v1349 = vmax.f32 %v1348, -1.0
          %v1350 = vadd.f32 %v1349, 1.0
          %v1351 = vmul.f32 %v1308, %v1350
          %v1352 = vpack.c.bf16 %v1351, %v1351
          %v1353 = vld [vmem:[%s14] sm:$0xf]
          %v1354 = vld [vmem:[%s14 + $0x4] sm:$0xf]
          %v1355 = vld [vmem:[%s14 + $0x8] sm:$0xf]
          %v1356 = vld [vmem:[%s14 + $0xc] sm:$0xf]
          %v1357 = vld [vmem:[%s14 + $0x10] sm:$0xf]
          %v1358 = vld [vmem:[%s14 + $0x14] sm:$0xf]
          %v1359 = vld [vmem:[%s14 + $0x18] sm:$0xf]
          %v1360 = vld [vmem:[%s14 + $0x1c] sm:$0xf]
          %v1361 = vld [vmem:[%s14 + $0x20] sm:$0xf]
          %v1362 = vld [vmem:[%s14 + $0x24] sm:$0xf]
          %v1363 = vld [vmem:[%s14 + $0x28] sm:$0xf]
          %v1364 = vld [vmem:[%s14 + $0x2c] sm:$0xf]
          %v1365 = vld [vmem:[%s14 + $0x30] sm:$0xf]
          %v1366 = vld [vmem:[%s14 + $0x34] sm:$0xf]
          %v1367 = vld [vmem:[%s14 + $0x38] sm:$0xf]
          %v1368 = vld [vmem:[%s14 + $0x3c] sm:$0xf]
          %v1369 = vld [vmem:[#allocation18] sm:$0x1]
          %v1371 = vperm.slane %v1369, 0
          %v1389 = vunpack.c.l.b16 %v1353
          %v1390 = vunpack.c.l.b16 %v1354
          %v1391 = vunpack.c.l.b16 %v1355
          %v1392 = vunpack.c.l.b16 %v1356
          %v1393 = vunpack.c.l.b16 %v1357
          %v1394 = vunpack.c.l.b16 %v1358
          %v1395 = vunpack.c.l.b16 %v1359
          %v1396 = vunpack.c.l.b16 %v1360
          %v1397 = vunpack.c.l.b16 %v1361
          %v1398 = vunpack.c.l.b16 %v1362
          %v1399 = vunpack.c.l.b16 %v1363
          %v1400 = vunpack.c.l.b16 %v1364
          %v1401 = vunpack.c.l.b16 %v1365
          %v1402 = vunpack.c.l.b16 %v1366
          %v1403 = vunpack.c.l.b16 %v1367
          %v1404 = vunpack.c.l.b16 %v1368
          %v1405 = vpack.c.b16 %v1390, %v1389
          %v1406 = vpack.c.b16 %v1392, %v1391
          %v1407 = vpack.c.b16 %v1394, %v1393
          %v1408 = vpack.c.b16 %v1396, %v1395
          %v1409 = vpack.c.b16 %v1398, %v1397
          %v1410 = vpack.c.b16 %v1400, %v1399
          %v1411 = vpack.c.b16 %v1402, %v1401
          %v1412 = vpack.c.b16 %v1404, %v1403
          %1421 = vmatpush.bf16.msra.mxu0 %v1412
          %1422 = vmatpush.bf16.msra.mxu0 %v1411
          %1423 = vmatpush.bf16.msra.mxu0 %v1410
          %1424 = vmatpush.bf16.msra.mxu0 %v1409
          %1425 = vmatpush.bf16.msra.mxu0 %v1408
          %1426 = vmatpush.bf16.msra.mxu0 %v1407
          %1427 = vmatpush.bf16.msra.mxu0 %v1406
          %1428 = vmatpush.bf16.msra.mxu0 %v1405
          %1429 = vmatmul.bf16.gmra.mxu0 %v1352
          %v1430 = vpop.f32.mrf.mxu0
          %v1431 = vadd.f32 %v1371, %v1430
          %v1432 = vpop.f32.mrf.mxu0
          %1433 = vdwg.mxu0
          %v1434 = vadd.f32 %v1431, %v1270
          %v1435 = vld [vmem:[#allocation19] sm:$0x1]
          %v1436 = vld [vmem:[#allocation21] sm:$0x1]
          %v1437 = vsel %vm824, %v1434, 0.0
          %1438 = vadd.xlane.f32.xlu0 %v1437
          %v1439 = vpop.xlane.xlu0 %1438
          %v1440 = vmul.f32 %v1439, %v1243
          %v1441 = vsub.f32 %v1434, %v1440
          %v1442 = vmul.f32 %v1441, %v1441
          %v1443 = vsel %vm824, %v1442, 0.0
          %1444 = vadd.xlane.f32.xlu0 %v1443
          %v1445 = vpop.xlane.xlu0 %1444
          %v1446 = vmul.f32 %v1445, %v1243
          %v1447 = vadd.f32 %v1446, 1e-12
          %v1448 = vrsqrt.pop %v1447
          %v1449 = vmul.f32 %v1448, %v1447
          %v1450 = vmul.f32 %v1449, %v1448
          %v1451 = vmul.f32 0.5, %v1450
          %v1452 = vsub.f32 1.5, %v1451
          %v1453 = vmul.f32 %v1448, %v1452
          %vm1454 = vweird.f32 %v1447
          %vm1455 = vweird.f32 %v1448
          %vm1456 = vmor %vm1454, %vm1455
          %v1457 = vsel %vm1456, %v1448, %v1453
          %v1458 = vmul.f32 %v1441, %v1457
          %v1460 = vperm.slane %v1435, 0
          %v1462 = vmul.f32 %v1458, %v1460
          %v1464 = vperm.slane %v1436, 0
          %v1466 = vadd.f32 %v1462, %v1464
          %1467 = vst.msk [vmem:[#allocation2] sm:$0xff] %vm824, %v1466
        $region153: #{tpu_custom_call.1} parent=99 // loop_footer
          %s832 = sadd.s32 1, %s828
        $region154: #{tpu_custom_call.1} parent=99 // loop_footer_branch
          %827 = sbr.rel target = $region150
        $region155: #{tpu_custom_call.1} parent=99 // loop_exit
          _
        %v1468 = vld [vmem:[#allocation2] sm:$0xff]
        %v1469 = vpack.c.bf16 %v1468, %v1468
        %v1470 = vld [vmem:[%s18] sm:$0xf]
        %v1471 = vld [vmem:[%s18 + $0x4] sm:$0xf]
        %v1472 = vld [vmem:[%s18 + $0x8] sm:$0xf]
        %v1473 = vld [vmem:[%s18 + $0xc] sm:$0xf]
        %v1474 = vld [vmem:[#allocation22] sm:$0x1]
        %v1476 = vperm.slane %v1474, 0
        %v1482 = vunpack.c.l.b16 %v1470
        %v1483 = vunpack.c.l.b16 %v1471
        %v1484 = vunpack.c.l.b16 %v1472
        %v1485 = vunpack.c.l.b16 %v1473
        %v1486 = vpack.c.b16 %v1483, %v1482
        %v1487 = vpack.c.b16 %v1485, %v1484
        %v1491 = vsel %vm824, %v1469, 0
        %1493 = vmatpush.bf16.msra.mxu0 0
        %1494 = vmatpush.bf16.msra.mxu0 0
        %1495 = vmatpush.bf16.msra.mxu0 0
        %1496 = vmatpush.bf16.msra.mxu0 0
        %1497 = vmatpush.bf16.msra.mxu0 0
        %1498 = vmatpush.bf16.msra.mxu0 0
        %1499 = vmatpush.bf16.msra.mxu0 %v1487
        %1500 = vmatpush.bf16.msra.mxu0 %v1486
        %1501 = vmatmul.bf16.gmra.mxu0 %v1491
        %v1502 = vpop.f32.mrf.mxu0
        %v1503 = vadd.f32 %v1476, %v1502
        %v1504 = vpop.f32.mrf.mxu0
        %1505 = vdwg.mxu0
        %1506 = vst [vmem:[%s817] sm:$0xff] %v1503
        %s1507 = sand.u32 %s481, 1
        %s1508 = scalar_lea.sflag [#allocation6], %s1507
        %s1509 = sand.u32 %s481, 1
        %s1510 = smul.addr %s1509, 8
        %s1511 = scalar_lea.vmem [#allocation24], %s1510
        // Predicated region
        $region156: #{tpu_custom_call.1} parent=99 // pred_check
          %p1512 = pneg %p491
        $region157: #{tpu_custom_call.1} parent=99 // pred_check_branch
          %1514 = sbr.rel (%p1512) target = $region159
        $region158: #{tpu_custom_call.1} parent=99 // pred_region
          %1516 = vsyncadd %s1508, 0
          %s1517 = smul.addr %s43, 8
          %s1518 = scalar_lea.hbm %s20, %s1517
          %s1520 = sshll.u32 %s1511, 4
          %s1521 = int_to_ptr.vmem [resolvable:$true] %s1520
          %s1522 = sshll.u32 %s1518, 4
          %s1523 = int_to_ptr.hbm [resolvable:$true] %s1522
          %1525 = dma.vmem_to_hbm [thread:$0]  %s1521, 128, %s1523, %s1508
        $region159: #{tpu_custom_call.1} parent=99 // pred_fallthru
          _
      $region100: #{tpu_custom_call.1} parent=5 // pred_fallthru
        _
      %p1526 = scmp.le.s32.totalorder 2, %s38
      // Predicated region
      $region160: #{tpu_custom_call.1} parent=5 // pred_check
        %p1527 = pneg %p1526
      $region161: #{tpu_custom_call.1} parent=5 // pred_check_branch
        %1529 = sbr.rel (%p1527) target = $region163
      $region162: #{tpu_custom_call.1} parent=5 // pred_region
        %s1530 = ssub.s32 %s38, 2
        // Predicated region
        $region164: #{tpu_custom_call.1} parent=162 // pred_check
          %p1531 = pneg %p497
        $region165: #{tpu_custom_call.1} parent=162 // pred_check_branch
          %1533 = sbr.rel (%p1531) target = $region167
        $region166: #{tpu_custom_call.1} parent=162 // pred_region
          %s1534 = sand.u32 %s482, 1
          %s1535 = scalar_lea.sflag [#allocation6], %s1534
          %s1536 = sand.u32 %s482, 1
          %s1537 = smul.addr %s1536, 8
          %s1538 = scalar_lea.vmem [#allocation24], %s1537
          %1540 = dma.done %s1535, 128
        $region167: #{tpu_custom_call.1} parent=162 // pred_fallthru
          _
      $region163: #{tpu_custom_call.1} parent=5 // pred_fallthru
        _
    $region6: #{tpu_custom_call.1} parent=1 // loop_footer
      %s42 = sadd.s32 1, %s38
    $region7: #{tpu_custom_call.1} parent=1 // loop_footer_branch
      %37 = sbr.rel target = $region3
    $region8: #{tpu_custom_call.1} parent=1 // loop_exit
      _
    %1541 = vsyncpa [#allocation5], 1
    %s1542 = scalar_lea.sflag [#allocation5], 1
    %1543 = vsyncpa %s1542, 1
    %1544 = vsyncpa [#allocation8], 1
    %1545 = vsyncpa [#allocation11], 1
    %1546 = vsyncpa [#allocation14], 1
    %1547 = vsyncpa [#allocation17], 1
    %1548 = vsyncpa [#allocation20], 1
    %1549 = vsyncpa [#allocation23], 1
    %1550 = vsyncpa [#allocation6], 1
    %s1551 = scalar_lea.sflag [#allocation6], 1
    %1552 = vsyncpa %s1551, 1

// kernel: tpu_custom_call.1
$region0: #{tpu_custom_call.1}
  #allocation0 [shape = 'u32[]', space=smem, size = 0x4, offset = 0x4, fixed_abs, tag = 'smem constant byte address 0x4 - core index']
  #allocation1 [shape = 'u32[72,128]{1,0:T(1,128)}', space=vmem, size = 0x9000, scoped, tag = 'internal scratch']
  #allocation2 [shape = 'f32[8,32]{1,0:T(8,128)}', space=vmem, size = 0x1000, scoped, tag = 'scratch operand']
  #allocation3 [shape = 'f32[8,32]{1,0:T(8,128)}', space=vmem, size = 0x1000, scoped, tag = 'scratch operand']
  %s0 = inlined_call_operand.vmem [shape: f32[2,8,32], index: 0, kind: input, shape index: {}]
  %s1 = inlined_call_operand.hbm [shape: f32[2,1,8], index: 1, kind: input, shape index: {}]
  %s2 = inlined_call_operand.vmem [shape: bf16[32,32], index: 2, kind: input, shape index: {}]
  %s3 = inlined_call_operand.vmem [shape: f32[1,32], index: 3, kind: input, shape index: {}]
  %s4 = inlined_call_operand.vmem [shape: bf16[32,32], index: 4, kind: input, shape index: {}]
  %s5 = inlined_call_operand.hbm [shape: f32[1,32], index: 5, kind: input, shape index: {}]
  %s6 = inlined_call_operand.vmem [shape: bf16[32,32], index: 6, kind: input, shape index: {}]
  %s7 = inlined_call_operand.hbm [shape: f32[1,32], index: 7, kind: input, shape index: {}]
  %s8 = inlined_call_operand.vmem [shape: bf16[32,32], index: 8, kind: input, shape index: {}]
  %s9 = inlined_call_operand.hbm [shape: f32[1,32], index: 9, kind: input, shape index: {}]
  %s10 = inlined_call_operand.hbm [shape: f32[1,32], index: 10, kind: input, shape index: {}]
  %s11 = inlined_call_operand.hbm [shape: f32[1,32], index: 11, kind: input, shape index: {}]
  %s12 = inlined_call_operand.hbm [shape: bf16[1,32,128], index: 12, kind: input, shape index: {}]
  %s13 = inlined_call_operand.hbm [shape: f32[1,1,128], index: 13, kind: input, shape index: {}]
  %s14 = inlined_call_operand.vmem [shape: bf16[1,128,32], index: 14, kind: input, shape index: {}]
  %s15 = inlined_call_operand.hbm [shape: f32[1,32], index: 15, kind: input, shape index: {}]
  %s16 = inlined_call_operand.hbm [shape: f32[1,32], index: 16, kind: input, shape index: {}]
  %s17 = inlined_call_operand.hbm [shape: f32[1,32], index: 17, kind: input, shape index: {}]
  %s18 = inlined_call_operand.vmem [shape: bf16[32,128], index: 18, kind: input, shape index: {}]
  %s19 = inlined_call_operand.hbm [shape: f32[1,128], index: 19, kind: input, shape index: {}]
  %s20 = inlined_call_operand.hbm [shape: f32[2,8,128], index: 20, kind: output, shape index: {}]
  %s21 = sld [smem:[#allocation0]]
  $region168: #{tpu_custom_call.1} parent=0
    _
  %s23 = ssub.s32 1, %s21
  %s24 = scalar_select 0, %s23, %s21
  $region1: #{tpu_custom_call.1} parent=0
    #allocation4 [shape = 'u8[1024]{0}', space=vmem, size = 0x400, scoped, tag = 'input window, operand 1']
    #allocation5 [shape = 's32[2]{0}', space=sflag, size = 0x8, scoped, tag = 'scoped memory for tpu_custom_call.1']
    #allocation6 [shape = 's32[2]{0}', space=sflag, size = 0x8, scoped, tag = 'scoped memory for tpu_custom_call.1']
    #allocation7 [shape = 'u8[512]{0}', space=vmem, size = 0x400, scoped, tag = 'input window, operand 5, single buffered']
    #allocation8 [shape = 's32[1]{0}', space=sflag, size = 0x4, scoped, tag = 'scoped memory for tpu_custom_call.1']
    #allocation9 [shape = 'u8[512]{0}', space=vmem, size = 0x400, scoped, tag = 'input window, operand 7, single buffered']
    #allocation10 [shape = 'u8[512]{0}', space=vmem, size = 0x400, scoped, tag = 'input window, operand 9, single buffered']
    #allocation11 [shape = 's32[1]{0}', space=sflag, size = 0x4, scoped, tag = 'scoped memory for tpu_custom_call.1']
    #allocation12 [shape = 'u8[512]{0}', space=vmem, size = 0x400, scoped, tag = 'input window, operand 10, single buffered']
    #allocation13 [shape = 'u8[512]{0}', space=vmem, size = 0x400, scoped, tag = 'input window, operand 11, single buffered']
    #allocation14 [shape = 's32[1]{0}', space=sflag, size = 0x4, scoped, tag = 'scoped memory for tpu_custom_call.1']
    #allocation15 [shape = 'u8[8192]{0}', space=vmem, size = 0x2000, scoped, tag = 'input window, operand 12, single buffered']
    #allocation16 [shape = 'u8[512]{0}', space=vmem, size = 0x400, scoped, tag = 'input window, operand 13, single buffered']
    #allocation17 [shape = 's32[1]{0}', space=sflag, size = 0x4, scoped, tag = 'scoped memory for tpu_custom_call.1']
    #allocation18 [shape = 'u8[512]{0}', space=vmem, size = 0x400, scoped, tag = 'input window, operand 15, single buffered']
    #allocation19 [shape = 'u8[512]{0}', space=vmem, size = 0x400, scoped, tag = 'input window, operand 16, single buffered']
    #allocation20 [shape = 's32[1]{0}', space=sflag, size = 0x4, scoped, tag = 'scoped memory for tpu_custom_call.1']
    #allocation21 [shape = 'u8[512]{0}', space=vmem, size = 0x400, scoped, tag = 'input window, operand 17, single buffered']
    #allocation22 [shape = 'u8[512]{0}', space=vmem, size = 0x400, scoped, tag = 'input window, operand 19, single buffered']
    #allocation23 [shape = 's32[1]{0}', space=sflag, size = 0x4, scoped, tag = 'scoped memory for tpu_custom_call.1']
    #allocation24 [shape = 'u8[8192]{0}', space=vmem, size = 0x2000, scoped, tag = 'output window, operand 0']
    %25 = vsyncpa [#allocation5], 0
    %s26 = scalar_lea.sflag [#allocation5], 1
    %27 = vsyncpa %s26, 0
    %28 = vsyncpa [#allocation8], 0
    %29 = vsyncpa [#allocation11], 0
    %30 = vsyncpa [#allocation14], 0
    %31 = vsyncpa [#allocation17], 0
    %32 = vsyncpa [#allocation20], 0
    %33 = vsyncpa [#allocation23], 0
    %34 = vsyncpa [#allocation6], 0
    %s35 = scalar_lea.sflag [#allocation6], 1
    %36 = vsyncpa %s35, 0
    loop: start=0, step=1, limit=4
    $region2: #{tpu_custom_call.1} parent=1 // loop_pre_header
      _
    $region3: #{tpu_custom_call.1} parent=1 // loop_header
      %s38 = sphi 0, %s42
      %p39 = scmp.ge.s32.totalorder %s38, 4
      %s48 = sphi 0, %s50
      %s51 = sphi 0, %s48
      %s52 = sphi 0, %s51
      %s68 = sphi 0, %s52
      %s74 = sphi 0, %s76
      %s77 = sphi 0, %s74
      %s78 = sphi 0, %s77
      %s94 = sphi 0, %s78
      %s98 = sphi 0, %s98
      %s100 = sphi 0, %s98
      %s101 = sphi 0, %s100
      %s115 = sphi 0, %s101
      %s119 = sphi 0, %s119
      %s121 = sphi 0, %s119
      %s122 = sphi 0, %s121
      %s136 = sphi 0, %s122
      %s140 = sphi 0, %s140
      %s142 = sphi 0, %s140
      %s143 = sphi 0, %s142
      %s157 = sphi 0, %s143
      %s161 = sphi 0, %s161
      %s163 = sphi 0, %s161
      %s164 = sphi 0, %s163
      %s178 = sphi 0, %s164
      %s182 = sphi 0, %s182
      %s184 = sphi 0, %s182
      %s185 = sphi 0, %s184
      %s199 = sphi 0, %s185
      %s203 = sphi 0, %s203
      %s205 = sphi 0, %s203
      %s206 = sphi 0, %s205
      %s220 = sphi 0, %s206
      %s224 = sphi 0, %s224
      %s226 = sphi 0, %s224
      %s227 = sphi 0, %s226
      %s241 = sphi 0, %s227
      %s245 = sphi 0, %s245
      %s247 = sphi 0, %s245
      %s248 = sphi 0, %s247
      %s262 = sphi 0, %s248
      %s266 = sphi 0, %s266
      %s268 = sphi 0, %s266
      %s269 = sphi 0, %s268
      %s283 = sphi 0, %s269
      %s287 = sphi 0, %s287
      %s289 = sphi 0, %s287
      %s290 = sphi 0, %s289
      %s304 = sphi 0, %s290
      %s308 = sphi 0, %s308
      %s310 = sphi 0, %s308
      %s311 = sphi 0, %s310
      %s325 = sphi 0, %s311
      %s329 = sphi 0, %s329
      %s331 = sphi 0, %s329
      %s332 = sphi 0, %s331
      %s346 = sphi 0, %s332
      %s350 = sphi 0, %s350
      %s352 = sphi 0, %s350
      %s353 = sphi 0, %s352
      %s367 = sphi 0, %s353
      %s371 = sphi 0, %s371
      %s373 = sphi 0, %s371
      %s374 = sphi 0, %s373
      %s388 = sphi 0, %s374
      %s392 = sphi 0, %s392
      %s394 = sphi 0, %s392
      %s395 = sphi 0, %s394
      %s409 = sphi 0, %s395
      %s413 = sphi 0, %s413
      %s415 = sphi 0, %s413
      %s416 = sphi 0, %s415
      %s430 = sphi 0, %s416
      %s434 = sphi 0, %s434
      %s436 = sphi 0, %s434
      %s437 = sphi 0, %s436
      %s451 = sphi 0, %s437
      %s455 = sphi 0, %s455
      %s457 = sphi 0, %s455
      %s458 = sphi 0, %s457
      %s472 = sphi 0, %s458
      %s478 = sphi 0, %s480
      %s481 = sphi 0, %s478
      %s482 = sphi 0, %s481
      %s498 = sphi 0, %s482
    $region4: #{tpu_custom_call.1} parent=1 // loop_header_branch
      %41 = sbr.rel (%p39) target = $region8
    $region5: #{tpu_custom_call.1} parent=1 // loop_body
      %s43 = ssub.s32 %s38, 1
      %s44 = ssub.s32 %s38, 2
      %s45 = sadd.s32 %s38, 1
      %s46 = ssub.s32 %s38, %s45
      %p47 = scmp.eq.s32.totalorder %s46, 0
      %s49 = sadd.s32 %s48, 1
      %s50 = scalar_select %p47, %s48, %s49
      %p53 = pneg %p47
      %p54 = scmp.eq.s32.totalorder %s38, 1
      %p55 = por %p53, %p54
      %p56 = scmp.ne.s32.totalorder %s48, %s51
      %p57 = scmp.eq.s32.totalorder %s38, 0
      %p58 = por %p56, %p57
      %p59 = scmp.ne.s32.totalorder %s48, %s51
      %p60 = scmp.eq.s32.totalorder %s43, 1
      %p61 = por %p59, %p60
      %p62 = scmp.ne.s32.totalorder %s51, %s52
      %p63 = scmp.eq.s32.totalorder %s43, 0
      %p64 = por %p62, %p63
      %p65 = scmp.ne.s32.totalorder %s51, %s52
      %p66 = scmp.eq.s32.totalorder %s44, 1
      %p67 = por %p65, %p66
      %p69 = scmp.ne.s32.totalorder %s52, %s68
      %p70 = scmp.eq.s32.totalorder %s44, 0
      %p71 = por %p69, %p70
      %s72 = ssub.s32 %s38, %s45
      %p73 = scmp.eq.s32.totalorder %s72, 0
      %s75 = sadd.s32 %s74, 1
      %s76 = scalar_select %p73, %s74, %s75
      %p79 = pneg %p73
      %p80 = scmp.eq.s32.totalorder %s38, 1
      %p81 = por %p79, %p80
      %p82 = scmp.ne.s32.totalorder %s74, %s77
      %p83 = scmp.eq.s32.totalorder %s38, 0
      %p84 = por %p82, %p83
      %p85 = scmp.ne.s32.totalorder %s74, %s77
      %p86 = scmp.eq.s32.totalorder %s43, 1
      %p87 = por %p85, %p86
      %p88 = scmp.ne.s32.totalorder %s77, %s78
      %p89 = scmp.eq.s32.totalorder %s43, 0
      %p90 = por %p88, %p89
      %p91 = scmp.ne.s32.totalorder %s77, %s78
      %p92 = scmp.eq.s32.totalorder %s44, 1
      %p93 = por %p91, %p92
      %p95 = scmp.ne.s32.totalorder %s78, %s94
      %p96 = scmp.eq.s32.totalorder %s44, 0
      %p97 = por %p95, %p96
      %s99 = sadd.s32 %s98, 1
      %p102 = scmp.eq.s32.totalorder %s38, 1
      %p103 = scmp.ne.s32.totalorder %s98, %s100
      %p104 = scmp.eq.s32.totalorder %s38, 0
      %p105 = por %p103, %p104
      %p106 = scmp.ne.s32.totalorder %s98, %s100
      %p107 = scmp.eq.s32.totalorder %s43, 1
      %p108 = por %p106, %p107
      %p109 = scmp.ne.s32.totalorder %s100, %s101
      %p110 = scmp.eq.s32.totalorder %s43, 0
      %p111 = por %p109, %p110
      %p112 = scmp.ne.s32.totalorder %s100, %s101
      %p113 = scmp.eq.s32.totalorder %s44, 1
      %p114 = por %p112, %p113
      %p116 = scmp.ne.s32.totalorder %s101, %s115
      %p117 = scmp.eq.s32.totalorder %s44, 0
      %p118 = por %p116, %p117
      %s120 = sadd.s32 %s119, 1
      %p123 = scmp.eq.s32.totalorder %s38, 1
      %p124 = scmp.ne.s32.totalorder %s119, %s121
      %p125 = scmp.eq.s32.totalorder %s38, 0
      %p126 = por %p124, %p125
      %p127 = scmp.ne.s32.totalorder %s119, %s121
      %p128 = scmp.eq.s32.totalorder %s43, 1
      %p129 = por %p127, %p128
      %p130 = scmp.ne.s32.totalorder %s121, %s122
      %p131 = scmp.eq.s32.totalorder %s43, 0
      %p132 = por %p130, %p131
      %p133 = scmp.ne.s32.totalorder %s121, %s122
      %p134 = scmp.eq.s32.totalorder %s44, 1
      %p135 = por %p133, %p134
      %p137 = scmp.ne.s32.totalorder %s122, %s136
      %p138 = scmp.eq.s32.totalorder %s44, 0
      %p139 = por %p137, %p138
      %s141 = sadd.s32 %s140, 1
      %p144 = scmp.eq.s32.totalorder %s38, 1
      %p145 = scmp.ne.s32.totalorder %s140, %s142
      %p146 = scmp.eq.s32.totalorder %s38, 0
      %p147 = por %p145, %p146
      %p148 = scmp.ne.s32.totalorder %s140, %s142
      %p149 = scmp.eq.s32.totalorder %s43, 1
      %p150 = por %p148, %p149
      %p151 = scmp.ne.s32.totalorder %s142, %s143
      %p152 = scmp.eq.s32.totalorder %s43, 0
      %p153 = por %p151, %p152
      %p154 = scmp.ne.s32.totalorder %s142, %s143
      %p155 = scmp.eq.s32.totalorder %s44, 1
      %p156 = por %p154, %p155
      %p158 = scmp.ne.s32.totalorder %s143, %s157
      %p159 = scmp.eq.s32.totalorder %s44, 0
      %p160 = por %p158, %p159
      %s162 = sadd.s32 %s161, 1
      %p165 = scmp.eq.s32.totalorder %s38, 1
      %p166 = scmp.ne.s32.totalorder %s161, %s163
      %p167 = scmp.eq.s32.totalorder %s38, 0
      %p168 = por %p166, %p167
      %p169 = scmp.ne.s32.totalorder %s161, %s163
      %p170 = scmp.eq.s32.totalorder %s43, 1
      %p171 = por %p169, %p170
      %p172 = scmp.ne.s32.totalorder %s163, %s164
      %p173 = scmp.eq.s32.totalorder %s43, 0
      %p174 = por %p172, %p173
      %p175 = scmp.ne.s32.totalorder %s163, %s164
      %p176 = scmp.eq.s32.totalorder %s44, 1
      %p177 = por %p175, %p176
      %p179 = scmp.ne.s32.totalorder %s164, %s178
      %p180 = scmp.eq.s32.totalorder %s44, 0
      %p181 = por %p179, %p180
      %s183 = sadd.s32 %s182, 1
      %p186 = scmp.eq.s32.totalorder %s38, 1
      %p187 = scmp.ne.s32.totalorder %s182, %s184
      %p188 = scmp.eq.s32.totalorder %s38, 0
      %p189 = por %p187, %p188
      %p190 = scmp.ne.s32.totalorder %s182, %s184
      %p191 = scmp.eq.s32.totalorder %s43, 1
      %p192 = por %p190, %p191
      %p193 = scmp.ne.s32.totalorder %s184, %s185
      %p194 = scmp.eq.s32.totalorder %s43, 0
      %p195 = por %p193, %p194
      %p196 = scmp.ne.s32.totalorder %s184, %s185
      %p197 = scmp.eq.s32.totalorder %s44, 1
      %p198 = por %p196, %p197
      %p200 = scmp.ne.s32.totalorder %s185, %s199
      %p201 = scmp.eq.s32.totalorder %s44, 0
      %p202 = por %p200, %p201
      %s204 = sadd.s32 %s203, 1
      %p207 = scmp.eq.s32.totalorder %s38, 1
      %p208 = scmp.ne.s32.totalorder %s203, %s205
      %p209 = scmp.eq.s32.totalorder %s38, 0
      %p210 = por %p208, %p209
      %p211 = scmp.ne.s32.totalorder %s203, %s205
      %p212 = scmp.eq.s32.totalorder %s43, 1
      %p213 = por %p211, %p212
      %p214 = scmp.ne.s32.totalorder %s205, %s206
      %p215 = scmp.eq.s32.totalorder %s43, 0
      %p216 = por %p214, %p215
      %p217 = scmp.ne.s32.totalorder %s205, %s206
      %p218 = scmp.eq.s32.totalorder %s44, 1
      %p219 = por %p217, %p218
      %p221 = scmp.ne.s32.totalorder %s206, %s220
      %p222 = scmp.eq.s32.totalorder %s44, 0
      %p223 = por %p221, %p222
      %s225 = sadd.s32 %s224, 1
      %p228 = scmp.eq.s32.totalorder %s38, 1
      %p229 = scmp.ne.s32.totalorder %s224, %s226
      %p230 = scmp.eq.s32.totalorder %s38, 0
      %p231 = por %p229, %p230
      %p232 = scmp.ne.s32.totalorder %s224, %s226
      %p233 = scmp.eq.s32.totalorder %s43, 1
      %p234 = por %p232, %p233
      %p235 = scmp.ne.s32.totalorder %s226, %s227
      %p236 = scmp.eq.s32.totalorder %s43, 0
      %p237 = por %p235, %p236
      %p238 = scmp.ne.s32.totalorder %s226, %s227
      %p239 = scmp.eq.s32.totalorder %s44, 1
      %p240 = por %p238, %p239
      %p242 = scmp.ne.s32.totalorder %s227, %s241
      %p243 = scmp.eq.s32.totalorder %s44, 0
      %p244 = por %p242, %p243
      %s246 = sadd.s32 %s245, 1
      %p249 = scmp.eq.s32.totalorder %s38, 1
      %p250 = scmp.ne.s32.totalorder %s245, %s247
      %p251 = scmp.eq.s32.totalorder %s38, 0
      %p252 = por %p250, %p251
      %p253 = scmp.ne.s32.totalorder %s245, %s247
      %p254 = scmp.eq.s32.totalorder %s43, 1
      %p255 = por %p253, %p254
      %p256 = scmp.ne.s32.totalorder %s247, %s248
      %p257 = scmp.eq.s32.totalorder %s43, 0
      %p258 = por %p256, %p257
      %p259 = scmp.ne.s32.totalorder %s247, %s248
      %p260 = scmp.eq.s32.totalorder %s44, 1
      %p261 = por %p259, %p260
      %p263 = scmp.ne.s32.totalorder %s248, %s262
      %p264 = scmp.eq.s32.totalorder %s44, 0
      %p265 = por %p263, %p264
      %s267 = sadd.s32 %s266, 1
      %p270 = scmp.eq.s32.totalorder %s38, 1
      %p271 = scmp.ne.s32.totalorder %s266, %s268
      %p272 = scmp.eq.s32.totalorder %s38, 0
      %p273 = por %p271, %p272
      %p274 = scmp.ne.s32.totalorder %s266, %s268
      %p275 = scmp.eq.s32.totalorder %s43, 1
      %p276 = por %p274, %p275
      %p277 = scmp.ne.s32.totalorder %s268, %s269
      %p278 = scmp.eq.s32.totalorder %s43, 0
      %p279 = por %p277, %p278
      %p280 = scmp.ne.s32.totalorder %s268, %s269
      %p281 = scmp.eq.s32.totalorder %s44, 1
      %p282 = por %p280, %p281
      %p284 = scmp.ne.s32.totalorder %s269, %s283
      %p285 = scmp.eq.s32.totalorder %s44, 0
      %p286 = por %p284, %p285
      %s288 = sadd.s32 %s287, 1
      %p291 = scmp.eq.s32.totalorder %s38, 1
      %p292 = scmp.ne.s32.totalorder %s287, %s289
      %p293 = scmp.eq.s32.totalorder %s38, 0
      %p294 = por %p292, %p293
      %p295 = scmp.ne.s32.totalorder %s287, %s289
      %p296 = scmp.eq.s32.totalorder %s43, 1
      %p297 = por %p295, %p296
      %p298 = scmp.ne.s32.totalorder %s289, %s290
      %p299 = scmp.eq.s32.totalorder %s43, 0
      %p300 = por %p298, %p299
      %p301 = scmp.ne.s32.totalorder %s289, %s290
      %p302 = scmp.eq.s32.totalorder %s44, 1
      %p303 = por %p301, %p302
      %p305 = scmp.ne.s32.totalorder %s290, %s304
      %p306 = scmp.eq.s32.totalorder %s44, 0
      %p307 = por %p305, %p306
      %s309 = sadd.s32 %s308, 1
      %p312 = scmp.eq.s32.totalorder %s38, 1
      %p313 = scmp.ne.s32.totalorder %s308, %s310
      %p314 = scmp.eq.s32.totalorder %s38, 0
      %p315 = por %p313, %p314
      %p316 = scmp.ne.s32.totalorder %s308, %s310
      %p317 = scmp.eq.s32.totalorder %s43, 1
      %p318 = por %p316, %p317
      %p319 = scmp.ne.s32.totalorder %s310, %s311
      %p320 = scmp.eq.s32.totalorder %s43, 0
      %p321 = por %p319, %p320
      %p322 = scmp.ne.s32.totalorder %s310, %s311
      %p323 = scmp.eq.s32.totalorder %s44, 1
      %p324 = por %p322, %p323
      %p326 = scmp.ne.s32.totalorder %s311, %s325
      %p327 = scmp.eq.s32.totalorder %s44, 0
      %p328 = por %p326, %p327
      %s330 = sadd.s32 %s329, 1
      %p333 = scmp.eq.s32.totalorder %s38, 1
      %p334 = scmp.ne.s32.totalorder %s329, %s331
      %p335 = scmp.eq.s32.totalorder %s38, 0
      %p336 = por %p334, %p335
      %p337 = scmp.ne.s32.totalorder %s329, %s331
      %p338 = scmp.eq.s32.totalorder %s43, 1
      %p339 = por %p337, %p338
      %p340 = scmp.ne.s32.totalorder %s331, %s332
      %p341 = scmp.eq.s32.totalorder %s43, 0
      %p342 = por %p340, %p341
      %p343 = scmp.ne.s32.totalorder %s331, %s332
      %p344 = scmp.eq.s32.totalorder %s44, 1
      %p345 = por %p343, %p344
      %p347 = scmp.ne.s32.totalorder %s332, %s346
      %p348 = scmp.eq.s32.totalorder %s44, 0
      %p349 = por %p347, %p348
      %s351 = sadd.s32 %s350, 1
      %p354 = scmp.eq.s32.totalorder %s38, 1
      %p355 = scmp.ne.s32.totalorder %s350, %s352
      %p356 = scmp.eq.s32.totalorder %s38, 0
      %p357 = por %p355, %p356
      %p358 = scmp.ne.s32.totalorder %s350, %s352
      %p359 = scmp.eq.s32.totalorder %s43, 1
      %p360 = por %p358, %p359
      %p361 = scmp.ne.s32.totalorder %s352, %s353
      %p362 = scmp.eq.s32.totalorder %s43, 0
      %p363 = por %p361, %p362
      %p364 = scmp.ne.s32.totalorder %s352, %s353
      %p365 = scmp.eq.s32.totalorder %s44, 1
      %p366 = por %p364, %p365
      %p368 = scmp.ne.s32.totalorder %s353, %s367
      %p369 = scmp.eq.s32.totalorder %s44, 0
      %p370 = por %p368, %p369
      %s372 = sadd.s32 %s371, 1
      %p375 = scmp.eq.s32.totalorder %s38, 1
      %p376 = scmp.ne.s32.totalorder %s371, %s373
      %p377 = scmp.eq.s32.totalorder %s38, 0
      %p378 = por %p376, %p377
      %p379 = scmp.ne.s32.totalorder %s371, %s373
      %p380 = scmp.eq.s32.totalorder %s43, 1
      %p381 = por %p379, %p380
      %p382 = scmp.ne.s32.totalorder %s373, %s374
      %p383 = scmp.eq.s32.totalorder %s43, 0
      %p384 = por %p382, %p383
      %p385 = scmp.ne.s32.totalorder %s373, %s374
      %p386 = scmp.eq.s32.totalorder %s44, 1
      %p387 = por %p385, %p386
      %p389 = scmp.ne.s32.totalorder %s374, %s388
      %p390 = scmp.eq.s32.totalorder %s44, 0
      %p391 = por %p389, %p390
      %s393 = sadd.s32 %s392, 1
      %p396 = scmp.eq.s32.totalorder %s38, 1
      %p397 = scmp.ne.s32.totalorder %s392, %s394
      %p398 = scmp.eq.s32.totalorder %s38, 0
      %p399 = por %p397, %p398
      %p400 = scmp.ne.s32.totalorder %s392, %s394
      %p401 = scmp.eq.s32.totalorder %s43, 1
      %p402 = por %p400, %p401
      %p403 = scmp.ne.s32.totalorder %s394, %s395
      %p404 = scmp.eq.s32.totalorder %s43, 0
      %p405 = por %p403, %p404
      %p406 = scmp.ne.s32.totalorder %s394, %s395
      %p407 = scmp.eq.s32.totalorder %s44, 1
      %p408 = por %p406, %p407
      %p410 = scmp.ne.s32.totalorder %s395, %s409
      %p411 = scmp.eq.s32.totalorder %s44, 0
      %p412 = por %p410, %p411
      %s414 = sadd.s32 %s413, 1
      %p417 = scmp.eq.s32.totalorder %s38, 1
      %p418 = scmp.ne.s32.totalorder %s413, %s415
      %p419 = scmp.eq.s32.totalorder %s38, 0
      %p420 = por %p418, %p419
      %p421 = scmp.ne.s32.totalorder %s413, %s415
      %p422 = scmp.eq.s32.totalorder %s43, 1
      %p423 = por %p421, %p422
      %p424 = scmp.ne.s32.totalorder %s415, %s416
      %p425 = scmp.eq.s32.totalorder %s43, 0
      %p426 = por %p424, %p425
      %p427 = scmp.ne.s32.totalorder %s415, %s416
      %p428 = scmp.eq.s32.totalorder %s44, 1
      %p429 = por %p427, %p428
      %p431 = scmp.ne.s32.totalorder %s416, %s430
      %p432 = scmp.eq.s32.totalorder %s44, 0
      %p433 = por %p431, %p432
      %s435 = sadd.s32 %s434, 1
      %p438 = scmp.eq.s32.totalorder %s38, 1
      %p439 = scmp.ne.s32.totalorder %s434, %s436
      %p440 = scmp.eq.s32.totalorder %s38, 0
      %p441 = por %p439, %p440
      %p442 = scmp.ne.s32.totalorder %s434, %s436
      %p443 = scmp.eq.s32.totalorder %s43, 1
      %p444 = por %p442, %p443
      %p445 = scmp.ne.s32.totalorder %s436, %s437
      %p446 = scmp.eq.s32.totalorder %s43, 0
      %p447 = por %p445, %p446
      %p448 = scmp.ne.s32.totalorder %s436, %s437
      %p449 = scmp.eq.s32.totalorder %s44, 1
      %p450 = por %p448, %p449
      %p452 = scmp.ne.s32.totalorder %s437, %s451
      %p453 = scmp.eq.s32.totalorder %s44, 0
      %p454 = por %p452, %p453
      %s456 = sadd.s32 %s455, 1
      %p459 = scmp.eq.s32.totalorder %s38, 1
      %p460 = scmp.ne.s32.totalorder %s455, %s457
      %p461 = scmp.eq.s32.totalorder %s38, 0
      %p462 = por %p460, %p461
      %p463 = scmp.ne.s32.totalorder %s455, %s457
      %p464 = scmp.eq.s32.totalorder %s43, 1
      %p465 = por %p463, %p464
      %p466 = scmp.ne.s32.totalorder %s457, %s458
      %p467 = scmp.eq.s32.totalorder %s43, 0
      %p468 = por %p466, %p467
      %p469 = scmp.ne.s32.totalorder %s457, %s458
      %p470 = scmp.eq.s32.totalorder %s44, 1
      %p471 = por %p469, %p470
      %p473 = scmp.ne.s32.totalorder %s458, %s472
      %p474 = scmp.eq.s32.totalorder %s44, 0
      %p475 = por %p473, %p474
      %s476 = ssub.s32 %s38, %s45
      %p477 = scmp.eq.s32.totalorder %s476, 0
      %s479 = sadd.s32 %s478, 1
      %s480 = scalar_select %p477, %s478, %s479
      %p483 = pneg %p477
      %p484 = scmp.eq.s32.totalorder %s38, 1
      %p485 = por %p483, %p484
      %p486 = scmp.ne.s32.totalorder %s478, %s481
      %p487 = scmp.eq.s32.totalorder %s38, 0
      %p488 = por %p486, %p487
      %p489 = scmp.ne.s32.totalorder %s478, %s481
      %p490 = scmp.eq.s32.totalorder %s43, 1
      %p491 = por %p489, %p490
      %p492 = scmp.ne.s32.totalorder %s481, %s482
      %p493 = scmp.eq.s32.totalorder %s43, 0
      %p494 = por %p492, %p493
      %p495 = scmp.ne.s32.totalorder %s481, %s482
      %p496 = scmp.eq.s32.totalorder %s44, 1
      %p497 = por %p495, %p496
      %p499 = scmp.ne.s32.totalorder %s482, %s498
      %p500 = scmp.eq.s32.totalorder %s44, 0
      %p501 = por %p499, %p500
      %p502 = scmp.le.s32.totalorder 1, %s38
      %p503 = scmp.lt.s32.totalorder %s38, 3
      %p504 = pnand %p502, %p503
      %p505 = pneg %p504
      // Predicated region
      $region9: #{tpu_custom_call.1} parent=5 // pred_check
        _
      $region10: #{tpu_custom_call.1} parent=5 // pred_check_branch
        %507 = sbr.rel (%p504) target = $region12
      $region11: #{tpu_custom_call.1} parent=5 // pred_region
        %s508 = ssub.s32 %s38, 1
        // Predicated region
        $region13: #{tpu_custom_call.1} parent=11 // pred_check
          %p509 = pneg %p111
        $region14: #{tpu_custom_call.1} parent=11 // pred_check_branch
          %511 = sbr.rel (%p509) target = $region16
        $region15: #{tpu_custom_call.1} parent=11 // pred_region
          _
        $region16: #{tpu_custom_call.1} parent=11 // pred_fallthru
          _
        // Predicated region
        $region17: #{tpu_custom_call.1} parent=11 // pred_check
          %p512 = pneg %p132
        $region18: #{tpu_custom_call.1} parent=11 // pred_check_branch
          %514 = sbr.rel (%p512) target = $region20
        $region19: #{tpu_custom_call.1} parent=11 // pred_region
          _
        $region20: #{tpu_custom_call.1} parent=11 // pred_fallthru
          _
        // Predicated region
        $region21: #{tpu_custom_call.1} parent=11 // pred_check
          %p515 = pneg %p153
        $region22: #{tpu_custom_call.1} parent=11 // pred_check_branch
          %517 = sbr.rel (%p515) target = $region24
        $region23: #{tpu_custom_call.1} parent=11 // pred_region
          _
        $region24: #{tpu_custom_call.1} parent=11 // pred_fallthru
          _
        // Predicated region
        $region25: #{tpu_custom_call.1} parent=11 // pred_check
          %p518 = pneg %p174
        $region26: #{tpu_custom_call.1} parent=11 // pred_check_branch
          %520 = sbr.rel (%p518) target = $region28
        $region27: #{tpu_custom_call.1} parent=11 // pred_region
          %522 = vsyncadd [#allocation8], 0
          %s524 = sshll.u32 %s5, 4
          %s525 = int_to_ptr.hbm [resolvable:$true] %s524
          %s526 = sshll.u32 [#allocation7], 4
          %s527 = int_to_ptr.vmem [resolvable:$true] %s526
          %529 = dma.hbm_to_vmem [thread:$0]  %s525, 16, %s527, [#allocation8]
        $region28: #{tpu_custom_call.1} parent=11 // pred_fallthru
          _
        // Predicated region
        $region29: #{tpu_custom_call.1} parent=11 // pred_check
          %p530 = pneg %p195
        $region30: #{tpu_custom_call.1} parent=11 // pred_check_branch
          %532 = sbr.rel (%p530) target = $region32
        $region31: #{tpu_custom_call.1} parent=11 // pred_region
          _
        $region32: #{tpu_custom_call.1} parent=11 // pred_fallthru
          _
        // Predicated region
        $region33: #{tpu_custom_call.1} parent=11 // pred_check
          %p533 = pneg %p216
        $region34: #{tpu_custom_call.1} parent=11 // pred_check_branch
          %535 = sbr.rel (%p533) target = $region36
        $region35: #{tpu_custom_call.1} parent=11 // pred_region
          %537 = vsyncadd [#allocation8], 0
          %s539 = sshll.u32 %s7, 4
          %s540 = int_to_ptr.hbm [resolvable:$true] %s539
          %s541 = sshll.u32 [#allocation9], 4
          %s542 = int_to_ptr.vmem [resolvable:$true] %s541
          %544 = dma.hbm_to_vmem [thread:$0]  %s540, 16, %s542, [#allocation8]
        $region36: #{tpu_custom_call.1} parent=11 // pred_fallthru
          _
        // Predicated region
        $region37: #{tpu_custom_call.1} parent=11 // pred_check
          %p545 = pneg %p237
        $region38: #{tpu_custom_call.1} parent=11 // pred_check_branch
          %547 = sbr.rel (%p545) target = $region40
        $region39: #{tpu_custom_call.1} parent=11 // pred_region
          _
        $region40: #{tpu_custom_call.1} parent=11 // pred_fallthru
          _
        // Predicated region
        $region41: #{tpu_custom_call.1} parent=11 // pred_check
          %p548 = pneg %p258
        $region42: #{tpu_custom_call.1} parent=11 // pred_check_branch
          %550 = sbr.rel (%p548) target = $region44
        $region43: #{tpu_custom_call.1} parent=11 // pred_region
          %552 = vsyncadd [#allocation11], 0
          %s554 = sshll.u32 %s9, 4
          %s555 = int_to_ptr.hbm [resolvable:$true] %s554
          %s556 = sshll.u32 [#allocation10], 4
          %s557 = int_to_ptr.vmem [resolvable:$true] %s556
          %559 = dma.hbm_to_vmem [thread:$0]  %s555, 16, %s557, [#allocation11]
        $region44: #{tpu_custom_call.1} parent=11 // pred_fallthru
          _
        // Predicated region
        $region45: #{tpu_custom_call.1} parent=11 // pred_check
          %p560 = pneg %p279
        $region46: #{tpu_custom_call.1} parent=11 // pred_check_branch
          %562 = sbr.rel (%p560) target = $region48
        $region47: #{tpu_custom_call.1} parent=11 // pred_region
          %564 = vsyncadd [#allocation11], 0
          %s566 = sshll.u32 %s10, 4
          %s567 = int_to_ptr.hbm [resolvable:$true] %s566
          %s568 = sshll.u32 [#allocation12], 4
          %s569 = int_to_ptr.vmem [resolvable:$true] %s568
          %571 = dma.hbm_to_vmem [thread:$0]  %s567, 16, %s569, [#allocation11]
        $region48: #{tpu_custom_call.1} parent=11 // pred_fallthru
          _
        // Predicated region
        $region49: #{tpu_custom_call.1} parent=11 // pred_check
          %p572 = pneg %p300
        $region50: #{tpu_custom_call.1} parent=11 // pred_check_branch
          %574 = sbr.rel (%p572) target = $region52
        $region51: #{tpu_custom_call.1} parent=11 // pred_region
          %576 = vsyncadd [#allocation14], 0
          %s578 = sshll.u32 %s11, 4
          %s579 = int_to_ptr.hbm [resolvable:$true] %s578
          %s580 = sshll.u32 [#allocation13], 4
          %s581 = int_to_ptr.vmem [resolvable:$true] %s580
          %583 = dma.hbm_to_vmem [thread:$0]  %s579, 16, %s581, [#allocation14]
        $region52: #{tpu_custom_call.1} parent=11 // pred_fallthru
          _
        // Predicated region
        $region53: #{tpu_custom_call.1} parent=11 // pred_check
          %p584 = pneg %p321
        $region54: #{tpu_custom_call.1} parent=11 // pred_check_branch
          %586 = sbr.rel (%p584) target = $region56
        $region55: #{tpu_custom_call.1} parent=11 // pred_region
          %588 = vsyncadd [#allocation14], 0
          %s589 = sshll.u32 %s12, 4
          %s590 = int_to_ptr.hbm [resolvable:$true] %s589
          %s591 = sshll.u32 [#allocation15], 4
          %s592 = int_to_ptr.vmem [resolvable:$true] %s591
          %597 = dma.hbm_to_vmem [thread:$0]  %s590, 256, %s592, [#allocation14], 64, 64, 4
        $region56: #{tpu_custom_call.1} parent=11 // pred_fallthru
          _
        // Predicated region
        $region57: #{tpu_custom_call.1} parent=11 // pred_check
          %p598 = pneg %p342
        $region58: #{tpu_custom_call.1} parent=11 // pred_check_branch
          %600 = sbr.rel (%p598) target = $region60
        $region59: #{tpu_custom_call.1} parent=11 // pred_region
          %602 = vsyncadd [#allocation17], 0
          %s604 = sshll.u32 %s13, 4
          %s605 = int_to_ptr.hbm [resolvable:$true] %s604
          %s606 = sshll.u32 [#allocation16], 4
          %s607 = int_to_ptr.vmem [resolvable:$true] %s606
          %609 = dma.hbm_to_vmem [thread:$0]  %s605, 16, %s607, [#allocation17]
        $region60: #{tpu_custom_call.1} parent=11 // pred_fallthru
          _
        // Predicated region
        $region61: #{tpu_custom_call.1} parent=11 // pred_check
          %p610 = pneg %p363
        $region62: #{tpu_custom_call.1} parent=11 // pred_check_branch
          %612 = sbr.rel (%p610) target = $region64
        $region63: #{tpu_custom_call.1} parent=11 // pred_region
          _
        $region64: #{tpu_custom_call.1} parent=11 // pred_fallthru
          _
        // Predicated region
        $region65: #{tpu_custom_call.1} parent=11 // pred_check
          %p613 = pneg %p384
        $region66: #{tpu_custom_call.1} parent=11 // pred_check_branch
          %615 = sbr.rel (%p613) target = $region68
        $region67: #{tpu_custom_call.1} parent=11 // pred_region
          %617 = vsyncadd [#allocation17], 0
          %s619 = sshll.u32 %s15, 4
          %s620 = int_to_ptr.hbm [resolvable:$true] %s619
          %s621 = sshll.u32 [#allocation18], 4
          %s622 = int_to_ptr.vmem [resolvable:$true] %s621
          %624 = dma.hbm_to_vmem [thread:$0]  %s620, 16, %s622, [#allocation17]
        $region68: #{tpu_custom_call.1} parent=11 // pred_fallthru
          _
        // Predicated region
        $region69: #{tpu_custom_call.1} parent=11 // pred_check
          %p625 = pneg %p405
        $region70: #{tpu_custom_call.1} parent=11 // pred_check_branch
          %627 = sbr.rel (%p625) target = $region72
        $region71: #{tpu_custom_call.1} parent=11 // pred_region
          %629 = vsyncadd [#allocation20], 0
          %s631 = sshll.u32 %s16, 4
          %s632 = int_to_ptr.hbm [resolvable:$true] %s631
          %s633 = sshll.u32 [#allocation19], 4
          %s634 = int_to_ptr.vmem [resolvable:$true] %s633
          %636 = dma.hbm_to_vmem [thread:$0]  %s632, 16, %s634, [#allocation20]
        $region72: #{tpu_custom_call.1} parent=11 // pred_fallthru
          _
        // Predicated region
        $region73: #{tpu_custom_call.1} parent=11 // pred_check
          %p637 = pneg %p426
        $region74: #{tpu_custom_call.1} parent=11 // pred_check_branch
          %639 = sbr.rel (%p637) target = $region76
        $region75: #{tpu_custom_call.1} parent=11 // pred_region
          %641 = vsyncadd [#allocation20], 0
          %s643 = sshll.u32 %s17, 4
          %s644 = int_to_ptr.hbm [resolvable:$true] %s643
          %s645 = sshll.u32 [#allocation21], 4
          %s646 = int_to_ptr.vmem [resolvable:$true] %s645
          %648 = dma.hbm_to_vmem [thread:$0]  %s644, 16, %s646, [#allocation20]
        $region76: #{tpu_custom_call.1} parent=11 // pred_fallthru
          _
        // Predicated region
        $region77: #{tpu_custom_call.1} parent=11 // pred_check
          %p649 = pneg %p447
        $region78: #{tpu_custom_call.1} parent=11 // pred_check_branch
          %651 = sbr.rel (%p649) target = $region80
        $region79: #{tpu_custom_call.1} parent=11 // pred_region
          _
        $region80: #{tpu_custom_call.1} parent=11 // pred_fallthru
          _
        // Predicated region
        $region81: #{tpu_custom_call.1} parent=11 // pred_check
          %p652 = pneg %p468
        $region82: #{tpu_custom_call.1} parent=11 // pred_check_branch
          %654 = sbr.rel (%p652) target = $region84
        $region83: #{tpu_custom_call.1} parent=11 // pred_region
          %656 = vsyncadd [#allocation23], 0
          %s658 = sshll.u32 %s19, 4
          %s659 = int_to_ptr.hbm [resolvable:$true] %s658
          %s660 = sshll.u32 [#allocation22], 4
          %s661 = int_to_ptr.vmem [resolvable:$true] %s660
          %663 = dma.hbm_to_vmem [thread:$0]  %s659, 16, %s661, [#allocation23]
        $region84: #{tpu_custom_call.1} parent=11 // pred_fallthru
          _
      $region12: #{tpu_custom_call.1} parent=5 // pred_fallthru
        _
      %p664 = scmp.lt.s32.totalorder %s38, 2
      // Predicated region
      $region85: #{tpu_custom_call.1} parent=5 // pred_check
        %p665 = pneg %p664
      $region86: #{tpu_custom_call.1} parent=5 // pred_check_branch
        %667 = sbr.rel (%p665) target = $region88
      $region87: #{tpu_custom_call.1} parent=5 // pred_region
        // Predicated region
        $region89: #{tpu_custom_call.1} parent=87 // pred_check
          %p668 = pneg %p58
        $region90: #{tpu_custom_call.1} parent=87 // pred_check_branch
          %670 = sbr.rel (%p668) target = $region92
        $region91: #{tpu_custom_call.1} parent=87 // pred_region
          %p671 = scmp.lt.s32.totalorder %s38, 1
          %s672 = scalar_select %p671, %s38, 1
          %s673 = smul.addr %s672, 8
          %s674 = scalar_lea.vmem %s0, %s673
        $region92: #{tpu_custom_call.1} parent=87 // pred_fallthru
          _
        // Predicated region
        $region93: #{tpu_custom_call.1} parent=87 // pred_check
          %p675 = pneg %p84
        $region94: #{tpu_custom_call.1} parent=87 // pred_check_branch
          %677 = sbr.rel (%p675) target = $region96
        $region95: #{tpu_custom_call.1} parent=87 // pred_region
          %s678 = sand.u32 %s74, 1
          %s679 = scalar_lea.sflag [#allocation5], %s678
          %s680 = sand.u32 %s74, 1
          %s681 = scalar_lea.vmem [#allocation4], %s680
          %683 = vsyncadd %s679, 0
          %s684 = scalar_lea.hbm %s1, %s38
          %s686 = sshll.u32 %s684, 4
          %s687 = int_to_ptr.hbm [resolvable:$true] %s686
          %s688 = sshll.u32 %s681, 4
          %s689 = int_to_ptr.vmem [resolvable:$true] %s688
          %691 = dma.hbm_to_vmem [thread:$0]  %s687, 16, %s689, %s679
        $region96: #{tpu_custom_call.1} parent=87 // pred_fallthru
          _
      $region88: #{tpu_custom_call.1} parent=5 // pred_fallthru
        _
      %p692 = scmp.le.s32.totalorder 1, %s38
      %p693 = scmp.lt.s32.totalorder %s38, 3
      %p694 = pnand %p692, %p693
      %p695 = pneg %p694
      // Predicated region
      $region97: #{tpu_custom_call.1} parent=5 // pred_check
        _
      $region98: #{tpu_custom_call.1} parent=5 // pred_check_branch
        %697 = sbr.rel (%p694) target = $region100
      $region99: #{tpu_custom_call.1} parent=5 // pred_region
        %s698 = ssub.s32 %s38, 1
        %s699 = sand.u32 %s77, 1
        %s700 = scalar_lea.sflag [#allocation5], %s699
        %s701 = sand.u32 %s77, 1
        %s702 = scalar_lea.vmem [#allocation4], %s701
        // Predicated region
        $region101: #{tpu_custom_call.1} parent=99 // pred_check
          %p703 = pneg %p90
        $region102: #{tpu_custom_call.1} parent=99 // pred_check_branch
          %705 = sbr.rel (%p703) target = $region104
        $region103: #{tpu_custom_call.1} parent=99 // pred_region
          %707 = dma.done %s700, 16
        $region104: #{tpu_custom_call.1} parent=99 // pred_fallthru
          _
        // Predicated region
        $region105: #{tpu_custom_call.1} parent=99 // pred_check
          %p708 = pneg %p174
        $region106: #{tpu_custom_call.1} parent=99 // pred_check_branch
          %710 = sbr.rel (%p708) target = $region108
        $region107: #{tpu_custom_call.1} parent=99 // pred_region
          %712 = dma.done [#allocation8], 16
        $region108: #{tpu_custom_call.1} parent=99 // pred_fallthru
          _
        // Predicated region
        $region109: #{tpu_custom_call.1} parent=99 // pred_check
          %p713 = pneg %p216
        $region110: #{tpu_custom_call.1} parent=99 // pred_check_branch
          %715 = sbr.rel (%p713) target = $region112
        $region111: #{tpu_custom_call.1} parent=99 // pred_region
          %717 = dma.done [#allocation8], 16
        $region112: #{tpu_custom_call.1} parent=99 // pred_fallthru
          _
        // Predicated region
        $region113: #{tpu_custom_call.1} parent=99 // pred_check
          %p718 = pneg %p258
        $region114: #{tpu_custom_call.1} parent=99 // pred_check_branch
          %720 = sbr.rel (%p718) target = $region116
        $region115: #{tpu_custom_call.1} parent=99 // pred_region
          %722 = dma.done [#allocation11], 16
        $region116: #{tpu_custom_call.1} parent=99 // pred_fallthru
          _
        // Predicated region
        $region117: #{tpu_custom_call.1} parent=99 // pred_check
          %p723 = pneg %p279
        $region118: #{tpu_custom_call.1} parent=99 // pred_check_branch
          %725 = sbr.rel (%p723) target = $region120
        $region119: #{tpu_custom_call.1} parent=99 // pred_region
          %727 = dma.done [#allocation11], 16
        $region120: #{tpu_custom_call.1} parent=99 // pred_fallthru
          _
        // Predicated region
        $region121: #{tpu_custom_call.1} parent=99 // pred_check
          %p728 = pneg %p300
        $region122: #{tpu_custom_call.1} parent=99 // pred_check_branch
          %730 = sbr.rel (%p728) target = $region124
        $region123: #{tpu_custom_call.1} parent=99 // pred_region
          %732 = dma.done [#allocation14], 16
        $region124: #{tpu_custom_call.1} parent=99 // pred_fallthru
          _
        // Predicated region
        $region125: #{tpu_custom_call.1} parent=99 // pred_check
          %p733 = pneg %p321
        $region126: #{tpu_custom_call.1} parent=99 // pred_check_branch
          %735 = sbr.rel (%p733) target = $region128
        $region127: #{tpu_custom_call.1} parent=99 // pred_region
          %737 = dma.done [#allocation14], 256
        $region128: #{tpu_custom_call.1} parent=99 // pred_fallthru
          _
        // Predicated region
        $region129: #{tpu_custom_call.1} parent=99 // pred_check
          %p738 = pneg %p342
        $region130: #{tpu_custom_call.1} parent=99 // pred_check_branch
          %740 = sbr.rel (%p738) target = $region132
        $region131: #{tpu_custom_call.1} parent=99 // pred_region
          %742 = dma.done [#allocation17], 16
        $region132: #{tpu_custom_call.1} parent=99 // pred_fallthru
          _
        // Predicated region
        $region133: #{tpu_custom_call.1} parent=99 // pred_check
          %p743 = pneg %p384
        $region134: #{tpu_custom_call.1} parent=99 // pred_check_branch
          %745 = sbr.rel (%p743) target = $region136
        $region135: #{tpu_custom_call.1} parent=99 // pred_region
          %747 = dma.done [#allocation17], 16
        $region136: #{tpu_custom_call.1} parent=99 // pred_fallthru
          _
        // Predicated region
        $region137: #{tpu_custom_call.1} parent=99 // pred_check
          %p748 = pneg %p405
        $region138: #{tpu_custom_call.1} parent=99 // pred_check_branch
          %750 = sbr.rel (%p748) target = $region140
        $region139: #{tpu_custom_call.1} parent=99 // pred_region
          %752 = dma.done [#allocation20], 16
        $region140: #{tpu_custom_call.1} parent=99 // pred_fallthru
          _
        // Predicated region
        $region141: #{tpu_custom_call.1} parent=99 // pred_check
          %p753 = pneg %p426
        $region142: #{tpu_custom_call.1} parent=99 // pred_check_branch
          %755 = sbr.rel (%p753) target = $region144
        $region143: #{tpu_custom_call.1} parent=99 // pred_region
          %757 = dma.done [#allocation20], 16
        $region144: #{tpu_custom_call.1} parent=99 // pred_fallthru
          _
        // Predicated region
        $region145: #{tpu_custom_call.1} parent=99 // pred_check
          %p758 = pneg %p468
        $region146: #{tpu_custom_call.1} parent=99 // pred_check_branch
          %760 = sbr.rel (%p758) target = $region148
        $region147: #{tpu_custom_call.1} parent=99 // pred_region
          %762 = dma.done [#allocation23], 16
        $region148: #{tpu_custom_call.1} parent=99 // pred_fallthru
          _
        %p763 = scmp.lt.s32.totalorder %s43, 1
        %s764 = scalar_select %p763, %s43, 1
        %s765 = smul.addr %s764, 8
        %s766 = scalar_lea.vmem %s0, %s765
        %p767 = pneg %p64
        %p768 = pneg %p61
        %s769 = sand.u32 %s77, 1
        %s770 = scalar_lea.sflag [#allocation5], %s769
        %s771 = sand.u32 %s77, 1
        %s772 = scalar_lea.vmem [#allocation4], %s771
        %p773 = pneg %p90
        %p774 = pneg %p87
        %p775 = pneg %p111
        %p776 = pneg %p108
        %p777 = pneg %p132
        %p778 = pneg %p129
        %p779 = pneg %p153
        %p780 = pneg %p150
        %p781 = pneg %p174
        %p782 = pneg %p171
        %p783 = pneg %p195
        %p784 = pneg %p192
        %p785 = pneg %p216
        %p786 = pneg %p213
        %p787 = pneg %p237
        %p788 = pneg %p234
        %p789 = pneg %p258
        %p790 = pneg %p255
        %p791 = pneg %p279
        %p792 = pneg %p276
        %p793 = pneg %p300
        %p794 = pneg %p297
        %p795 = pneg %p321
        %p796 = pneg %p318
        %p797 = pneg %p342
        %p798 = pneg %p339
        %p799 = pneg %p363
        %p800 = pneg %p360
        %p801 = pneg %p384
        %p802 = pneg %p381
        %p803 = pneg %p405
        %p804 = pneg %p402
        %p805 = pneg %p426
        %p806 = pneg %p423
        %p807 = pneg %p447
        %p808 = pneg %p444
        %p809 = pneg %p468
        %p810 = pneg %p465
        %p811 = pneg %p494
        %p812 = pneg %p491
        %s813 = sand.u32 %s481, 1
        %s814 = scalar_lea.sflag [#allocation6], %s813
        %s815 = sand.u32 %s481, 1
        %s816 = smul.addr %s815, 8
        %s817 = scalar_lea.vmem [#allocation24], %s816
        %p818 = scmp.lt.s32.totalorder %s43, 1
        %s819 = scalar_select %p818, %s43, 1
        %s820 = smul.addr %s819, 8
        %s821 = scalar_lea.vmem %s0, %s820
        %v823 = vld [vmem:[%s821] sm:$0xff]
        %vm824 = vcmask 261120
        %825 = vst.msk [vmem:[#allocation2] sm:$0xff] %vm824, %v823
        %v826 = vld [vmem:[%s702] sm:$0x1]
        loop: start=0, step=1, limit=2
        $region149: #{tpu_custom_call.1} parent=99 // loop_pre_header
          _
        $region150: #{tpu_custom_call.1} parent=99 // loop_header
          %s828 = sphi 0, %s832
          %p829 = scmp.ge.s32.totalorder %s828, 2
        $region151: #{tpu_custom_call.1} parent=99 // loop_header_branch
          %831 = sbr.rel (%p829) target = $region155
        $region152: #{tpu_custom_call.1} parent=99 // loop_body
          %v833 = vld [vmem:[#allocation2] sm:$0xff]
          %v834 = vpack.c.bf16 %v833, %v833
          %v835 = vld [vmem:[%s2] sm:$0xf]
          %v836 = vld [vmem:[%s2 + $0x4] sm:$0xf]
          %v837 = vld [vmem:[%s2 + $0x8] sm:$0xf]
          %v838 = vld [vmem:[%s2 + $0xc] sm:$0xf]
          %v839 = vld [vmem:[%s3] sm:$0x1]
          %v841 = vperm.slane %v839, 0
          %v847 = vunpack.c.l.b16 %v835
          %v848 = vunpack.c.l.b16 %v836
          %v849 = vunpack.c.l.b16 %v837
          %v850 = vunpack.c.l.b16 %v838
          %v851 = vpack.c.b16 %v848, %v847
          %v852 = vpack.c.b16 %v850, %v849
          %v856 = vsel %vm824, %v834, 0
          %858 = vmatpush.bf16.msra.mxu0 0
          %859 = vmatpush.bf16.msra.mxu0 0
          %860 = vmatpush.bf16.msra.mxu0 0
          %861 = vmatpush.bf16.msra.mxu0 0
          %862 = vmatpush.bf16.msra.mxu0 0
          %863 = vmatpush.bf16.msra.mxu0 0
          %864 = vmatpush.bf16.msra.mxu0 %v852
          %865 = vmatpush.bf16.msra.mxu0 %v851
          %866 = vmatmul.bf16.gmra.mxu0 %v856
          %v867 = vpop.f32.mrf.mxu0
          %v868 = vadd.f32 %v841, %v867
          %v869 = vpop.f32.mrf.mxu0
          %870 = vdwg.mxu0
          %v871 = vpack.c.bf16 %v868, %v868
          %v872 = vld [vmem:[%s4] sm:$0xf]
          %v873 = vld [vmem:[%s4 + $0x4] sm:$0xf]
          %v874 = vld [vmem:[%s4 + $0x8] sm:$0xf]
          %v875 = vld [vmem:[%s4 + $0xc] sm:$0xf]
          %v876 = vld [vmem:[#allocation7] sm:$0x1]
          %v878 = vperm.slane %v876, 0
          %v884 = vunpack.c.l.b16 %v872
          %v885 = vunpack.c.l.b16 %v873
          %v886 = vunpack.c.l.b16 %v874
          %v887 = vunpack.c.l.b16 %v875
          %v888 = vpack.c.b16 %v885, %v884
          %v889 = vpack.c.b16 %v887, %v886
          %892 = vmatpush.bf16.msra.mxu0 0
          %893 = vmatpush.bf16.msra.mxu0 0
          %894 = vmatpush.bf16.msra.mxu0 0
          %895 = vmatpush.bf16.msra.mxu0 0
          %896 = vmatpush.bf16.msra.mxu0 0
          %897 = vmatpush.bf16.msra.mxu0 0
          %898 = vmatpush.bf16.msra.mxu0 %v889
          %899 = vmatpush.bf16.msra.mxu0 %v888
          %900 = vmatmul.bf16.gmra.mxu0 %v856
          %v901 = vpop.f32.mrf.mxu0
          %v902 = vadd.f32 %v878, %v901
          %v903 = vpop.f32.mrf.mxu0
          %904 = vdwg.mxu0
          %v905 = vpack.c.bf16 %v902, %v902
          %v906 = vld [vmem:[%s6] sm:$0xf]
          %v907 = vld [vmem:[%s6 + $0x4] sm:$0xf]
          %v908 = vld [vmem:[%s6 + $0x8] sm:$0xf]
          %v909 = vld [vmem:[%s6 + $0xc] sm:$0xf]
          %v910 = vld [vmem:[#allocation9] sm:$0x1]
          %v912 = vperm.slane %v910, 0
          %v918 = vunpack.c.l.b16 %v906
          %v919 = vunpack.c.l.b16 %v907
          %v920 = vunpack.c.l.b16 %v908
          %v921 = vunpack.c.l.b16 %v909
          %v922 = vpack.c.b16 %v919, %v918
          %v923 = vpack.c.b16 %v921, %v920
          %926 = vmatpush.bf16.msra.mxu0 0
          %927 = vmatpush.bf16.msra.mxu0 0
          %928 = vmatpush.bf16.msra.mxu0 0
          %929 = vmatpush.bf16.msra.mxu0 0
          %930 = vmatpush.bf16.msra.mxu0 0
          %931 = vmatpush.bf16.msra.mxu0 0
          %932 = vmatpush.bf16.msra.mxu0 %v923
          %933 = vmatpush.bf16.msra.mxu0 %v922
          %934 = vmatmul.bf16.gmra.mxu0 %v856
          %v935 = vpop.f32.mrf.mxu0
          %v936 = vadd.f32 %v912, %v935
          %v937 = vpop.f32.mrf.mxu0
          %938 = vdwg.mxu0
          %v939 = vpack.c.bf16 %v936, %v936
          %941 = vrot.lane.b32.xlu0 %v871, 120
          %v942 = vpop.permute.xlu0 %941
          %943 = vrot.lane.b32.xlu0 %v871, 112
          %v944 = vpop.permute.xlu0 %943
          %945 = vrot.lane.b32.xlu0 %v871, 104
          %v946 = vpop.permute.xlu0 %945
          %948 = vrot.lane.b32.xlu0 %v905, 120
          %v949 = vpop.permute.xlu0 %948
          %950 = vrot.lane.b32.xlu0 %v905, 112
          %v951 = vpop.permute.xlu0 %950
          %952 = vrot.lane.b32.xlu0 %v905, 104
          %v953 = vpop.permute.xlu0 %952
          %955 = vrot.lane.b32.xlu0 %v939, 120
          %v956 = vpop.permute.xlu0 %955
          %957 = vrot.lane.b32.xlu0 %v939, 112
          %v958 = vpop.permute.xlu0 %957
          %959 = vrot.lane.b32.xlu0 %v939, 104
          %v960 = vpop.permute.xlu0 %959
          %vm961 = vcmask 64512
          %v963 = vsel %vm961, %v871, 0
          %v966 = vsel %vm961, %v905, 0
          %968 = vmatpush.bf16.xpose.msra.mxu0 0
          %969 = vmatpush.bf16.xpose.msra.mxu0 0
          %970 = vmatpush.bf16.xpose.msra.mxu0 0
          %971 = vmatpush.bf16.xpose.msra.mxu0 0
          %972 = vmatpush.bf16.xpose.msra.mxu0 0
          %973 = vmatpush.bf16.xpose.msra.mxu0 0
          %974 = vmatpush.bf16.xpose.msra.mxu0 0
          %975 = vmatpush.bf16.xpose.msra.mxu0 %v966
          %976 = vmatmul.bf16.gmra.mxu0 %v963
          %v977 = vpop.f32.mrf.mxu0
          %v978 = vadd.f32 0.0, %v977
          %v979 = vpop.f32.mrf.mxu0
          %980 = vdwg.mxu0
          %v982 = vsel %vm961, %v942, 0
          %v985 = vsel %vm961, %v949, 0
          %987 = vmatpush.bf16.xpose.msra.mxu0 0
          %988 = vmatpush.bf16.xpose.msra.mxu0 0
          %989 = vmatpush.bf16.xpose.msra.mxu0 0
          %990 = vmatpush.bf16.xpose.msra.mxu0 0
          %991 = vmatpush.bf16.xpose.msra.mxu0 0
          %992 = vmatpush.bf16.xpose.msra.mxu0 0
          %993 = vmatpush.bf16.xpose.msra.mxu0 0
          %994 = vmatpush.bf16.xpose.msra.mxu0 %v985
          %995 = vmatmul.bf16.gmra.mxu0 %v982
          %v996 = vpop.f32.mrf.mxu0
          %v997 = vadd.f32 0.0, %v996
          %v998 = vpop.f32.mrf.mxu0
          %999 = vdwg.mxu0
          %v1001 = vsel %vm961, %v944, 0
          %v1004 = vsel %vm961, %v951, 0
          %1006 = vmatpush.bf16.xpose.msra.mxu0 0
          %1007 = vmatpush.bf16.xpose.msra.mxu0 0
          %1008 = vmatpush.bf16.xpose.msra.mxu0 0
          %1009 = vmatpush.bf16.xpose.msra.mxu0 0
          %1010 = vmatpush.bf16.xpose.msra.mxu0 0
          %1011 = vmatpush.bf16.xpose.msra.mxu0 0
          %1012 = vmatpush.bf16.xpose.msra.mxu0 0
          %1013 = vmatpush.bf16.xpose.msra.mxu0 %v1004
          %1014 = vmatmul.bf16.gmra.mxu0 %v1001
          %v1015 = vpop.f32.mrf.mxu0
          %v1016 = vadd.f32 0.0, %v1015
          %v1017 = vpop.f32.mrf.mxu0
          %1018 = vdwg.mxu0
          %v1020 = vsel %vm961, %v946, 0
          %v1023 = vsel %vm961, %v953, 0
          %1025 = vmatpush.bf16.xpose.msra.mxu0 0
          %1026 = vmatpush.bf16.xpose.msra.mxu0 0
          %1027 = vmatpush.bf16.xpose.msra.mxu0 0
          %1028 = vmatpush.bf16.xpose.msra.mxu0 0
          %1029 = vmatpush.bf16.xpose.msra.mxu0 0
          %1030 = vmatpush.bf16.xpose.msra.mxu0 0
          %1031 = vmatpush.bf16.xpose.msra.mxu0 0
          %1032 = vmatpush.bf16.xpose.msra.mxu0 %v1023
          %1033 = vmatmul.bf16.gmra.mxu0 %v1020
          %v1034 = vpop.f32.mrf.mxu0
          %v1035 = vadd.f32 0.0, %v1034
          %v1036 = vpop.f32.mrf.mxu0
          %1037 = vdwg.mxu0
          %v1038 = vmul.f32 %v978, 0.35355338
          %v1039 = vmul.f32 %v997, 0.35355338
          %v1040 = vmul.f32 %v1016, 0.35355338
          %v1041 = vmul.f32 %v1035, 0.35355338
          %v1043 = vperm.slane %v826, 0
          %v1045 = vadd.f32 %v1038, %v1043
          %v1046 = vadd.f32 %v1039, %v1043
          %v1047 = vadd.f32 %v1040, %v1043
          %v1048 = vadd.f32 %v1041, %v1043
          %v1049 = vsel %vm961, %v1045, -inf
          %1050 = vmax.xlane.f32.xlu0 %v1049
          %v1051 = vpop.xlane.xlu0 %1050
          %v1052 = vsel %vm961, %v1046, -inf
          %1053 = vmax.xlane.f32.xlu0 %v1052
          %v1054 = vpop.xlane.xlu0 %1053
          %v1055 = vsel %vm961, %v1047, -inf
          %1056 = vmax.xlane.f32.xlu0 %v1055
          %v1057 = vpop.xlane.xlu0 %1056
          %v1058 = vsel %vm961, %v1048, -inf
          %1059 = vmax.xlane.f32.xlu0 %v1058
          %v1060 = vpop.xlane.xlu0 %1059
          %v1061 = vsub.f32 %v1045, %v1051
          %v1062 = vsub.f32 %v1046, %v1054
          %v1063 = vsub.f32 %v1047, %v1057
          %v1064 = vsub.f32 %v1048, %v1060
          %v1065 = vmul.f32 %v1061, 1.442695
          %v1066 = vpow.pop %v1065
          %v1067 = vmul.f32 %v1062, 1.442695
          %v1068 = vpow.pop %v1067
          %v1069 = vmul.f32 %v1063, 1.442695
          %v1070 = vpow.pop %v1069
          %v1071 = vmul.f32 %v1064, 1.442695
          %v1072 = vpow.pop %v1071
          %v1073 = vsel %vm961, %v1066, 0.0
          %1074 = vadd.xlane.f32.xlu0 %v1073
          %v1075 = vpop.xlane.xlu0 %1074
          %v1076 = vsel %vm961, %v1068, 0.0
          %1077 = vadd.xlane.f32.xlu0 %v1076
          %v1078 = vpop.xlane.xlu0 %1077
          %v1079 = vsel %vm961, %v1070, 0.0
          %1080 = vadd.xlane.f32.xlu0 %v1079
          %v1081 = vpop.xlane.xlu0 %1080
          %v1082 = vsel %vm961, %v1072, 0.0
          %1083 = vadd.xlane.f32.xlu0 %v1082
          %v1084 = vpop.xlane.xlu0 %1083
          %v1085 = vpack.c.bf16 %v1066, %v1066
          %v1086 = vpack.c.bf16 %v1068, %v1068
          %v1087 = vpack.c.bf16 %v1070, %v1070
          %v1088 = vpack.c.bf16 %v1072, %v1072
          %v1090 = vsel %vm961, %v1085, 0
          %vm1092 = vcmask 1043456
          %v1094 = vsel %vm1092, %v939, 0
          %1096 = vmatpush.bf16.msra.mxu0 0
          %1097 = vmatpush.bf16.msra.mxu0 0
          %1098 = vmatpush.bf16.msra.mxu0 0
          %1099 = vmatpush.bf16.msra.mxu0 0
          %1100 = vmatpush.bf16.msra.mxu0 0
          %1101 = vmatpush.bf16.msra.mxu0 0
          %1102 = vmatpush.bf16.msra.mxu0 0
          %1103 = vmatpush.bf16.msra.mxu0 %v1094
          %1104 = vmatmul.bf16.gmra.mxu0 %v1090
          %v1105 = vpop.f32.mrf.mxu0
          %v1106 = vadd.f32 0.0, %v1105
          %v1107 = vpop.f32.mrf.mxu0
          %1108 = vdwg.mxu0
          %v1110 = vsel %vm961, %v1086, 0
          %v1113 = vsel %vm1092, %v956, 0
          %1115 = vmatpush.bf16.msra.mxu0 0
          %1116 = vmatpush.bf16.msra.mxu0 0
          %1117 = vmatpush.bf16.msra.mxu0 0
          %1118 = vmatpush.bf16.msra.mxu0 0
          %1119 = vmatpush.bf16.msra.mxu0 0
          %1120 = vmatpush.bf16.msra.mxu0 0
          %1121 = vmatpush.bf16.msra.mxu0 0
          %1122 = vmatpush.bf16.msra.mxu0 %v1113
          %1123 = vmatmul.bf16.gmra.mxu0 %v1110
          %v1124 = vpop.f32.mrf.mxu0
          %v1125 = vadd.f32 0.0, %v1124
          %v1126 = vpop.f32.mrf.mxu0
          %1127 = vdwg.mxu0
          %v1129 = vsel %vm961, %v1087, 0
          %v1132 = vsel %vm1092, %v958, 0
          %1134 = vmatpush.bf16.msra.mxu0 0
          %1135 = vmatpush.bf16.msra.mxu0 0
          %1136 = vmatpush.bf16.msra.mxu0 0
          %1137 = vmatpush.bf16.msra.mxu0 0
          %1138 = vmatpush.bf16.msra.mxu0 0
          %1139 = vmatpush.bf16.msra.mxu0 0
          %1140 = vmatpush.bf16.msra.mxu0 0
          %1141 = vmatpush.bf16.msra.mxu0 %v1132
          %1142 = vmatmul.bf16.gmra.mxu0 %v1129
          %v1143 = vpop.f32.mrf.mxu0
          %v1144 = vadd.f32 0.0, %v1143
          %v1145 = vpop.f32.mrf.mxu0
          %1146 = vdwg.mxu0
          %v1148 = vsel %vm961, %v1088, 0
          %v1151 = vsel %vm1092, %v960, 0
          %1153 = vmatpush.bf16.msra.mxu0 0
          %1154 = vmatpush.bf16.msra.mxu0 0
          %1155 = vmatpush.bf16.msra.mxu0 0
          %1156 = vmatpush.bf16.msra.mxu0 0
          %1157 = vmatpush.bf16.msra.mxu0 0
          %1158 = vmatpush.bf16.msra.mxu0 0
          %1159 = vmatpush.bf16.msra.mxu0 0
          %1160 = vmatpush.bf16.msra.mxu0 %v1151
          %1161 = vmatmul.bf16.gmra.mxu0 %v1148
          %v1162 = vpop.f32.mrf.mxu0
          %v1163 = vadd.f32 0.0, %v1162
          %v1164 = vpop.f32.mrf.mxu0
          %1165 = vdwg.mxu0
          %v1166 = vrcp.pop %v1075
          %v1167 = vrcp.pop %v1078
          %v1168 = vrcp.pop %v1081
          %v1169 = vrcp.pop %v1084
          %v1170 = vmul.f32 %v1106, %v1166
          %v1171 = vmul.f32 %v1125, %v1167
          %v1172 = vmul.f32 %v1144, %v1168
          %v1173 = vmul.f32 %v1163, %v1169
          %1174 = vst.msk [vmem:[#allocation3] sm:$0xff] %vm961, %v1170
          %1176 = vrot.lane.b32.xlu0 %v1171, 8
          %v1177 = vpop.permute.xlu0 %1176
          %vm1179 = vcmask 130112
          %1180 = vst.msk [vmem:[#allocation3] sm:$0xff] %vm1179, %v1177
          %1182 = vrot.lane.b32.xlu0 %v1172, 16
          %v1183 = vpop.permute.xlu0 %1182
          %vm1185 = vcmask 195712
          %1186 = vst.msk [vmem:[#allocation3] sm:$0xff] %vm1185, %v1183
          %1188 = vrot.lane.b32.xlu0 %v1173, 24
          %v1189 = vpop.permute.xlu0 %1188
          %vm1191 = vcmask 261312
          %1192 = vst.msk [vmem:[#allocation3] sm:$0xff] %vm1191, %v1189
          %v1193 = vld [vmem:[#allocation3] sm:$0xff]
          %v1194 = vpack.c.bf16 %v1193, %v1193
          %v1195 = vld [vmem:[%s8] sm:$0xf]
          %v1196 = vld [vmem:[%s8 + $0x4] sm:$0xf]
          %v1197 = vld [vmem:[%s8 + $0x8] sm:$0xf]
          %v1198 = vld [vmem:[%s8 + $0xc] sm:$0xf]
          %v1199 = vld [vmem:[#allocation10] sm:$0x1]
          %v1201 = vperm.slane %v1199, 0
          %v1207 = vunpack.c.l.b16 %v1195
          %v1208 = vunpack.c.l.b16 %v1196
          %v1209 = vunpack.c.l.b16 %v1197
          %v1210 = vunpack.c.l.b16 %v1198
          %v1211 = vpack.c.b16 %v1208, %v1207
          %v1212 = vpack.c.b16 %v1210, %v1209
          %v1216 = vsel %vm824, %v1194, 0
          %1218 = vmatpush.bf16.msra.mxu0 0
          %1219 = vmatpush.bf16.msra.mxu0 0
          %1220 = vmatpush.bf16.msra.mxu0 0
          %1221 = vmatpush.bf16.msra.mxu0 0
          %1222 = vmatpush.bf16.msra.mxu0 0
          %1223 = vmatpush.bf16.msra.mxu0 0
          %1224 = vmatpush.bf16.msra.mxu0 %v1212
          %1225 = vmatpush.bf16.msra.mxu0 %v1211
          %1226 = vmatmul.bf16.gmra.mxu0 %v1216
          %v1227 = vpop.f32.mrf.mxu0
          %v1228 = vadd.f32 %v1201, %v1227
          %v1229 = vpop.f32.mrf.mxu0
          %1230 = vdwg.mxu0
          %v1231 = vadd.f32 %v1228, %v833
          %v1232 = vld [vmem:[#allocation12] sm:$0x1]
          %v1233 = vld [vmem:[#allocation13] sm:$0x1]
          %v1234 = vsel %vm824, %v1231, 0.0
          %1235 = vadd.xlane.f32.xlu0 %v1234
          %v1236 = vpop.xlane.xlu0 %1235
          %v1237 = vrcp.pop 32.0
          %v1238 = vmul.f32 32.0, %v1237
          %v1239 = vsub.f32 1.0, %v1238
          %v1240 = vmul.f32 %v1237, %v1239
          %v1241 = vadd.f32 %v1237, %v1240
          %vm1242 = vweird.f32 %v1237
          %v1243 = vsel %vm1242, %v1237, %v1241
          %v1244 = vmul.f32 %v1236, %v1243
          %v1245 = vsub.f32 %v1231, %v1244
          %v1246 = vmul.f32 %v1245, %v1245
          %v1247 = vsel %vm824, %v1246, 0.0
          %1248 = vadd.xlane.f32.xlu0 %v1247
          %v1249 = vpop.xlane.xlu0 %1248
          %v1250 = vmul.f32 %v1249, %v1243
          %v1251 = vadd.f32 %v1250, 1e-12
          %v1252 = vrsqrt.pop %v1251
          %v1253 = vmul.f32 %v1252, %v1251
          %v1254 = vmul.f32 %v1253, %v1252
          %v1255 = vmul.f32 0.5, %v1254
          %v1256 = vsub.f32 1.5, %v1255
          %v1257 = vmul.f32 %v1252, %v1256
          %vm1258 = vweird.f32 %v1251
          %vm1259 = vweird.f32 %v1252
          %vm1260 = vmor %vm1258, %vm1259
          %v1261 = vsel %vm1260, %v1252, %v1257
          %v1262 = vmul.f32 %v1245, %v1261
          %v1264 = vperm.slane %v1232, 0
          %v1266 = vmul.f32 %v1262, %v1264
          %v1268 = vperm.slane %v1233, 0
          %v1270 = vadd.f32 %v1266, %v1268
          %v1271 = vpack.c.bf16 %v1270, %v1270
          %v1272 = vld [vmem:[#allocation15] sm:$0xf]
          %v1273 = vld [vmem:[#allocation15 + $0x4] sm:$0xf]
          %v1274 = vld [vmem:[#allocation15 + $0x8] sm:$0xf]
          %v1275 = vld [vmem:[#allocation15 + $0xc] sm:$0xf]
          %v1276 = vld [vmem:[#allocation16] sm:$0x1]
          %v1278 = vperm.slane %v1276, 0
          %v1284 = vunpack.c.l.b16 %v1272
          %v1285 = vunpack.c.l.b16 %v1273
          %v1286 = vunpack.c.l.b16 %v1274
          %v1287 = vunpack.c.l.b16 %v1275
          %v1288 = vpack.c.b16 %v1285, %v1284
          %v1289 = vpack.c.b16 %v1287, %v1286
          %v1293 = vsel %vm824, %v1271, 0
          %1295 = vmatpush.bf16.msra.mxu0 0
          %1296 = vmatpush.bf16.msra.mxu0 0
          %1297 = vmatpush.bf16.msra.mxu0 0
          %1298 = vmatpush.bf16.msra.mxu0 0
          %1299 = vmatpush.bf16.msra.mxu0 0
          %1300 = vmatpush.bf16.msra.mxu0 0
          %1301 = vmatpush.bf16.msra.mxu0 %v1289
          %1302 = vmatpush.bf16.msra.mxu0 %v1288
          %1303 = vmatmul.bf16.gmra.mxu0 %v1293
          %v1304 = vpop.f32.mrf.mxu0
          %v1305 = vadd.f32 %v1278, %v1304
          %v1306 = vpop.f32.mrf.mxu0
          %1307 = vdwg.mxu0
          %v1308 = vmul.f32 %v1305, 0.5
          %v1309 = vmul.f32 %v1305, 0.70710677
          %v1310 = vmul.f32 %v1309, %v1309
          %v1311 = vmin.f32 16.0, %v1310
          %v1312 = vmul.f32 %v1311, 2.1237322e-06
          %v1313 = vadd.f32 %v1312, 0.00028619796
          %v1314 = vmul.f32 %v1311, %v1313
          %v1315 = vadd.f32 %v1314, 0.0036580483
          %v1316 = vmul.f32 %v1311, %v1315
          %v1317 = vadd.f32 %v1316, 0.05243302
          %v1318 = vmul.f32 %v1311, %v1317
          %v1319 = vadd.f32 %v1318, 0.18741608
          %v1320 = vmul.f32 %v1311, %v1319
          %v1321 = vadd.f32 %v1320, 1.1283791
          %v1322 = vmul.f32 %v1309, %v1321
          %v1323 = vmul.f32 %v1311, 3.8918573e-05
          %v1324 = vadd.f32 %v1323, 0.001143296
          %v1325 = vmul.f32 %v1311, %v1324
          %v1326 = vadd.f32 %v1325, 0.014752088
          %v1327 = vmul.f32 %v1311, %v1326
          %v1328 = vadd.f32 %v1327, 0.112945676
          %v1329 = vmul.f32 %v1311, %v1328
          %v1330 = vadd.f32 %v1329, 0.4994258
          %v1331 = vmul.f32 %v1311, %v1330
          %v1332 = vadd.f32 %v1331, 1.0
          %v1333 = vrcp.pop %v1332
          %v1334 = vmul.f32 %v1332, %v1333
          %v1335 = vsub.f32 1.0, %v1334
          %v1336 = vmul.f32 %v1333, %v1335
          %v1337 = vadd.f32 %v1333, %v1336
          %vm1338 = vweird.f32 %v1332
          %vm1339 = vweird.f32 %v1333
          %vm1340 = vmor %vm1338, %vm1339
          %v1341 = vsel %vm1340, %v1333, %v1337
          %v1342 = vand.u32 2147483647, %v1332
          %vm1343 = vcmp.eq.f32.partialorder %v1342, 8.507059e+37
          %v1344 = vand.u32 %v1332, 2147483648
          %v1345 = vor.u32 1.1754944e-38, %v1344
          %v1346 = vsel %vm1343, %v1345, %v1341
          %v1347 = vmul.f32 %v1322, %v1346
          %v1348 = vmin.f32 %v1347, 1.0
          %v1349 = vmax.f32 %v1348, -1.0
          %v1350 = vadd.f32 %v1349, 1.0
          %v1351 = vmul.f32 %v1308, %v1350
          %v1352 = vpack.c.bf16 %v1351, %v1351
          %v1353 = vld [vmem:[%s14] sm:$0xf]
          %v1354 = vld [vmem:[%s14 + $0x4] sm:$0xf]
          %v1355 = vld [vmem:[%s14 + $0x8] sm:$0xf]
          %v1356 = vld [vmem:[%s14 + $0xc] sm:$0xf]
          %v1357 = vld [vmem:[%s14 + $0x10] sm:$0xf]
          %v1358 = vld [vmem:[%s14 + $0x14] sm:$0xf]
          %v1359 = vld [vmem:[%s14 + $0x18] sm:$0xf]
          %v1360 = vld [vmem:[%s14 + $0x1c] sm:$0xf]
          %v1361 = vld [vmem:[%s14 + $0x20] sm:$0xf]
          %v1362 = vld [vmem:[%s14 + $0x24] sm:$0xf]
          %v1363 = vld [vmem:[%s14 + $0x28] sm:$0xf]
          %v1364 = vld [vmem:[%s14 + $0x2c] sm:$0xf]
          %v1365 = vld [vmem:[%s14 + $0x30] sm:$0xf]
          %v1366 = vld [vmem:[%s14 + $0x34] sm:$0xf]
          %v1367 = vld [vmem:[%s14 + $0x38] sm:$0xf]
          %v1368 = vld [vmem:[%s14 + $0x3c] sm:$0xf]
          %v1369 = vld [vmem:[#allocation18] sm:$0x1]
          %v1371 = vperm.slane %v1369, 0
          %v1389 = vunpack.c.l.b16 %v1353
          %v1390 = vunpack.c.l.b16 %v1354
          %v1391 = vunpack.c.l.b16 %v1355
          %v1392 = vunpack.c.l.b16 %v1356
          %v1393 = vunpack.c.l.b16 %v1357
          %v1394 = vunpack.c.l.b16 %v1358
          %v1395 = vunpack.c.l.b16 %v1359
          %v1396 = vunpack.c.l.b16 %v1360
          %v1397 = vunpack.c.l.b16 %v1361
          %v1398 = vunpack.c.l.b16 %v1362
          %v1399 = vunpack.c.l.b16 %v1363
          %v1400 = vunpack.c.l.b16 %v1364
          %v1401 = vunpack.c.l.b16 %v1365
          %v1402 = vunpack.c.l.b16 %v1366
          %v1403 = vunpack.c.l.b16 %v1367
          %v1404 = vunpack.c.l.b16 %v1368
          %v1405 = vpack.c.b16 %v1390, %v1389
          %v1406 = vpack.c.b16 %v1392, %v1391
          %v1407 = vpack.c.b16 %v1394, %v1393
          %v1408 = vpack.c.b16 %v1396, %v1395
          %v1409 = vpack.c.b16 %v1398, %v1397
          %v1410 = vpack.c.b16 %v1400, %v1399
          %v1411 = vpack.c.b16 %v1402, %v1401
          %v1412 = vpack.c.b16 %v1404, %v1403
          %1421 = vmatpush.bf16.msra.mxu0 %v1412
          %1422 = vmatpush.bf16.msra.mxu0 %v1411
          %1423 = vmatpush.bf16.msra.mxu0 %v1410
          %1424 = vmatpush.bf16.msra.mxu0 %v1409
          %1425 = vmatpush.bf16.msra.mxu0 %v1408
          %1426 = vmatpush.bf16.msra.mxu0 %v1407
          %1427 = vmatpush.bf16.msra.mxu0 %v1406
          %1428 = vmatpush.bf16.msra.mxu0 %v1405
          %1429 = vmatmul.bf16.gmra.mxu0 %v1352
          %v1430 = vpop.f32.mrf.mxu0
          %v1431 = vadd.f32 %v1371, %v1430
          %v1432 = vpop.f32.mrf.mxu0
          %1433 = vdwg.mxu0
          %v1434 = vadd.f32 %v1431, %v1270
          %v1435 = vld [vmem:[#allocation19] sm:$0x1]
          %v1436 = vld [vmem:[#allocation21] sm:$0x1]
          %v1437 = vsel %vm824, %v1434, 0.0
          %1438 = vadd.xlane.f32.xlu0 %v1437
          %v1439 = vpop.xlane.xlu0 %1438
          %v1440 = vmul.f32 %v1439, %v1243
          %v1441 = vsub.f32 %v1434, %v1440
          %v1442 = vmul.f32 %v1441, %v1441
          %v1443 = vsel %vm824, %v1442, 0.0
          %1444 = vadd.xlane.f32.xlu0 %v1443
          %v1445 = vpop.xlane.xlu0 %1444
          %v1446 = vmul.f32 %v1445, %v1243
          %v1447 = vadd.f32 %v1446, 1e-12
          %v1448 = vrsqrt.pop %v1447
          %v1449 = vmul.f32 %v1448, %v1447
          %v1450 = vmul.f32 %v1449, %v1448
          %v1451 = vmul.f32 0.5, %v1450
          %v1452 = vsub.f32 1.5, %v1451
          %v1453 = vmul.f32 %v1448, %v1452
          %vm1454 = vweird.f32 %v1447
          %vm1455 = vweird.f32 %v1448
          %vm1456 = vmor %vm1454, %vm1455
          %v1457 = vsel %vm1456, %v1448, %v1453
          %v1458 = vmul.f32 %v1441, %v1457
          %v1460 = vperm.slane %v1435, 0
          %v1462 = vmul.f32 %v1458, %v1460
          %v1464 = vperm.slane %v1436, 0
          %v1466 = vadd.f32 %v1462, %v1464
          %1467 = vst.msk [vmem:[#allocation2] sm:$0xff] %vm824, %v1466
        $region153: #{tpu_custom_call.1} parent=99 // loop_footer
          %s832 = sadd.s32 1, %s828
        $region154: #{tpu_custom_call.1} parent=99 // loop_footer_branch
          %827 = sbr.rel target = $region150
        $region155: #{tpu_custom_call.1} parent=99 // loop_exit
          _
        %v1468 = vld [vmem:[#allocation2] sm:$0xff]
        %v1469 = vpack.c.bf16 %v1468, %v1468
        %v1470 = vld [vmem:[%s18] sm:$0xf]
        %v1471 = vld [vmem:[%s18 + $0x4] sm:$0xf]
        %v1472 = vld [vmem:[%s18 + $0x8] sm:$0xf]
        %v1473 = vld [vmem:[%s18 + $0xc] sm:$0xf]
        %v1474 = vld [vmem:[#allocation22] sm:$0x1]
        %v1476 = vperm.slane %v1474, 0
        %v1482 = vunpack.c.l.b16 %v1470
        %v1483 = vunpack.c.l.b16 %v1471
        %v1484 = vunpack.c.l.b16 %v1472
        %v1485 = vunpack.c.l.b16 %v1473
        %v1486 = vpack.c.b16 %v1483, %v1482
        %v1487 = vpack.c.b16 %v1485, %v1484
        %v1491 = vsel %vm824, %v1469, 0
        %1493 = vmatpush.bf16.msra.mxu0 0
        %1494 = vmatpush.bf16.msra.mxu0 0
        %1495 = vmatpush.bf16.msra.mxu0 0
        %1496 = vmatpush.bf16.msra.mxu0 0
        %1497 = vmatpush.bf16.msra.mxu0 0
        %1498 = vmatpush.bf16.msra.mxu0 0
        %1499 = vmatpush.bf16.msra.mxu0 %v1487
        %1500 = vmatpush.bf16.msra.mxu0 %v1486
        %1501 = vmatmul.bf16.gmra.mxu0 %v1491
        %v1502 = vpop.f32.mrf.mxu0
        %v1503 = vadd.f32 %v1476, %v1502
        %v1504 = vpop.f32.mrf.mxu0
        %1505 = vdwg.mxu0
        %1506 = vst [vmem:[%s817] sm:$0xff] %v1503
        %s1507 = sand.u32 %s481, 1
        %s1508 = scalar_lea.sflag [#allocation6], %s1507
        %s1509 = sand.u32 %s481, 1
        %s1510 = smul.addr %s1509, 8
        %s1511 = scalar_lea.vmem [#allocation24], %s1510
        // Predicated region
        $region156: #{tpu_custom_call.1} parent=99 // pred_check
          %p1512 = pneg %p491
        $region157: #{tpu_custom_call.1} parent=99 // pred_check_branch
          %1514 = sbr.rel (%p1512) target = $region159
        $region158: #{tpu_custom_call.1} parent=99 // pred_region
          %1516 = vsyncadd %s1508, 0
          %s1517 = smul.addr %s43, 8
          %s1518 = scalar_lea.hbm %s20, %s1517
          %s1520 = sshll.u32 %s1511, 4
          %s1521 = int_to_ptr.vmem [resolvable:$true] %s1520
          %s1522 = sshll.u32 %s1518, 4
          %s1523 = int_to_ptr.hbm [resolvable:$true] %s1522
          %1525 = dma.vmem_to_hbm [thread:$0]  %s1521, 128, %s1523, %s1508
        $region159: #{tpu_custom_call.1} parent=99 // pred_fallthru
          _
      $region100: #{tpu_custom_call.1} parent=5 // pred_fallthru
        _
      %p1526 = scmp.le.s32.totalorder 2, %s38
      // Predicated region
      $region160: #{tpu_custom_call.1} parent=5 // pred_check
        %p1527 = pneg %p1526
      $region161: #{tpu_custom_call.1} parent=5 // pred_check_branch
        %1529 = sbr.rel (%p1527) target = $region163
      $region162: #{tpu_custom_call.1} parent=5 // pred_region
        %s1530 = ssub.s32 %s38, 2
        // Predicated region
        $region164: #{tpu_custom_call.1} parent=162 // pred_check
          %p1531 = pneg %p497
        $region165: #{tpu_custom_call.1} parent=162 // pred_check_branch
          %1533 = sbr.rel (%p1531) target = $region167
        $region166: #{tpu_custom_call.1} parent=162 // pred_region
          %s1534 = sand.u32 %s482, 1
          %s1535 = scalar_lea.sflag [#allocation6], %s1534
          %s1536 = sand.u32 %s482, 1
          %s1537 = smul.addr %s1536, 8
          %s1538 = scalar_lea.vmem [#allocation24], %s1537
          %1540 = dma.done %s1535, 128
        $region167: #{tpu_custom_call.1} parent=162 // pred_fallthru
          _
      $region163: #{tpu_custom_call.1} parent=5 // pred_fallthru
        _
    $region6: #{tpu_custom_call.1} parent=1 // loop_footer
      %s42 = sadd.s32 1, %s38
    $region7: #{tpu_custom_call.1} parent=1 // loop_footer_branch
      %37 = sbr.rel target = $region3
    $region8: #{tpu_custom_call.1} parent=1 // loop_exit
      _
    %1541 = vsyncpa [#allocation5], 1
    %s1542 = scalar_lea.sflag [#allocation5], 1
    %1543 = vsyncpa %s1542, 1
    %1544 = vsyncpa [#allocation8], 1
    %1545 = vsyncpa [#allocation11], 1
    %1546 = vsyncpa [#allocation14], 1
    %1547 = vsyncpa [#allocation17], 1
    %1548 = vsyncpa [#allocation20], 1
    %1549 = vsyncpa [#allocation23], 1
    %1550 = vsyncpa [#allocation6], 1
    %s1551 = scalar_lea.sflag [#allocation6], 1
    %1552 = vsyncpa %s1551, 1

</llo_original>
